<compile_context>
chip_gen: v6e
topology: v6e:2x2x1
jax: 0.10.0
libtpu: 0.0.40
codegen_flags: <defaults>
</compile_context>

<pallas_src>
import functools

import jax
import jax.numpy as jnp
from jax.experimental import pallas as pl
from jax.experimental.pallas import tpu as pltpu

LANE = 128


def _round_up(n, m):
    return ((n + m - 1) // m) * m


def _round_down(n, m):
    return (n // m) * m


def _physical_vmem_bytes():
    """Per-core physical VMEM; conservative 64 MiB (v7x) if the query fails."""
    try:
        info = pltpu.get_tpu_info()
        for attr in ("vmem_capacity_bytes", "vmem_bytes", "vmem_size_bytes"):
            v = getattr(info, attr, None)
            if v:
                return int(v)
    except Exception:
        pass
    return 64 * 1024 * 1024


def _mlp_kernel(x_ref, *refs, compute_dtype):
    """Fused MLP forward for one batch tile.

    refs layout: w0, b0, (w_i, b_i) * h_layers, w_out, b_out, o_ref.
    Weights arrive in the compute dtype (bf16 or f32); biases are f32.
    """
    param_refs = refs[:-1]
    o_ref = refs[-1]
    n_layers = len(param_refs) // 2

    h = x_ref[...]
    if h.dtype != compute_dtype:
        h = h.astype(compute_dtype)

    for l in range(n_layers):
        w = param_refs[2 * l][...]          # (fan_in_p, fan_out_p), compute dtype
        b = param_refs[2 * l + 1][...]      # (1, fan_out_p), f32
        # MXU matmul with f32 accumulation; bias add in f32 on the VPU.
        y = jnp.dot(h, w, preferred_element_type=jnp.float32) + b
        if l < n_layers - 1:
            # ReLU in f32 then narrow: one code path that is correct on v5e
            # (no bf16 VPU) and numerically identical to relu(bf16(y)).
            h = jnp.maximum(y, 0.0).astype(compute_dtype)
        else:
            o_ref[...] = y.astype(o_ref.dtype)


def mlp_forward(x, params, *, h_layers, bm=1024, use_bf16=True, out_dtype=None):
    """Run the fused MLP Pallas kernel.

    x:        (batch, in_channels) float32
    params:   list of (W, b), W: (fan_in, fan_out), b: (1, fan_out), f32
    bm:       requested batch tile; clamped by batch, 2-step split and VMEM.
    use_bf16: bf16 MXU operands + bf16 x/out DMA (f32 accumulate/bias/ReLU).
    out_dtype: output dtype; defaults to bf16 when use_bf16 else x.dtype.
    """
    assert len(params) == h_layers + 2
    batch, in_channels = x.shape
    h_channels = params[0][0].shape[1]
    out_channels = params[-1][0].shape[1]

    if out_dtype is None:
        out_dtype = jnp.bfloat16 if use_bf16 else x.dtype
    out_dtype = jnp.dtype(out_dtype)
    compute_dtype = jnp.bfloat16 if use_bf16 else jnp.float32

    # ---- Lane-dense padding of every feature dim to a multiple of 128.
    in_p = _round_up(in_channels, LANE)
    out_p = _round_up(out_channels, LANE)
    h_p = _round_up(h_channels, LANE)

    padded_params = []
    for (w, b) in params:
        fi, fo = w.shape
        fi_p, fo_p = _round_up(fi, LANE), _round_up(fo, LANE)
        w = jnp.pad(w, ((0, fi_p - fi), (0, fo_p - fo))).astype(compute_dtype)
        # Biases zero-padded (padded cols must stay exactly 0 through ReLU).
        b = jnp.pad(b.astype(jnp.float32), ((0, 0), (0, fo_p - fo)))
        padded_params.append((w, b))

    # ---- VMEM budget & batch-tile sizing (generation aware).
    x_itemsize = 2 if use_bf16 else x.dtype.itemsize
    out_itemsize = out_dtype.itemsize
    align = 16 if use_bf16 else 8           # bf16 packs two rows per sublane

    param_bytes = sum(w.size * w.dtype.itemsize + b.size * b.dtype.itemsize
                      for (w, b) in padded_params)
    resident_param_bytes = 2 * param_bytes  # worst case: compiler double-buffers

    bytes_per_row = (2 * in_p * x_itemsize        # double-buffered x tile
                     + 2 * out_p * out_itemsize   # double-buffered out tile
                     + 4 * h_p * 4                # f32 working copies of hidden
                     + h_p * x_itemsize)          # narrowed next MXU operand

    budget = int(0.85 * _physical_vmem_bytes())   # leave compiler-scratch headroom
    if resident_param_bytes + align * bytes_per_row > budget:
        # TODO(synk): add a weight-streaming path (emit_pipeline over K/N tiles
        # per layer) for configs whose weights don't fit resident in VMEM.
        raise ValueError("MLP weights do not fit in VMEM; weight streaming "
                         "is not implemented for this configuration.")

    bm_req = _round_up(min(bm, _round_up(batch, align)), align)
    if batch > align:
        # >= 2 grid steps so the parallel batch axis can use both v7x TCs.
        bm_req = min(bm_req, _round_up(pl.cdiv(batch, 2), align))
    bm_budget = _round_down((budget - resident_param_bytes) // bytes_per_row, align)
    bm_eff = max(align, min(bm_req, bm_budget))

    padded_batch = _round_up(batch, bm_eff)
    grid = (padded_batch // bm_eff,)

    # ---- x: cast to the DMA dtype once in the wrapper, pad batch + feature.
    x_k = x.astype(compute_dtype) if use_bf16 else x
    x_k = jnp.pad(x_k, ((0, padded_batch - batch), (0, in_p - in_channels)))

    flat_params = []
    for (w, b) in padded_params:
        flat_params.extend([w, b])

    footprint = resident_param_bytes + bm_eff * bytes_per_row
    vmem_limit = int(min(budget, max(2 * footprint, 32 * 1024 * 1024)))

    # ---- Advisory cost estimate (bytes counted in actual DMA dtypes).
    flops = 2 * padded_batch * sum(w.shape[0] * w.shape[1]
                                   for (w, _) in padded_params)
    bytes_accessed = (padded_batch * in_p * x_itemsize
                      + param_bytes
                      + padded_batch * out_p * out_itemsize)

    kernel = functools.partial(_mlp_kernel, compute_dtype=compute_dtype)

    def _call(single_buffer_params):
        param_kw = {}
        if single_buffer_params:
            # Constant index_maps -> blocks never change; one buffer suffices.
            param_kw = dict(pipeline_mode=pl.Buffered(1))
        in_specs = [pl.BlockSpec((bm_eff, in_p), lambda i: (i, 0))]
        for (w, b) in padded_params:
            in_specs.append(pl.BlockSpec(w.shape, lambda i: (0, 0), **param_kw))
            in_specs.append(pl.BlockSpec(b.shape, lambda i: (0, 0), **param_kw))
        out_spec = pl.BlockSpec((bm_eff, out_p), lambda i: (i, 0))
        return pl.pallas_call(
            kernel,
            out_shape=jax.ShapeDtypeStruct((padded_batch, out_p), out_dtype),
            grid_spec=pltpu.PrefetchScalarGridSpec(
                num_scalar_prefetch=0,
                grid=grid,
                in_specs=in_specs,
                out_specs=out_spec,
            ),
            compiler_params=pltpu.CompilerParams(
                dimension_semantics=("parallel",),
                vmem_limit_bytes=vmem_limit),
            cost_estimate=pl.CostEstimate(
                flops=int(flops), transcendentals=0,
                bytes_accessed=int(bytes_accessed)),
        )(x_k, *flat_params)

    try:
        out = _call(single_buffer_params=True)
    except Exception:
        # Fallback if this JAX/Mosaic build rejects single-buffered blocks.
        out = _call(single_buffer_params=False)

    return out[:batch, :out_channels]


def init_mlp_params(key, in_channels, out_channels, h_channels=64, h_layers=4):
    """Deterministic init mirroring torch.nn.Linear's default (Kaiming-uniform
    bound 1/sqrt(fan_in)) — synthetic weights, not a checkpoint load."""
    dims = [(in_channels, h_channels)]
    dims += [(h_channels, h_channels)] * h_layers
    dims += [(h_channels, out_channels)]

    params = []
    for (fan_in, fan_out) in dims:
        key, kw, kb = jax.random.split(key, 3)
        bound = 1.0 / jnp.sqrt(jnp.float32(fan_in))
        w = jax.random.uniform(kw, (fan_in, fan_out), jnp.float32,
                               minval=-bound, maxval=bound)
        b = jax.random.uniform(kb, (1, fan_out), jnp.float32,
                               minval=-bound, maxval=bound)
        params.append((w, b))
    return params


def mlp_reference(x, params):
    """Plain-JAX f32 reference for correctness checking."""
    h = x
    for i, (w, b) in enumerate(params):
        h = h @ w + b
        if i < len(params) - 1:
            h = jnp.maximum(h, 0.0)
    return h


if __name__ == "__main__":
    # Small shapes consistent with the module; batch chosen so the grid has
    # multiple steps and exercises the padding / slicing paths.
    in_channels, out_channels = 16, 8
    h_channels, h_layers = 32, 4
    batch = 200

    key = jax.random.PRNGKey(0)
    key, kx = jax.random.split(key)
    x = jax.random.normal(kx, (batch, in_channels), jnp.float32)

    params = init_mlp_params(key, in_channels, out_channels,
                             h_channels=h_channels, h_layers=h_layers)

    y_ref = mlp_reference(x, params)

    # f32 path: exact match against the reference.
    y_f32 = mlp_forward(x, params, h_layers=h_layers, use_bf16=False)
    y_f32 = jax.block_until_ready(y_f32)
    assert y_f32.shape == (batch, out_channels)
    assert y_f32.dtype == jnp.float32
    assert jnp.allclose(y_f32, y_ref, atol=1e-5, rtol=1e-5), "f32 mismatch"

    # bf16 operands + bf16 I/O (default, fast path): loose tolerance.
    y_bf16 = mlp_forward(x, params, h_layers=h_layers, use_bf16=True)
    y_bf16 = jax.block_until_ready(y_bf16)
    assert y_bf16.shape == (batch, out_channels)
    assert jnp.allclose(y_bf16.astype(jnp.float32), y_ref,
                        atol=6e-2, rtol=6e-2), "bf16 mismatch"

    print("KERNEL_OK")
</pallas_src>

<mosaic_0001>
module attributes {stable_mosaic.version = 11 : i64} {
  func.func @_mlp_kernel(%arg0: i32, %arg1: memref<104x128xf32, #tpu.memory_space<vmem>>, %arg2: memref<128x128xf32, #tpu.memory_space<vmem>>, %arg3: memref<1x128xf32, #tpu.memory_space<vmem>>, %arg4: memref<128x128xf32, #tpu.memory_space<vmem>>, %arg5: memref<1x128xf32, #tpu.memory_space<vmem>>, %arg6: memref<128x128xf32, #tpu.memory_space<vmem>>, %arg7: memref<1x128xf32, #tpu.memory_space<vmem>>, %arg8: memref<128x128xf32, #tpu.memory_space<vmem>>, %arg9: memref<1x128xf32, #tpu.memory_space<vmem>>, %arg10: memref<128x128xf32, #tpu.memory_space<vmem>>, %arg11: memref<1x128xf32, #tpu.memory_space<vmem>>, %arg12: memref<128x128xf32, #tpu.memory_space<vmem>>, %arg13: memref<1x128xf32, #tpu.memory_space<vmem>>, %arg14: memref<104x128xf32, #tpu.memory_space<vmem>>) attributes {dimension_semantics = [#tpu.dimension_semantics<parallel>], iteration_bounds = array<i64: 2>, scalar_prefetch = 0 : i64, scratch_operands = 0 : i64, tpu.core_type = #tpu.core_type<tc>, window_params = [{transform_indices = @transform_0, window_bounds = array<i64: 104, 128>}, {pipeline_mode = #tpu.pipeline_mode<synchronous>, transform_indices = @transform_1, window_bounds = array<i64: 128, 128>}, {pipeline_mode = #tpu.pipeline_mode<synchronous>, transform_indices = @transform_2, window_bounds = array<i64: 1, 128>}, {pipeline_mode = #tpu.pipeline_mode<synchronous>, transform_indices = @transform_3, window_bounds = array<i64: 128, 128>}, {pipeline_mode = #tpu.pipeline_mode<synchronous>, transform_indices = @transform_4, window_bounds = array<i64: 1, 128>}, {pipeline_mode = #tpu.pipeline_mode<synchronous>, transform_indices = @transform_5, window_bounds = array<i64: 128, 128>}, {pipeline_mode = #tpu.pipeline_mode<synchronous>, transform_indices = @transform_6, window_bounds = array<i64: 1, 128>}, {pipeline_mode = #tpu.pipeline_mode<synchronous>, transform_indices = @transform_7, window_bounds = array<i64: 128, 128>}, {pipeline_mode = #tpu.pipeline_mode<synchronous>, transform_indices = @transform_8, window_bounds = array<i64: 1, 128>}, {pipeline_mode = #tpu.pipeline_mode<synchronous>, transform_indices = @transform_9, window_bounds = array<i64: 128, 128>}, {pipeline_mode = #tpu.pipeline_mode<synchronous>, transform_indices = @transform_10, window_bounds = array<i64: 1, 128>}, {pipeline_mode = #tpu.pipeline_mode<synchronous>, transform_indices = @transform_11, window_bounds = array<i64: 128, 128>}, {pipeline_mode = #tpu.pipeline_mode<synchronous>, transform_indices = @transform_12, window_bounds = array<i64: 1, 128>}, {transform_indices = @transform_13, window_bounds = array<i64: 104, 128>}]} {
    %c0 = arith.constant 0 : index
    %c0_0 = arith.constant 0 : index
    %0 = vector.load %arg1[%c0, %c0_0] : memref<104x128xf32, #tpu.memory_space<vmem>>, vector<104x128xf32>
    %c0_1 = arith.constant 0 : index
    %c0_2 = arith.constant 0 : index
    %1 = vector.load %arg2[%c0_1, %c0_2] : memref<128x128xf32, #tpu.memory_space<vmem>>, vector<128x128xf32>
    %c0_3 = arith.constant 0 : index
    %c0_4 = arith.constant 0 : index
    %2 = vector.load %arg3[%c0_3, %c0_4] : memref<1x128xf32, #tpu.memory_space<vmem>>, vector<1x128xf32>
    %cst = arith.constant dense<0.000000e+00> : vector<104x128xf32>
    %3 = tpu.matmul %0, %1, %cst {dimension_numbers = #tpu.dot_dimension_numbers<[1], [0], [0], [1], [0, 0, 1, 1], [], []>} : vector<104x128xf32>, vector<128x128xf32>, vector<104x128xf32> -> vector<104x128xf32>
    %4 = vector.broadcast %2 : vector<1x128xf32> to vector<104x128xf32>
    %5 = arith.addf %3, %4 : vector<104x128xf32>
    %cst_5 = arith.constant 0.000000e+00 : f32
    %6 = vector.broadcast %cst_5 : f32 to vector<104x128xf32>
    %7 = arith.maximumf %5, %6 : vector<104x128xf32>
    %c0_6 = arith.constant 0 : index
    %c0_7 = arith.constant 0 : index
    %8 = vector.load %arg4[%c0_6, %c0_7] : memref<128x128xf32, #tpu.memory_space<vmem>>, vector<128x128xf32>
    %c0_8 = arith.constant 0 : index
    %c0_9 = arith.constant 0 : index
    %9 = vector.load %arg5[%c0_8, %c0_9] : memref<1x128xf32, #tpu.memory_space<vmem>>, vector<1x128xf32>
    %cst_10 = arith.constant dense<0.000000e+00> : vector<104x128xf32>
    %10 = tpu.matmul %7, %8, %cst_10 {dimension_numbers = #tpu.dot_dimension_numbers<[1], [0], [0], [1], [0, 0, 1, 1], [], []>} : vector<104x128xf32>, vector<128x128xf32>, vector<104x128xf32> -> vector<104x128xf32>
    %11 = vector.broadcast %9 : vector<1x128xf32> to vector<104x128xf32>
    %12 = arith.addf %10, %11 : vector<104x128xf32>
    %cst_11 = arith.constant 0.000000e+00 : f32
    %13 = vector.broadcast %cst_11 : f32 to vector<104x128xf32>
    %14 = arith.maximumf %12, %13 : vector<104x128xf32>
    %c0_12 = arith.constant 0 : index
    %c0_13 = arith.constant 0 : index
    %15 = vector.load %arg6[%c0_12, %c0_13] : memref<128x128xf32, #tpu.memory_space<vmem>>, vector<128x128xf32>
    %c0_14 = arith.constant 0 : index
    %c0_15 = arith.constant 0 : index
    %16 = vector.load %arg7[%c0_14, %c0_15] : memref<1x128xf32, #tpu.memory_space<vmem>>, vector<1x128xf32>
    %cst_16 = arith.constant dense<0.000000e+00> : vector<104x128xf32>
    %17 = tpu.matmul %14, %15, %cst_16 {dimension_numbers = #tpu.dot_dimension_numbers<[1], [0], [0], [1], [0, 0, 1, 1], [], []>} : vector<104x128xf32>, vector<128x128xf32>, vector<104x128xf32> -> vector<104x128xf32>
    %18 = vector.broadcast %16 : vector<1x128xf32> to vector<104x128xf32>
    %19 = arith.addf %17, %18 : vector<104x128xf32>
    %cst_17 = arith.constant 0.000000e+00 : f32
    %20 = vector.broadcast %cst_17 : f32 to vector<104x128xf32>
    %21 = arith.maximumf %19, %20 : vector<104x128xf32>
    %c0_18 = arith.constant 0 : index
    %c0_19 = arith.constant 0 : index
    %22 = vector.load %arg8[%c0_18, %c0_19] : memref<128x128xf32, #tpu.memory_space<vmem>>, vector<128x128xf32>
    %c0_20 = arith.constant 0 : index
    %c0_21 = arith.constant 0 : index
    %23 = vector.load %arg9[%c0_20, %c0_21] : memref<1x128xf32, #tpu.memory_space<vmem>>, vector<1x128xf32>
    %cst_22 = arith.constant dense<0.000000e+00> : vector<104x128xf32>
    %24 = tpu.matmul %21, %22, %cst_22 {dimension_numbers = #tpu.dot_dimension_numbers<[1], [0], [0], [1], [0, 0, 1, 1], [], []>} : vector<104x128xf32>, vector<128x128xf32>, vector<104x128xf32> -> vector<104x128xf32>
    %25 = vector.broadcast %23 : vector<1x128xf32> to vector<104x128xf32>
    %26 = arith.addf %24, %25 : vector<104x128xf32>
    %cst_23 = arith.constant 0.000000e+00 : f32
    %27 = vector.broadcast %cst_23 : f32 to vector<104x128xf32>
    %28 = arith.maximumf %26, %27 : vector<104x128xf32>
    %c0_24 = arith.constant 0 : index
    %c0_25 = arith.constant 0 : index
    %29 = vector.load %arg10[%c0_24, %c0_25] : memref<128x128xf32, #tpu.memory_space<vmem>>, vector<128x128xf32>
    %c0_26 = arith.constant 0 : index
    %c0_27 = arith.constant 0 : index
    %30 = vector.load %arg11[%c0_26, %c0_27] : memref<1x128xf32, #tpu.memory_space<vmem>>, vector<1x128xf32>
    %cst_28 = arith.constant dense<0.000000e+00> : vector<104x128xf32>
    %31 = tpu.matmul %28, %29, %cst_28 {dimension_numbers = #tpu.dot_dimension_numbers<[1], [0], [0], [1], [0, 0, 1, 1], [], []>} : vector<104x128xf32>, vector<128x128xf32>, vector<104x128xf32> -> vector<104x128xf32>
    %32 = vector.broadcast %30 : vector<1x128xf32> to vector<104x128xf32>
    %33 = arith.addf %31, %32 : vector<104x128xf32>
    %cst_29 = arith.constant 0.000000e+00 : f32
    %34 = vector.broadcast %cst_29 : f32 to vector<104x128xf32>
    %35 = arith.maximumf %33, %34 : vector<104x128xf32>
    %c0_30 = arith.constant 0 : index
    %c0_31 = arith.constant 0 : index
    %36 = vector.load %arg12[%c0_30, %c0_31] : memref<128x128xf32, #tpu.memory_space<vmem>>, vector<128x128xf32>
    %c0_32 = arith.constant 0 : index
    %c0_33 = arith.constant 0 : index
    %37 = vector.load %arg13[%c0_32, %c0_33] : memref<1x128xf32, #tpu.memory_space<vmem>>, vector<1x128xf32>
    %cst_34 = arith.constant dense<0.000000e+00> : vector<104x128xf32>
    %38 = tpu.matmul %35, %36, %cst_34 {dimension_numbers = #tpu.dot_dimension_numbers<[1], [0], [0], [1], [0, 0, 1, 1], [], []>} : vector<104x128xf32>, vector<128x128xf32>, vector<104x128xf32> -> vector<104x128xf32>
    %39 = vector.broadcast %37 : vector<1x128xf32> to vector<104x128xf32>
    %40 = arith.addf %38, %39 : vector<104x128xf32>
    %c0_35 = arith.constant 0 : index
    %c0_36 = arith.constant 0 : index
    %41 = vector.load %arg14[%c0_35, %c0_36] : memref<104x128xf32, #tpu.memory_space<vmem>>, vector<104x128xf32>
    tpu.vector_store %arg14[%c0_35, %c0_36], %40 {strides = array<i32>} : memref<104x128xf32, #tpu.memory_space<vmem>>, vector<104x128xf32>,
    return
  }
  func.func @transform_0(%arg0: i32) -> (i32, i32) {
    %c0_i32 = arith.constant 0 : i32
    %c0_i32_0 = arith.constant 0 : i32
    return %arg0, %c0_i32 : i32, i32
  }
  func.func @transform_1(%arg0: i32) -> (i32, i32) {
    %c0_i32 = arith.constant 0 : i32
    %c0_i32_0 = arith.constant 0 : i32
    %c0_i32_1 = arith.constant 0 : i32
    return %c0_i32, %c0_i32_0 : i32, i32
  }
  func.func @transform_2(%arg0: i32) -> (i32, i32) {
    %c0_i32 = arith.constant 0 : i32
    %c0_i32_0 = arith.constant 0 : i32
    %c0_i32_1 = arith.constant 0 : i32
    return %c0_i32, %c0_i32_0 : i32, i32
  }
  func.func @transform_3(%arg0: i32) -> (i32, i32) {
    %c0_i32 = arith.constant 0 : i32
    %c0_i32_0 = arith.constant 0 : i32
    %c0_i32_1 = arith.constant 0 : i32
    return %c0_i32, %c0_i32_0 : i32, i32
  }
  func.func @transform_4(%arg0: i32) -> (i32, i32) {
    %c0_i32 = arith.constant 0 : i32
    %c0_i32_0 = arith.constant 0 : i32
    %c0_i32_1 = arith.constant 0 : i32
    return %c0_i32, %c0_i32_0 : i32, i32
  }
  func.func @transform_5(%arg0: i32) -> (i32, i32) {
    %c0_i32 = arith.constant 0 : i32
    %c0_i32_0 = arith.constant 0 : i32
    %c0_i32_1 = arith.constant 0 : i32
    return %c0_i32, %c0_i32_0 : i32, i32
  }
  func.func @transform_6(%arg0: i32) -> (i32, i32) {
    %c0_i32 = arith.constant 0 : i32
    %c0_i32_0 = arith.constant 0 : i32
    %c0_i32_1 = arith.constant 0 : i32
    return %c0_i32, %c0_i32_0 : i32, i32
  }
  func.func @transform_7(%arg0: i32) -> (i32, i32) {
    %c0_i32 = arith.constant 0 : i32
    %c0_i32_0 = arith.constant 0 : i32
    %c0_i32_1 = arith.constant 0 : i32
    return %c0_i32, %c0_i32_0 : i32, i32
  }
  func.func @transform_8(%arg0: i32) -> (i32, i32) {
    %c0_i32 = arith.constant 0 : i32
    %c0_i32_0 = arith.constant 0 : i32
    %c0_i32_1 = arith.constant 0 : i32
    return %c0_i32, %c0_i32_0 : i32, i32
  }
  func.func @transform_9(%arg0: i32) -> (i32, i32) {
    %c0_i32 = arith.constant 0 : i32
    %c0_i32_0 = arith.constant 0 : i32
    %c0_i32_1 = arith.constant 0 : i32
    return %c0_i32, %c0_i32_0 : i32, i32
  }
  func.func @transform_10(%arg0: i32) -> (i32, i32) {
    %c0_i32 = arith.constant 0 : i32
    %c0_i32_0 = arith.constant 0 : i32
    %c0_i32_1 = arith.constant 0 : i32
    return %c0_i32, %c0_i32_0 : i32, i32
  }
  func.func @transform_11(%arg0: i32) -> (i32, i32) {
    %c0_i32 = arith.constant 0 : i32
    %c0_i32_0 = arith.constant 0 : i32
    %c0_i32_1 = arith.constant 0 : i32
    return %c0_i32, %c0_i32_0 : i32, i32
  }
  func.func @transform_12(%arg0: i32) -> (i32, i32) {
    %c0_i32 = arith.constant 0 : i32
    %c0_i32_0 = arith.constant 0 : i32
    %c0_i32_1 = arith.constant 0 : i32
    return %c0_i32, %c0_i32_0 : i32, i32
  }
  func.func @transform_13(%arg0: i32) -> (i32, i32) {
    %c0_i32 = arith.constant 0 : i32
    %c0_i32_0 = arith.constant 0 : i32
    return %arg0, %c0_i32 : i32, i32
  }
}

module attributes {stable_mosaic.version = 11 : i64} {
  func.func @_mlp_kernel(%arg0: i32, %arg1: memref<104x128xf32, #tpu.memory_space<vmem>>, %arg2: memref<128x128xf32, #tpu.memory_space<vmem>>, %arg3: memref<1x128xf32, #tpu.memory_space<vmem>>, %arg4: memref<128x128xf32, #tpu.memory_space<vmem>>, %arg5: memref<1x128xf32, #tpu.memory_space<vmem>>, %arg6: memref<128x128xf32, #tpu.memory_space<vmem>>, %arg7: memref<1x128xf32, #tpu.memory_space<vmem>>, %arg8: memref<128x128xf32, #tpu.memory_space<vmem>>, %arg9: memref<1x128xf32, #tpu.memory_space<vmem>>, %arg10: memref<128x128xf32, #tpu.memory_space<vmem>>, %arg11: memref<1x128xf32, #tpu.memory_space<vmem>>, %arg12: memref<128x128xf32, #tpu.memory_space<vmem>>, %arg13: memref<1x128xf32, #tpu.memory_space<vmem>>, %arg14: memref<104x128xf32, #tpu.memory_space<vmem>>) attributes {dimension_semantics = [#tpu.dimension_semantics<parallel>], iteration_bounds = array<i64: 2>, scalar_prefetch = 0 : i64, scratch_operands = 0 : i64, tpu.core_type = #tpu.core_type<tc>, window_params = [{transform_indices = @transform_0, window_bounds = array<i64: 104, 128>}, {pipeline_mode = #tpu.pipeline_mode<synchronous>, transform_indices = @transform_1, window_bounds = array<i64: 128, 128>}, {pipeline_mode = #tpu.pipeline_mode<synchronous>, transform_indices = @transform_2, window_bounds = array<i64: 1, 128>}, {pipeline_mode = #tpu.pipeline_mode<synchronous>, transform_indices = @transform_3, window_bounds = array<i64: 128, 128>}, {pipeline_mode = #tpu.pipeline_mode<synchronous>, transform_indices = @transform_4, window_bounds = array<i64: 1, 128>}, {pipeline_mode = #tpu.pipeline_mode<synchronous>, transform_indices = @transform_5, window_bounds = array<i64: 128, 128>}, {pipeline_mode = #tpu.pipeline_mode<synchronous>, transform_indices = @transform_6, window_bounds = array<i64: 1, 128>}, {pipeline_mode = #tpu.pipeline_mode<synchronous>, transform_indices = @transform_7, window_bounds = array<i64: 128, 128>}, {pipeline_mode = #tpu.pipeline_mode<synchronous>, transform_indices = @transform_8, window_bounds = array<i64: 1, 128>}, {pipeline_mode = #tpu.pipeline_mode<synchronous>, transform_indices = @transform_9, window_bounds = array<i64: 128, 128>}, {pipeline_mode = #tpu.pipeline_mode<synchronous>, transform_indices = @transform_10, window_bounds = array<i64: 1, 128>}, {pipeline_mode = #tpu.pipeline_mode<synchronous>, transform_indices = @transform_11, window_bounds = array<i64: 128, 128>}, {pipeline_mode = #tpu.pipeline_mode<synchronous>, transform_indices = @transform_12, window_bounds = array<i64: 1, 128>}, {transform_indices = @transform_13, window_bounds = array<i64: 104, 128>}]} {
    %c0 = arith.constant 0 : index
    %c0_0 = arith.constant 0 : index
    %0 = vector.load %arg1[%c0, %c0_0] : memref<104x128xf32, #tpu.memory_space<vmem>>, vector<104x128xf32>
    %c0_1 = arith.constant 0 : index
    %c0_2 = arith.constant 0 : index
    %1 = vector.load %arg2[%c0_1, %c0_2] : memref<128x128xf32, #tpu.memory_space<vmem>>, vector<128x128xf32>
    %c0_3 = arith.constant 0 : index
    %c0_4 = arith.constant 0 : index
    %2 = vector.load %arg3[%c0_3, %c0_4] : memref<1x128xf32, #tpu.memory_space<vmem>>, vector<1x128xf32>
    %cst = arith.constant dense<0.000000e+00> : vector<104x128xf32>
    %3 = tpu.matmul %0, %1, %cst {dimension_numbers = #tpu.dot_dimension_numbers<[1], [0], [0], [1], [0, 0, 1, 1], [], []>} : vector<104x128xf32>, vector<128x128xf32>, vector<104x128xf32> -> vector<104x128xf32>
    %4 = vector.broadcast %2 : vector<1x128xf32> to vector<104x128xf32>
    %5 = arith.addf %3, %4 : vector<104x128xf32>
    %cst_5 = arith.constant 0.000000e+00 : f32
    %6 = vector.broadcast %cst_5 : f32 to vector<104x128xf32>
    %7 = arith.maximumf %5, %6 : vector<104x128xf32>
    %c0_6 = arith.constant 0 : index
    %c0_7 = arith.constant 0 : index
    %8 = vector.load %arg4[%c0_6, %c0_7] : memref<128x128xf32, #tpu.memory_space<vmem>>, vector<128x128xf32>
    %c0_8 = arith.constant 0 : index
    %c0_9 = arith.constant 0 : index
    %9 = vector.load %arg5[%c0_8, %c0_9] : memref<1x128xf32, #tpu.memory_space<vmem>>, vector<1x128xf32>
    %cst_10 = arith.constant dense<0.000000e+00> : vector<104x128xf32>
    %10 = tpu.matmul %7, %8, %cst_10 {dimension_numbers = #tpu.dot_dimension_numbers<[1], [0], [0], [1], [0, 0, 1, 1], [], []>} : vector<104x128xf32>, vector<128x128xf32>, vector<104x128xf32> -> vector<104x128xf32>
    %11 = vector.broadcast %9 : vector<1x128xf32> to vector<104x128xf32>
    %12 = arith.addf %10, %11 : vector<104x128xf32>
    %cst_11 = arith.constant 0.000000e+00 : f32
    %13 = vector.broadcast %cst_11 : f32 to vector<104x128xf32>
    %14 = arith.maximumf %12, %13 : vector<104x128xf32>
    %c0_12 = arith.constant 0 : index
    %c0_13 = arith.constant 0 : index
    %15 = vector.load %arg6[%c0_12, %c0_13] : memref<128x128xf32, #tpu.memory_space<vmem>>, vector<128x128xf32>
    %c0_14 = arith.constant 0 : index
    %c0_15 = arith.constant 0 : index
    %16 = vector.load %arg7[%c0_14, %c0_15] : memref<1x128xf32, #tpu.memory_space<vmem>>, vector<1x128xf32>
    %cst_16 = arith.constant dense<0.000000e+00> : vector<104x128xf32>
    %17 = tpu.matmul %14, %15, %cst_16 {dimension_numbers = #tpu.dot_dimension_numbers<[1], [0], [0], [1], [0, 0, 1, 1], [], []>} : vector<104x128xf32>, vector<128x128xf32>, vector<104x128xf32> -> vector<104x128xf32>
    %18 = vector.broadcast %16 : vector<1x128xf32> to vector<104x128xf32>
    %19 = arith.addf %17, %18 : vector<104x128xf32>
    %cst_17 = arith.constant 0.000000e+00 : f32
    %20 = vector.broadcast %cst_17 : f32 to vector<104x128xf32>
    %21 = arith.maximumf %19, %20 : vector<104x128xf32>
    %c0_18 = arith.constant 0 : index
    %c0_19 = arith.constant 0 : index
    %22 = vector.load %arg8[%c0_18, %c0_19] : memref<128x128xf32, #tpu.memory_space<vmem>>, vector<128x128xf32>
    %c0_20 = arith.constant 0 : index
    %c0_21 = arith.constant 0 : index
    %23 = vector.load %arg9[%c0_20, %c0_21] : memref<1x128xf32, #tpu.memory_space<vmem>>, vector<1x128xf32>
    %cst_22 = arith.constant dense<0.000000e+00> : vector<104x128xf32>
    %24 = tpu.matmul %21, %22, %cst_22 {dimension_numbers = #tpu.dot_dimension_numbers<[1], [0], [0], [1], [0, 0, 1, 1], [], []>} : vector<104x128xf32>, vector<128x128xf32>, vector<104x128xf32> -> vector<104x128xf32>
    %25 = vector.broadcast %23 : vector<1x128xf32> to vector<104x128xf32>
    %26 = arith.addf %24, %25 : vector<104x128xf32>
    %cst_23 = arith.constant 0.000000e+00 : f32
    %27 = vector.broadcast %cst_23 : f32 to vector<104x128xf32>
    %28 = arith.maximumf %26, %27 : vector<104x128xf32>
    %c0_24 = arith.constant 0 : index
    %c0_25 = arith.constant 0 : index
    %29 = vector.load %arg10[%c0_24, %c0_25] : memref<128x128xf32, #tpu.memory_space<vmem>>, vector<128x128xf32>
    %c0_26 = arith.constant 0 : index
    %c0_27 = arith.constant 0 : index
    %30 = vector.load %arg11[%c0_26, %c0_27] : memref<1x128xf32, #tpu.memory_space<vmem>>, vector<1x128xf32>
    %cst_28 = arith.constant dense<0.000000e+00> : vector<104x128xf32>
    %31 = tpu.matmul %28, %29, %cst_28 {dimension_numbers = #tpu.dot_dimension_numbers<[1], [0], [0], [1], [0, 0, 1, 1], [], []>} : vector<104x128xf32>, vector<128x128xf32>, vector<104x128xf32> -> vector<104x128xf32>
    %32 = vector.broadcast %30 : vector<1x128xf32> to vector<104x128xf32>
    %33 = arith.addf %31, %32 : vector<104x128xf32>
    %cst_29 = arith.constant 0.000000e+00 : f32
    %34 = vector.broadcast %cst_29 : f32 to vector<104x128xf32>
    %35 = arith.maximumf %33, %34 : vector<104x128xf32>
    %c0_30 = arith.constant 0 : index
    %c0_31 = arith.constant 0 : index
    %36 = vector.load %arg12[%c0_30, %c0_31] : memref<128x128xf32, #tpu.memory_space<vmem>>, vector<128x128xf32>
    %c0_32 = arith.constant 0 : index
    %c0_33 = arith.constant 0 : index
    %37 = vector.load %arg13[%c0_32, %c0_33] : memref<1x128xf32, #tpu.memory_space<vmem>>, vector<1x128xf32>
    %cst_34 = arith.constant dense<0.000000e+00> : vector<104x128xf32>
    %38 = tpu.matmul %35, %36, %cst_34 {dimension_numbers = #tpu.dot_dimension_numbers<[1], [0], [0], [1], [0, 0, 1, 1], [], []>} : vector<104x128xf32>, vector<128x128xf32>, vector<104x128xf32> -> vector<104x128xf32>
    %39 = vector.broadcast %37 : vector<1x128xf32> to vector<104x128xf32>
    %40 = arith.addf %38, %39 : vector<104x128xf32>
    %c0_35 = arith.constant 0 : index
    %c0_36 = arith.constant 0 : index
    %41 = vector.load %arg14[%c0_35, %c0_36] : memref<104x128xf32, #tpu.memory_space<vmem>>, vector<104x128xf32>
    tpu.vector_store %arg14[%c0_35, %c0_36], %40 {strides = array<i32>} : memref<104x128xf32, #tpu.memory_space<vmem>>, vector<104x128xf32>,
    return
  }
  func.func @transform_0(%arg0: i32) -> (i32, i32) {
    %c0_i32 = arith.constant 0 : i32
    %c0_i32_0 = arith.constant 0 : i32
    return %arg0, %c0_i32 : i32, i32
  }
  func.func @transform_1(%arg0: i32) -> (i32, i32) {
    %c0_i32 = arith.constant 0 : i32
    %c0_i32_0 = arith.constant 0 : i32
    %c0_i32_1 = arith.constant 0 : i32
    return %c0_i32, %c0_i32_0 : i32, i32
  }
  func.func @transform_2(%arg0: i32) -> (i32, i32) {
    %c0_i32 = arith.constant 0 : i32
    %c0_i32_0 = arith.constant 0 : i32
    %c0_i32_1 = arith.constant 0 : i32
    return %c0_i32, %c0_i32_0 : i32, i32
  }
  func.func @transform_3(%arg0: i32) -> (i32, i32) {
    %c0_i32 = arith.constant 0 : i32
    %c0_i32_0 = arith.constant 0 : i32
    %c0_i32_1 = arith.constant 0 : i32
    return %c0_i32, %c0_i32_0 : i32, i32
  }
  func.func @transform_4(%arg0: i32) -> (i32, i32) {
    %c0_i32 = arith.constant 0 : i32
    %c0_i32_0 = arith.constant 0 : i32
    %c0_i32_1 = arith.constant 0 : i32
    return %c0_i32, %c0_i32_0 : i32, i32
  }
  func.func @transform_5(%arg0: i32) -> (i32, i32) {
    %c0_i32 = arith.constant 0 : i32
    %c0_i32_0 = arith.constant 0 : i32
    %c0_i32_1 = arith.constant 0 : i32
    return %c0_i32, %c0_i32_0 : i32, i32
  }
  func.func @transform_6(%arg0: i32) -> (i32, i32) {
    %c0_i32 = arith.constant 0 : i32
    %c0_i32_0 = arith.constant 0 : i32
    %c0_i32_1 = arith.constant 0 : i32
    return %c0_i32, %c0_i32_0 : i32, i32
  }
  func.func @transform_7(%arg0: i32) -> (i32, i32) {
    %c0_i32 = arith.constant 0 : i32
    %c0_i32_0 = arith.constant 0 : i32
    %c0_i32_1 = arith.constant 0 : i32
    return %c0_i32, %c0_i32_0 : i32, i32
  }
  func.func @transform_8(%arg0: i32) -> (i32, i32) {
    %c0_i32 = arith.constant 0 : i32
    %c0_i32_0 = arith.constant 0 : i32
    %c0_i32_1 = arith.constant 0 : i32
    return %c0_i32, %c0_i32_0 : i32, i32
  }
  func.func @transform_9(%arg0: i32) -> (i32, i32) {
    %c0_i32 = arith.constant 0 : i32
    %c0_i32_0 = arith.constant 0 : i32
    %c0_i32_1 = arith.constant 0 : i32
    return %c0_i32, %c0_i32_0 : i32, i32
  }
  func.func @transform_10(%arg0: i32) -> (i32, i32) {
    %c0_i32 = arith.constant 0 : i32
    %c0_i32_0 = arith.constant 0 : i32
    %c0_i32_1 = arith.constant 0 : i32
    return %c0_i32, %c0_i32_0 : i32, i32
  }
  func.func @transform_11(%arg0: i32) -> (i32, i32) {
    %c0_i32 = arith.constant 0 : i32
    %c0_i32_0 = arith.constant 0 : i32
    %c0_i32_1 = arith.constant 0 : i32
    return %c0_i32, %c0_i32_0 : i32, i32
  }
  func.func @transform_12(%arg0: i32) -> (i32, i32) {
    %c0_i32 = arith.constant 0 : i32
    %c0_i32_0 = arith.constant 0 : i32
    %c0_i32_1 = arith.constant 0 : i32
    return %c0_i32, %c0_i32_0 : i32, i32
  }
  func.func @transform_13(%arg0: i32) -> (i32, i32) {
    %c0_i32 = arith.constant 0 : i32
    %c0_i32_0 = arith.constant 0 : i32
    return %arg0, %c0_i32 : i32, i32
  }
}

</mosaic_0001>

<llo_original>
// kernel: tpu_custom_call.1
$region0: #{tpu_custom_call.1}
  #allocation0 [shape = 'u32[]', space=smem, size = 0x4, offset = 0x4, fixed_abs, tag = 'smem constant byte address 0x4 - core index']
  #allocation1 [shape = 'u32[144,128]{1,0:T(1,128)}', space=vmem, size = 0x12000, scoped, tag = 'internal scratch']
  %s0 = inlined_call_operand.hbm [shape: f32[208,128], index: 0, kind: input, shape index: {}]
  %s1 = inlined_call_operand.hbm [shape: f32[128,128], index: 1, kind: input, shape index: {}]
  %s2 = inlined_call_operand.vmem [shape: f32[1,128], index: 2, kind: input, shape index: {}]
  %s3 = inlined_call_operand.hbm [shape: f32[128,128], index: 3, kind: input, shape index: {}]
  %s4 = inlined_call_operand.vmem [shape: f32[1,128], index: 4, kind: input, shape index: {}]
  %s5 = inlined_call_operand.hbm [shape: f32[128,128], index: 5, kind: input, shape index: {}]
  %s6 = inlined_call_operand.vmem [shape: f32[1,128], index: 6, kind: input, shape index: {}]
  %s7 = inlined_call_operand.hbm [shape: f32[128,128], index: 7, kind: input, shape index: {}]
  %s8 = inlined_call_operand.vmem [shape: f32[1,128], index: 8, kind: input, shape index: {}]
  %s9 = inlined_call_operand.hbm [shape: f32[128,128], index: 9, kind: input, shape index: {}]
  %s10 = inlined_call_operand.vmem [shape: f32[1,128], index: 10, kind: input, shape index: {}]
  %s11 = inlined_call_operand.hbm [shape: f32[128,128], index: 11, kind: input, shape index: {}]
  %s12 = inlined_call_operand.vmem [shape: f32[1,128], index: 12, kind: input, shape index: {}]
  %s13 = inlined_call_operand.hbm [shape: f32[208,128], index: 13, kind: output, shape index: {}]
  %s14 = sld [smem:[#allocation0]]
  $region113: #{tpu_custom_call.1} parent=0
    _
  %s16 = ssub.s32 1, %s14
  %s17 = scalar_select 0, %s16, %s14
  $region1: #{tpu_custom_call.1} parent=0
    #allocation2 [shape = 'u8[106496]{0}', space=vmem, size = 0x1a000, scoped, tag = 'input window, operand 0']
    #allocation3 [shape = 's32[2]{0}', space=sflag, size = 0x8, scoped, tag = 'scoped memory for tpu_custom_call.1']
    #allocation4 [shape = 's32[2]{0}', space=sflag, size = 0x8, scoped, tag = 'scoped memory for tpu_custom_call.1']
    #allocation5 [shape = 'u8[65536]{0}', space=vmem, size = 0x10000, scoped, tag = 'input window, operand 1, single buffered']
    #allocation6 [shape = 's32[1]{0}', space=sflag, size = 0x4, scoped, tag = 'scoped memory for tpu_custom_call.1']
    #allocation7 [shape = 'u8[65536]{0}', space=vmem, size = 0x10000, scoped, tag = 'input window, operand 3, single buffered']
    #allocation8 [shape = 'u8[65536]{0}', space=vmem, size = 0x10000, scoped, tag = 'input window, operand 5, single buffered']
    #allocation9 [shape = 's32[1]{0}', space=sflag, size = 0x4, scoped, tag = 'scoped memory for tpu_custom_call.1']
    #allocation10 [shape = 'u8[65536]{0}', space=vmem, size = 0x10000, scoped, tag = 'input window, operand 7, single buffered']
    #allocation11 [shape = 'u8[65536]{0}', space=vmem, size = 0x10000, scoped, tag = 'input window, operand 9, single buffered']
    #allocation12 [shape = 's32[1]{0}', space=sflag, size = 0x4, scoped, tag = 'scoped memory for tpu_custom_call.1']
    #allocation13 [shape = 'u8[65536]{0}', space=vmem, size = 0x10000, scoped, tag = 'input window, operand 11, single buffered']
    #allocation14 [shape = 'u8[106496]{0}', space=vmem, size = 0x1a000, scoped, tag = 'output window, operand 0']
    %18 = vsyncpa [#allocation3], 0
    %s19 = scalar_lea.sflag [#allocation3], 1
    %20 = vsyncpa %s19, 0
    %21 = vsyncpa [#allocation6], 0
    %22 = vsyncpa [#allocation9], 0
    %23 = vsyncpa [#allocation12], 0
    %24 = vsyncpa [#allocation4], 0
    %s25 = scalar_lea.sflag [#allocation4], 1
    %26 = vsyncpa %s25, 0
    loop: start=0, step=1, limit=4
    $region2: #{tpu_custom_call.1} parent=1 // loop_pre_header
      _
    $region3: #{tpu_custom_call.1} parent=1 // loop_header
      %s28 = sphi 0, %s32
      %p29 = scmp.ge.s32.totalorder %s28, 4
      %s38 = sphi 0, %s40
      %s41 = sphi 0, %s38
      %s42 = sphi 0, %s41
      %s58 = sphi 0, %s42
      %s62 = sphi 0, %s62
      %s64 = sphi 0, %s62
      %s65 = sphi 0, %s64
      %s79 = sphi 0, %s65
      %s83 = sphi 0, %s83
      %s85 = sphi 0, %s83
      %s86 = sphi 0, %s85
      %s100 = sphi 0, %s86
      %s104 = sphi 0, %s104
      %s106 = sphi 0, %s104
      %s107 = sphi 0, %s106
      %s121 = sphi 0, %s107
      %s125 = sphi 0, %s125
      %s127 = sphi 0, %s125
      %s128 = sphi 0, %s127
      %s142 = sphi 0, %s128
      %s146 = sphi 0, %s146
      %s148 = sphi 0, %s146
      %s149 = sphi 0, %s148
      %s163 = sphi 0, %s149
      %s167 = sphi 0, %s167
      %s169 = sphi 0, %s167
      %s170 = sphi 0, %s169
      %s184 = sphi 0, %s170
      %s188 = sphi 0, %s188
      %s190 = sphi 0, %s188
      %s191 = sphi 0, %s190
      %s205 = sphi 0, %s191
      %s209 = sphi 0, %s209
      %s211 = sphi 0, %s209
      %s212 = sphi 0, %s211
      %s226 = sphi 0, %s212
      %s230 = sphi 0, %s230
      %s232 = sphi 0, %s230
      %s233 = sphi 0, %s232
      %s247 = sphi 0, %s233
      %s251 = sphi 0, %s251
      %s253 = sphi 0, %s251
      %s254 = sphi 0, %s253
      %s268 = sphi 0, %s254
      %s272 = sphi 0, %s272
      %s274 = sphi 0, %s272
      %s275 = sphi 0, %s274
      %s289 = sphi 0, %s275
      %s293 = sphi 0, %s293
      %s295 = sphi 0, %s293
      %s296 = sphi 0, %s295
      %s310 = sphi 0, %s296
      %s316 = sphi 0, %s318
      %s319 = sphi 0, %s316
      %s320 = sphi 0, %s319
      %s336 = sphi 0, %s320
    $region4: #{tpu_custom_call.1} parent=1 // loop_header_branch
      %31 = sbr.rel (%p29) target = $region8
    $region5: #{tpu_custom_call.1} parent=1 // loop_body
      %s33 = ssub.s32 %s28, 1
      %s34 = ssub.s32 %s28, 2
      %s35 = sadd.s32 %s28, 1
      %s36 = ssub.s32 %s28, %s35
      %p37 = scmp.eq.s32.totalorder %s36, 0
      %s39 = sadd.s32 %s38, 1
      %s40 = scalar_select %p37, %s38, %s39
      %p43 = pneg %p37
      %p44 = scmp.eq.s32.totalorder %s28, 1
      %p45 = por %p43, %p44
      %p46 = scmp.ne.s32.totalorder %s38, %s41
      %p47 = scmp.eq.s32.totalorder %s28, 0
      %p48 = por %p46, %p47
      %p49 = scmp.ne.s32.totalorder %s38, %s41
      %p50 = scmp.eq.s32.totalorder %s33, 1
      %p51 = por %p49, %p50
      %p52 = scmp.ne.s32.totalorder %s41, %s42
      %p53 = scmp.eq.s32.totalorder %s33, 0
      %p54 = por %p52, %p53
      %p55 = scmp.ne.s32.totalorder %s41, %s42
      %p56 = scmp.eq.s32.totalorder %s34, 1
      %p57 = por %p55, %p56
      %p59 = scmp.ne.s32.totalorder %s42, %s58
      %p60 = scmp.eq.s32.totalorder %s34, 0
      %p61 = por %p59, %p60
      %s63 = sadd.s32 %s62, 1
      %p66 = scmp.eq.s32.totalorder %s28, 1
      %p67 = scmp.ne.s32.totalorder %s62, %s64
      %p68 = scmp.eq.s32.totalorder %s28, 0
      %p69 = por %p67, %p68
      %p70 = scmp.ne.s32.totalorder %s62, %s64
      %p71 = scmp.eq.s32.totalorder %s33, 1
      %p72 = por %p70, %p71
      %p73 = scmp.ne.s32.totalorder %s64, %s65
      %p74 = scmp.eq.s32.totalorder %s33, 0
      %p75 = por %p73, %p74
      %p76 = scmp.ne.s32.totalorder %s64, %s65
      %p77 = scmp.eq.s32.totalorder %s34, 1
      %p78 = por %p76, %p77
      %p80 = scmp.ne.s32.totalorder %s65, %s79
      %p81 = scmp.eq.s32.totalorder %s34, 0
      %p82 = por %p80, %p81
      %s84 = sadd.s32 %s83, 1
      %p87 = scmp.eq.s32.totalorder %s28, 1
      %p88 = scmp.ne.s32.totalorder %s83, %s85
      %p89 = scmp.eq.s32.totalorder %s28, 0
      %p90 = por %p88, %p89
      %p91 = scmp.ne.s32.totalorder %s83, %s85
      %p92 = scmp.eq.s32.totalorder %s33, 1
      %p93 = por %p91, %p92
      %p94 = scmp.ne.s32.totalorder %s85, %s86
      %p95 = scmp.eq.s32.totalorder %s33, 0
      %p96 = por %p94, %p95
      %p97 = scmp.ne.s32.totalorder %s85, %s86
      %p98 = scmp.eq.s32.totalorder %s34, 1
      %p99 = por %p97, %p98
      %p101 = scmp.ne.s32.totalorder %s86, %s100
      %p102 = scmp.eq.s32.totalorder %s34, 0
      %p103 = por %p101, %p102
      %s105 = sadd.s32 %s104, 1
      %p108 = scmp.eq.s32.totalorder %s28, 1
      %p109 = scmp.ne.s32.totalorder %s104, %s106
      %p110 = scmp.eq.s32.totalorder %s28, 0
      %p111 = por %p109, %p110
      %p112 = scmp.ne.s32.totalorder %s104, %s106
      %p113 = scmp.eq.s32.totalorder %s33, 1
      %p114 = por %p112, %p113
      %p115 = scmp.ne.s32.totalorder %s106, %s107
      %p116 = scmp.eq.s32.totalorder %s33, 0
      %p117 = por %p115, %p116
      %p118 = scmp.ne.s32.totalorder %s106, %s107
      %p119 = scmp.eq.s32.totalorder %s34, 1
      %p120 = por %p118, %p119
      %p122 = scmp.ne.s32.totalorder %s107, %s121
      %p123 = scmp.eq.s32.totalorder %s34, 0
      %p124 = por %p122, %p123
      %s126 = sadd.s32 %s125, 1
      %p129 = scmp.eq.s32.totalorder %s28, 1
      %p130 = scmp.ne.s32.totalorder %s125, %s127
      %p131 = scmp.eq.s32.totalorder %s28, 0
      %p132 = por %p130, %p131
      %p133 = scmp.ne.s32.totalorder %s125, %s127
      %p134 = scmp.eq.s32.totalorder %s33, 1
      %p135 = por %p133, %p134
      %p136 = scmp.ne.s32.totalorder %s127, %s128
      %p137 = scmp.eq.s32.totalorder %s33, 0
      %p138 = por %p136, %p137
      %p139 = scmp.ne.s32.totalorder %s127, %s128
      %p140 = scmp.eq.s32.totalorder %s34, 1
      %p141 = por %p139, %p140
      %p143 = scmp.ne.s32.totalorder %s128, %s142
      %p144 = scmp.eq.s32.totalorder %s34, 0
      %p145 = por %p143, %p144
      %s147 = sadd.s32 %s146, 1
      %p150 = scmp.eq.s32.totalorder %s28, 1
      %p151 = scmp.ne.s32.totalorder %s146, %s148
      %p152 = scmp.eq.s32.totalorder %s28, 0
      %p153 = por %p151, %p152
      %p154 = scmp.ne.s32.totalorder %s146, %s148
      %p155 = scmp.eq.s32.totalorder %s33, 1
      %p156 = por %p154, %p155
      %p157 = scmp.ne.s32.totalorder %s148, %s149
      %p158 = scmp.eq.s32.totalorder %s33, 0
      %p159 = por %p157, %p158
      %p160 = scmp.ne.s32.totalorder %s148, %s149
      %p161 = scmp.eq.s32.totalorder %s34, 1
      %p162 = por %p160, %p161
      %p164 = scmp.ne.s32.totalorder %s149, %s163
      %p165 = scmp.eq.s32.totalorder %s34, 0
      %p166 = por %p164, %p165
      %s168 = sadd.s32 %s167, 1
      %p171 = scmp.eq.s32.totalorder %s28, 1
      %p172 = scmp.ne.s32.totalorder %s167, %s169
      %p173 = scmp.eq.s32.totalorder %s28, 0
      %p174 = por %p172, %p173
      %p175 = scmp.ne.s32.totalorder %s167, %s169
      %p176 = scmp.eq.s32.totalorder %s33, 1
      %p177 = por %p175, %p176
      %p178 = scmp.ne.s32.totalorder %s169, %s170
      %p179 = scmp.eq.s32.totalorder %s33, 0
      %p180 = por %p178, %p179
      %p181 = scmp.ne.s32.totalorder %s169, %s170
      %p182 = scmp.eq.s32.totalorder %s34, 1
      %p183 = por %p181, %p182
      %p185 = scmp.ne.s32.totalorder %s170, %s184
      %p186 = scmp.eq.s32.totalorder %s34, 0
      %p187 = por %p185, %p186
      %s189 = sadd.s32 %s188, 1
      %p192 = scmp.eq.s32.totalorder %s28, 1
      %p193 = scmp.ne.s32.totalorder %s188, %s190
      %p194 = scmp.eq.s32.totalorder %s28, 0
      %p195 = por %p193, %p194
      %p196 = scmp.ne.s32.totalorder %s188, %s190
      %p197 = scmp.eq.s32.totalorder %s33, 1
      %p198 = por %p196, %p197
      %p199 = scmp.ne.s32.totalorder %s190, %s191
      %p200 = scmp.eq.s32.totalorder %s33, 0
      %p201 = por %p199, %p200
      %p202 = scmp.ne.s32.totalorder %s190, %s191
      %p203 = scmp.eq.s32.totalorder %s34, 1
      %p204 = por %p202, %p203
      %p206 = scmp.ne.s32.totalorder %s191, %s205
      %p207 = scmp.eq.s32.totalorder %s34, 0
      %p208 = por %p206, %p207
      %s210 = sadd.s32 %s209, 1
      %p213 = scmp.eq.s32.totalorder %s28, 1
      %p214 = scmp.ne.s32.totalorder %s209, %s211
      %p215 = scmp.eq.s32.totalorder %s28, 0
      %p216 = por %p214, %p215
      %p217 = scmp.ne.s32.totalorder %s209, %s211
      %p218 = scmp.eq.s32.totalorder %s33, 1
      %p219 = por %p217, %p218
      %p220 = scmp.ne.s32.totalorder %s211, %s212
      %p221 = scmp.eq.s32.totalorder %s33, 0
      %p222 = por %p220, %p221
      %p223 = scmp.ne.s32.totalorder %s211, %s212
      %p224 = scmp.eq.s32.totalorder %s34, 1
      %p225 = por %p223, %p224
      %p227 = scmp.ne.s32.totalorder %s212, %s226
      %p228 = scmp.eq.s32.totalorder %s34, 0
      %p229 = por %p227, %p228
      %s231 = sadd.s32 %s230, 1
      %p234 = scmp.eq.s32.totalorder %s28, 1
      %p235 = scmp.ne.s32.totalorder %s230, %s232
      %p236 = scmp.eq.s32.totalorder %s28, 0
      %p237 = por %p235, %p236
      %p238 = scmp.ne.s32.totalorder %s230, %s232
      %p239 = scmp.eq.s32.totalorder %s33, 1
      %p240 = por %p238, %p239
      %p241 = scmp.ne.s32.totalorder %s232, %s233
      %p242 = scmp.eq.s32.totalorder %s33, 0
      %p243 = por %p241, %p242
      %p244 = scmp.ne.s32.totalorder %s232, %s233
      %p245 = scmp.eq.s32.totalorder %s34, 1
      %p246 = por %p244, %p245
      %p248 = scmp.ne.s32.totalorder %s233, %s247
      %p249 = scmp.eq.s32.totalorder %s34, 0
      %p250 = por %p248, %p249
      %s252 = sadd.s32 %s251, 1
      %p255 = scmp.eq.s32.totalorder %s28, 1
      %p256 = scmp.ne.s32.totalorder %s251, %s253
      %p257 = scmp.eq.s32.totalorder %s28, 0
      %p258 = por %p256, %p257
      %p259 = scmp.ne.s32.totalorder %s251, %s253
      %p260 = scmp.eq.s32.totalorder %s33, 1
      %p261 = por %p259, %p260
      %p262 = scmp.ne.s32.totalorder %s253, %s254
      %p263 = scmp.eq.s32.totalorder %s33, 0
      %p264 = por %p262, %p263
      %p265 = scmp.ne.s32.totalorder %s253, %s254
      %p266 = scmp.eq.s32.totalorder %s34, 1
      %p267 = por %p265, %p266
      %p269 = scmp.ne.s32.totalorder %s254, %s268
      %p270 = scmp.eq.s32.totalorder %s34, 0
      %p271 = por %p269, %p270
      %s273 = sadd.s32 %s272, 1
      %p276 = scmp.eq.s32.totalorder %s28, 1
      %p277 = scmp.ne.s32.totalorder %s272, %s274
      %p278 = scmp.eq.s32.totalorder %s28, 0
      %p279 = por %p277, %p278
      %p280 = scmp.ne.s32.totalorder %s272, %s274
      %p281 = scmp.eq.s32.totalorder %s33, 1
      %p282 = por %p280, %p281
      %p283 = scmp.ne.s32.totalorder %s274, %s275
      %p284 = scmp.eq.s32.totalorder %s33, 0
      %p285 = por %p283, %p284
      %p286 = scmp.ne.s32.totalorder %s274, %s275
      %p287 = scmp.eq.s32.totalorder %s34, 1
      %p288 = por %p286, %p287
      %p290 = scmp.ne.s32.totalorder %s275, %s289
      %p291 = scmp.eq.s32.totalorder %s34, 0
      %p292 = por %p290, %p291
      %s294 = sadd.s32 %s293, 1
      %p297 = scmp.eq.s32.totalorder %s28, 1
      %p298 = scmp.ne.s32.totalorder %s293, %s295
      %p299 = scmp.eq.s32.totalorder %s28, 0
      %p300 = por %p298, %p299
      %p301 = scmp.ne.s32.totalorder %s293, %s295
      %p302 = scmp.eq.s32.totalorder %s33, 1
      %p303 = por %p301, %p302
      %p304 = scmp.ne.s32.totalorder %s295, %s296
      %p305 = scmp.eq.s32.totalorder %s33, 0
      %p306 = por %p304, %p305
      %p307 = scmp.ne.s32.totalorder %s295, %s296
      %p308 = scmp.eq.s32.totalorder %s34, 1
      %p309 = por %p307, %p308
      %p311 = scmp.ne.s32.totalorder %s296, %s310
      %p312 = scmp.eq.s32.totalorder %s34, 0
      %p313 = por %p311, %p312
      %s314 = ssub.s32 %s28, %s35
      %p315 = scmp.eq.s32.totalorder %s314, 0
      %s317 = sadd.s32 %s316, 1
      %s318 = scalar_select %p315, %s316, %s317
      %p321 = pneg %p315
      %p322 = scmp.eq.s32.totalorder %s28, 1
      %p323 = por %p321, %p322
      %p324 = scmp.ne.s32.totalorder %s316, %s319
      %p325 = scmp.eq.s32.totalorder %s28, 0
      %p326 = por %p324, %p325
      %p327 = scmp.ne.s32.totalorder %s316, %s319
      %p328 = scmp.eq.s32.totalorder %s33, 1
      %p329 = por %p327, %p328
      %p330 = scmp.ne.s32.totalorder %s319, %s320
      %p331 = scmp.eq.s32.totalorder %s33, 0
      %p332 = por %p330, %p331
      %p333 = scmp.ne.s32.totalorder %s319, %s320
      %p334 = scmp.eq.s32.totalorder %s34, 1
      %p335 = por %p333, %p334
      %p337 = scmp.ne.s32.totalorder %s320, %s336
      %p338 = scmp.eq.s32.totalorder %s34, 0
      %p339 = por %p337, %p338
      %p340 = scmp.le.s32.totalorder 1, %s28
      %p341 = scmp.lt.s32.totalorder %s28, 3
      %p342 = pnand %p340, %p341
      %p343 = pneg %p342
      // Predicated region
      $region9: #{tpu_custom_call.1} parent=5 // pred_check
        _
      $region10: #{tpu_custom_call.1} parent=5 // pred_check_branch
        %345 = sbr.rel (%p342) target = $region12
      $region11: #{tpu_custom_call.1} parent=5 // pred_region
        %s346 = ssub.s32 %s28, 1
        // Predicated region
        $region13: #{tpu_custom_call.1} parent=11 // pred_check
          %p347 = pneg %p75
        $region14: #{tpu_custom_call.1} parent=11 // pred_check_branch
          %349 = sbr.rel (%p347) target = $region16
        $region15: #{tpu_custom_call.1} parent=11 // pred_region
          %s351 = ssub.s32 2048, 2048
          %352 = vsyncadd [#allocation6], %s351
          %s353 = sshll.u32 [#allocation5], 4
          %s354 = int_to_ptr.vmem [resolvable:$true] %s353
          %359 = dma.hbm_to_vmem [thread:$0]  %s1, 2048, %s354, [#allocation6], 128, 128, 8
        $region16: #{tpu_custom_call.1} parent=11 // pred_fallthru
          _
        // Predicated region
        $region17: #{tpu_custom_call.1} parent=11 // pred_check
          %p360 = pneg %p96
        $region18: #{tpu_custom_call.1} parent=11 // pred_check_branch
          %362 = sbr.rel (%p360) target = $region20
        $region19: #{tpu_custom_call.1} parent=11 // pred_region
          _
        $region20: #{tpu_custom_call.1} parent=11 // pred_fallthru
          _
        // Predicated region
        $region21: #{tpu_custom_call.1} parent=11 // pred_check
          %p363 = pneg %p117
        $region22: #{tpu_custom_call.1} parent=11 // pred_check_branch
          %365 = sbr.rel (%p363) target = $region24
        $region23: #{tpu_custom_call.1} parent=11 // pred_region
          %s367 = ssub.s32 2048, 2048
          %368 = vsyncadd [#allocation6], %s367
          %s369 = sshll.u32 [#allocation7], 4
          %s370 = int_to_ptr.vmem [resolvable:$true] %s369
          %375 = dma.hbm_to_vmem [thread:$0]  %s3, 2048, %s370, [#allocation6], 128, 128, 8
        $region24: #{tpu_custom_call.1} parent=11 // pred_fallthru
          _
        // Predicated region
        $region25: #{tpu_custom_call.1} parent=11 // pred_check
          %p376 = pneg %p138
        $region26: #{tpu_custom_call.1} parent=11 // pred_check_branch
          %378 = sbr.rel (%p376) target = $region28
        $region27: #{tpu_custom_call.1} parent=11 // pred_region
          _
        $region28: #{tpu_custom_call.1} parent=11 // pred_fallthru
          _
        // Predicated region
        $region29: #{tpu_custom_call.1} parent=11 // pred_check
          %p379 = pneg %p159
        $region30: #{tpu_custom_call.1} parent=11 // pred_check_branch
          %381 = sbr.rel (%p379) target = $region32
        $region31: #{tpu_custom_call.1} parent=11 // pred_region
          %s383 = ssub.s32 2048, 2048
          %384 = vsyncadd [#allocation9], %s383
          %s385 = sshll.u32 [#allocation8], 4
          %s386 = int_to_ptr.vmem [resolvable:$true] %s385
          %391 = dma.hbm_to_vmem [thread:$0]  %s5, 2048, %s386, [#allocation9], 128, 128, 8
        $region32: #{tpu_custom_call.1} parent=11 // pred_fallthru
          _
        // Predicated region
        $region33: #{tpu_custom_call.1} parent=11 // pred_check
          %p392 = pneg %p180
        $region34: #{tpu_custom_call.1} parent=11 // pred_check_branch
          %394 = sbr.rel (%p392) target = $region36
        $region35: #{tpu_custom_call.1} parent=11 // pred_region
          _
        $region36: #{tpu_custom_call.1} parent=11 // pred_fallthru
          _
        // Predicated region
        $region37: #{tpu_custom_call.1} parent=11 // pred_check
          %p395 = pneg %p201
        $region38: #{tpu_custom_call.1} parent=11 // pred_check_branch
          %397 = sbr.rel (%p395) target = $region40
        $region39: #{tpu_custom_call.1} parent=11 // pred_region
          %s399 = ssub.s32 2048, 2048
          %400 = vsyncadd [#allocation9], %s399
          %s401 = sshll.u32 [#allocation10], 4
          %s402 = int_to_ptr.vmem [resolvable:$true] %s401
          %407 = dma.hbm_to_vmem [thread:$0]  %s7, 2048, %s402, [#allocation9], 128, 128, 8
        $region40: #{tpu_custom_call.1} parent=11 // pred_fallthru
          _
        // Predicated region
        $region41: #{tpu_custom_call.1} parent=11 // pred_check
          %p408 = pneg %p222
        $region42: #{tpu_custom_call.1} parent=11 // pred_check_branch
          %410 = sbr.rel (%p408) target = $region44
        $region43: #{tpu_custom_call.1} parent=11 // pred_region
          _
        $region44: #{tpu_custom_call.1} parent=11 // pred_fallthru
          _
        // Predicated region
        $region45: #{tpu_custom_call.1} parent=11 // pred_check
          %p411 = pneg %p243
        $region46: #{tpu_custom_call.1} parent=11 // pred_check_branch
          %413 = sbr.rel (%p411) target = $region48
        $region47: #{tpu_custom_call.1} parent=11 // pred_region
          %s415 = ssub.s32 2048, 2048
          %416 = vsyncadd [#allocation12], %s415
          %s417 = sshll.u32 [#allocation11], 4
          %s418 = int_to_ptr.vmem [resolvable:$true] %s417
          %423 = dma.hbm_to_vmem [thread:$0]  %s9, 2048, %s418, [#allocation12], 128, 128, 8
        $region48: #{tpu_custom_call.1} parent=11 // pred_fallthru
          _
        // Predicated region
        $region49: #{tpu_custom_call.1} parent=11 // pred_check
          %p424 = pneg %p264
        $region50: #{tpu_custom_call.1} parent=11 // pred_check_branch
          %426 = sbr.rel (%p424) target = $region52
        $region51: #{tpu_custom_call.1} parent=11 // pred_region
          _
        $region52: #{tpu_custom_call.1} parent=11 // pred_fallthru
          _
        // Predicated region
        $region53: #{tpu_custom_call.1} parent=11 // pred_check
          %p427 = pneg %p285
        $region54: #{tpu_custom_call.1} parent=11 // pred_check_branch
          %429 = sbr.rel (%p427) target = $region56
        $region55: #{tpu_custom_call.1} parent=11 // pred_region
          %s431 = ssub.s32 2048, 2048
          %432 = vsyncadd [#allocation12], %s431
          %s433 = sshll.u32 [#allocation13], 4
          %s434 = int_to_ptr.vmem [resolvable:$true] %s433
          %439 = dma.hbm_to_vmem [thread:$0]  %s11, 2048, %s434, [#allocation12], 128, 128, 8
        $region56: #{tpu_custom_call.1} parent=11 // pred_fallthru
          _
        // Predicated region
        $region57: #{tpu_custom_call.1} parent=11 // pred_check
          %p440 = pneg %p306
        $region58: #{tpu_custom_call.1} parent=11 // pred_check_branch
          %442 = sbr.rel (%p440) target = $region60
        $region59: #{tpu_custom_call.1} parent=11 // pred_region
          _
        $region60: #{tpu_custom_call.1} parent=11 // pred_fallthru
          _
      $region12: #{tpu_custom_call.1} parent=5 // pred_fallthru
        _
      %p443 = scmp.lt.s32.totalorder %s28, 2
      // Predicated region
      $region61: #{tpu_custom_call.1} parent=5 // pred_check
        %p444 = pneg %p443
      $region62: #{tpu_custom_call.1} parent=5 // pred_check_branch
        %446 = sbr.rel (%p444) target = $region64
      $region63: #{tpu_custom_call.1} parent=5 // pred_region
        // Predicated region
        $region65: #{tpu_custom_call.1} parent=63 // pred_check
          %p447 = pneg %p48
        $region66: #{tpu_custom_call.1} parent=63 // pred_check_branch
          %449 = sbr.rel (%p447) target = $region68
        $region67: #{tpu_custom_call.1} parent=63 // pred_region
          %s450 = sand.u32 %s38, 1
          %s451 = scalar_lea.sflag [#allocation3], %s450
          %s452 = sand.u32 %s38, 1
          %s453 = smul.addr %s452, 104
          %s454 = scalar_lea.vmem [#allocation2], %s453
          %s455 = smul.u32 13, %s28
          %s457 = ssub.s32 1664, 1664
          %458 = vsyncadd %s451, %s457
          %s459 = smul.addr %s455, 128
          %s460 = scalar_lea.hbm %s0, %s459
          %s461 = sshll.u32 %s454, 4
          %s462 = int_to_ptr.vmem [resolvable:$true] %s461
          %467 = dma.hbm_to_vmem [thread:$0]  %s460, 1664, %s462, %s451, 128, 128, 8
        $region68: #{tpu_custom_call.1} parent=63 // pred_fallthru
          _
      $region64: #{tpu_custom_call.1} parent=5 // pred_fallthru
        _
      %p468 = scmp.le.s32.totalorder 1, %s28
      %p469 = scmp.lt.s32.totalorder %s28, 3
      %p470 = pnand %p468, %p469
      %p471 = pneg %p470
      // Predicated region
      $region69: #{tpu_custom_call.1} parent=5 // pred_check
        _
      $region70: #{tpu_custom_call.1} parent=5 // pred_check_branch
        %473 = sbr.rel (%p470) target = $region72
      $region71: #{tpu_custom_call.1} parent=5 // pred_region
        %s474 = ssub.s32 %s28, 1
        %s475 = sand.u32 %s41, 1
        %s476 = scalar_lea.sflag [#allocation3], %s475
        %s477 = sand.u32 %s41, 1
        %s478 = smul.addr %s477, 104
        %s479 = scalar_lea.vmem [#allocation2], %s478
        // Predicated region
        $region73: #{tpu_custom_call.1} parent=71 // pred_check
          %p480 = pneg %p54
        $region74: #{tpu_custom_call.1} parent=71 // pred_check_branch
          %482 = sbr.rel (%p480) target = $region76
        $region75: #{tpu_custom_call.1} parent=71 // pred_region
          %483 = dma.done %s476, 1664
        $region76: #{tpu_custom_call.1} parent=71 // pred_fallthru
          _
        // Predicated region
        $region77: #{tpu_custom_call.1} parent=71 // pred_check
          %p484 = pneg %p75
        $region78: #{tpu_custom_call.1} parent=71 // pred_check_branch
          %486 = sbr.rel (%p484) target = $region80
        $region79: #{tpu_custom_call.1} parent=71 // pred_region
          %487 = dma.done [#allocation6], 2048
        $region80: #{tpu_custom_call.1} parent=71 // pred_fallthru
          _
        // Predicated region
        $region81: #{tpu_custom_call.1} parent=71 // pred_check
          %p488 = pneg %p117
        $region82: #{tpu_custom_call.1} parent=71 // pred_check_branch
          %490 = sbr.rel (%p488) target = $region84
        $region83: #{tpu_custom_call.1} parent=71 // pred_region
          %491 = dma.done [#allocation6], 2048
        $region84: #{tpu_custom_call.1} parent=71 // pred_fallthru
          _
        // Predicated region
        $region85: #{tpu_custom_call.1} parent=71 // pred_check
          %p492 = pneg %p159
        $region86: #{tpu_custom_call.1} parent=71 // pred_check_branch
          %494 = sbr.rel (%p492) target = $region88
        $region87: #{tpu_custom_call.1} parent=71 // pred_region
          %495 = dma.done [#allocation9], 2048
        $region88: #{tpu_custom_call.1} parent=71 // pred_fallthru
          _
        // Predicated region
        $region89: #{tpu_custom_call.1} parent=71 // pred_check
          %p496 = pneg %p201
        $region90: #{tpu_custom_call.1} parent=71 // pred_check_branch
          %498 = sbr.rel (%p496) target = $region92
        $region91: #{tpu_custom_call.1} parent=71 // pred_region
          %499 = dma.done [#allocation9], 2048
        $region92: #{tpu_custom_call.1} parent=71 // pred_fallthru
          _
        // Predicated region
        $region93: #{tpu_custom_call.1} parent=71 // pred_check
          %p500 = pneg %p243
        $region94: #{tpu_custom_call.1} parent=71 // pred_check_branch
          %502 = sbr.rel (%p500) target = $region96
        $region95: #{tpu_custom_call.1} parent=71 // pred_region
          %503 = dma.done [#allocation12], 2048
        $region96: #{tpu_custom_call.1} parent=71 // pred_fallthru
          _
        // Predicated region
        $region97: #{tpu_custom_call.1} parent=71 // pred_check
          %p504 = pneg %p285
        $region98: #{tpu_custom_call.1} parent=71 // pred_check_branch
          %506 = sbr.rel (%p504) target = $region100
        $region99: #{tpu_custom_call.1} parent=71 // pred_region
          %507 = dma.done [#allocation12], 2048
        $region100: #{tpu_custom_call.1} parent=71 // pred_fallthru
          _
        %s508 = sand.u32 %s41, 1
        %s509 = scalar_lea.sflag [#allocation3], %s508
        %s510 = sand.u32 %s41, 1
        %s511 = smul.addr %s510, 104
        %s512 = scalar_lea.vmem [#allocation2], %s511
        %p513 = pneg %p54
        %p514 = pneg %p51
        %p515 = pneg %p75
        %p516 = pneg %p72
        %p517 = pneg %p96
        %p518 = pneg %p93
        %p519 = pneg %p117
        %p520 = pneg %p114
        %p521 = pneg %p138
        %p522 = pneg %p135
        %p523 = pneg %p159
        %p524 = pneg %p156
        %p525 = pneg %p180
        %p526 = pneg %p177
        %p527 = pneg %p201
        %p528 = pneg %p198
        %p529 = pneg %p222
        %p530 = pneg %p219
        %p531 = pneg %p243
        %p532 = pneg %p240
        %p533 = pneg %p264
        %p534 = pneg %p261
        %p535 = pneg %p285
        %p536 = pneg %p282
        %p537 = pneg %p306
        %p538 = pneg %p303
        %p539 = pneg %p332
        %p540 = pneg %p329
        %s541 = sand.u32 %s319, 1
        %s542 = scalar_lea.sflag [#allocation4], %s541
        %s543 = sand.u32 %s319, 1
        %s544 = smul.addr %s543, 104
        %s545 = scalar_lea.vmem [#allocation14], %s544
        %s546 = smul.u32 13, %s33
        %s547 = smul.u32 13, %s33
        %v548 = vld [vmem:[%s479] sm:$0xff]
        %v549 = vld [vmem:[%s479 + $0x8] sm:$0xff]
        %v550 = vld [vmem:[%s479 + $0x10] sm:$0xff]
        %v551 = vld [vmem:[%s479 + $0x18] sm:$0xff]
        %v552 = vld [vmem:[%s479 + $0x20] sm:$0xff]
        %v553 = vld [vmem:[%s479 + $0x28] sm:$0xff]
        %v554 = vld [vmem:[%s479 + $0x30] sm:$0xff]
        %v555 = vld [vmem:[%s479 + $0x38] sm:$0xff]
        %v556 = vld [vmem:[%s479 + $0x40] sm:$0xff]
        %v557 = vld [vmem:[%s479 + $0x48] sm:$0xff]
        %v558 = vld [vmem:[%s479 + $0x50] sm:$0xff]
        %v559 = vld [vmem:[%s479 + $0x58] sm:$0xff]
        %v560 = vld [vmem:[%s479 + $0x60] sm:$0xff]
        %v561 = vld [vmem:[#allocation5] sm:$0xff]
        %v562 = vld [vmem:[#allocation5 + $0x8] sm:$0xff]
        %v563 = vld [vmem:[#allocation5 + $0x10] sm:$0xff]
        %v564 = vld [vmem:[#allocation5 + $0x18] sm:$0xff]
        %v565 = vld [vmem:[#allocation5 + $0x20] sm:$0xff]
        %v566 = vld [vmem:[#allocation5 + $0x28] sm:$0xff]
        %v567 = vld [vmem:[#allocation5 + $0x30] sm:$0xff]
        %v568 = vld [vmem:[#allocation5 + $0x38] sm:$0xff]
        %v569 = vld [vmem:[#allocation5 + $0x40] sm:$0xff]
        %v570 = vld [vmem:[#allocation5 + $0x48] sm:$0xff]
        %v571 = vld [vmem:[#allocation5 + $0x50] sm:$0xff]
        %v572 = vld [vmem:[#allocation5 + $0x58] sm:$0xff]
        %v573 = vld [vmem:[#allocation5 + $0x60] sm:$0xff]
        %v574 = vld [vmem:[#allocation5 + $0x68] sm:$0xff]
        %v575 = vld [vmem:[#allocation5 + $0x70] sm:$0xff]
        %v576 = vld [vmem:[#allocation5 + $0x78] sm:$0xff]
        %v577 = vld [vmem:[%s2] sm:$0x1]
        %v579 = vlaneseq
        %v580 = vshrl.u32 %v579, 7
        %v581 = vsub.s32 0, %v580
        %v582 = vrot.slane %v577, %v581
        %584 = vmatprep.subr.mxu0 0.0
        %585 = vmatpush1.msra.mxu0 %v576
        %586 = vmatprep.subr.mxu0 0.0
        %587 = vmatpush1.msra.mxu0 %v575
        %588 = vmatprep.subr.mxu0 0.0
        %589 = vmatpush1.msra.mxu0 %v574
        %590 = vmatprep.subr.mxu0 0.0
        %591 = vmatpush1.msra.mxu0 %v573
        %592 = vmatprep.subr.mxu0 0.0
        %593 = vmatpush1.msra.mxu0 %v572
        %594 = vmatprep.subr.mxu0 0.0
        %595 = vmatpush1.msra.mxu0 %v571
        %596 = vmatprep.subr.mxu0 0.0
        %597 = vmatpush1.msra.mxu0 %v570
        %598 = vmatprep.subr.mxu0 0.0
        %599 = vmatpush1.msra.mxu0 %v569
        %600 = vmatprep.subr.mxu0 0.0
        %601 = vmatpush1.msra.mxu0 %v568
        %602 = vmatprep.subr.mxu0 0.0
        %603 = vmatpush1.msra.mxu0 %v567
        %604 = vmatprep.subr.mxu0 0.0
        %605 = vmatpush1.msra.mxu0 %v566
        %606 = vmatprep.subr.mxu0 0.0
        %607 = vmatpush1.msra.mxu0 %v565
        %608 = vmatprep.subr.mxu0 0.0
        %609 = vmatpush1.msra.mxu0 %v564
        %610 = vmatprep.subr.mxu0 0.0
        %611 = vmatpush1.msra.mxu0 %v563
        %612 = vmatprep.subr.mxu0 0.0
        %613 = vmatpush1.msra.mxu0 %v562
        %614 = vmatprep.subr.mxu0 0.0
        %615 = vmatpush1.msra.mxu0 %v561
        %616 = vmatprep.subr.mxu0 0.0
        %617 = vmatpush2.msra.mxu0 0.0
        %618 = vmatprep.subr.mxu0 0.0
        %619 = vmatpush2.msra.mxu0 0.0
        %620 = vmatprep.subr.mxu0 0.0
        %621 = vmatpush2.msra.mxu0 0.0
        %622 = vmatprep.subr.mxu0 0.0
        %623 = vmatpush2.msra.mxu0 0.0
        %624 = vmatprep.subr.mxu0 0.0
        %625 = vmatpush2.msra.mxu0 0.0
        %626 = vmatprep.subr.mxu0 0.0
        %627 = vmatpush2.msra.mxu0 0.0
        %628 = vmatprep.subr.mxu0 0.0
        %629 = vmatpush2.msra.mxu0 0.0
        %630 = vmatprep.subr.mxu0 0.0
        %631 = vmatpush2.msra.mxu0 0.0
        %632 = vmatprep.subr.mxu0 0.0
        %633 = vmatpush2.msra.mxu0 0.0
        %634 = vmatprep.subr.mxu0 0.0
        %635 = vmatpush2.msra.mxu0 0.0
        %636 = vmatprep.subr.mxu0 0.0
        %637 = vmatpush2.msra.mxu0 0.0
        %638 = vmatprep.subr.mxu0 0.0
        %639 = vmatpush2.msra.mxu0 0.0
        %640 = vmatprep.subr.mxu0 0.0
        %641 = vmatpush2.msra.mxu0 0.0
        %642 = vmatprep.subr.mxu0 0.0
        %643 = vmatpush2.msra.mxu0 0.0
        %644 = vmatprep.subr.mxu0 0.0
        %645 = vmatpush2.msra.mxu0 0.0
        %646 = vmatprep.subr.mxu0 0.0
        %647 = vmatpush2.msra.mxu0 0.0
        %648 = vmatprep.mubr.f32.mxu0 0.0
        %649 = vmatmul.mubr.f32.gmra.mxu0 %v548
        %v650 = vpop.f32.mrf.mxu0
        %v651 = vadd.f32 %v582, %v650
        %v652 = vpop.f32.mrf.mxu0
        %653 = vmatprep.mubr.f32.mxu0 0.0
        %654 = vmatmul.mubr.f32.gmra.mxu0 %v549
        %v655 = vpop.f32.mrf.mxu0
        %v656 = vadd.f32 %v582, %v655
        %v657 = vpop.f32.mrf.mxu0
        %658 = vmatprep.mubr.f32.mxu0 0.0
        %659 = vmatmul.mubr.f32.gmra.mxu0 %v550
        %v660 = vpop.f32.mrf.mxu0
        %v661 = vadd.f32 %v582, %v660
        %v662 = vpop.f32.mrf.mxu0
        %663 = vmatprep.mubr.f32.mxu0 0.0
        %664 = vmatmul.mubr.f32.gmra.mxu0 %v551
        %v665 = vpop.f32.mrf.mxu0
        %v666 = vadd.f32 %v582, %v665
        %v667 = vpop.f32.mrf.mxu0
        %668 = vmatprep.mubr.f32.mxu0 0.0
        %669 = vmatmul.mubr.f32.gmra.mxu0 %v552
        %v670 = vpop.f32.mrf.mxu0
        %v671 = vadd.f32 %v582, %v670
        %v672 = vpop.f32.mrf.mxu0
        %673 = vmatprep.mubr.f32.mxu0 0.0
        %674 = vmatmul.mubr.f32.gmra.mxu0 %v553
        %v675 = vpop.f32.mrf.mxu0
        %v676 = vadd.f32 %v582, %v675
        %v677 = vpop.f32.mrf.mxu0
        %678 = vmatprep.mubr.f32.mxu0 0.0
        %679 = vmatmul.mubr.f32.gmra.mxu0 %v554
        %v680 = vpop.f32.mrf.mxu0
        %v681 = vadd.f32 %v582, %v680
        %v682 = vpop.f32.mrf.mxu0
        %683 = vmatprep.mubr.f32.mxu0 0.0
        %684 = vmatmul.mubr.f32.gmra.mxu0 %v555
        %v685 = vpop.f32.mrf.mxu0
        %v686 = vadd.f32 %v582, %v685
        %v687 = vpop.f32.mrf.mxu0
        %688 = vmatprep.mubr.f32.mxu0 0.0
        %689 = vmatmul.mubr.f32.gmra.mxu0 %v556
        %v690 = vpop.f32.mrf.mxu0
        %v691 = vadd.f32 %v582, %v690
        %v692 = vpop.f32.mrf.mxu0
        %693 = vmatprep.mubr.f32.mxu0 0.0
        %694 = vmatmul.mubr.f32.gmra.mxu0 %v557
        %v695 = vpop.f32.mrf.mxu0
        %v696 = vadd.f32 %v582, %v695
        %v697 = vpop.f32.mrf.mxu0
        %698 = vmatprep.mubr.f32.mxu0 0.0
        %699 = vmatmul.mubr.f32.gmra.mxu0 %v558
        %v700 = vpop.f32.mrf.mxu0
        %v701 = vadd.f32 %v582, %v700
        %v702 = vpop.f32.mrf.mxu0
        %703 = vmatprep.mubr.f32.mxu0 0.0
        %704 = vmatmul.mubr.f32.gmra.mxu0 %v559
        %v705 = vpop.f32.mrf.mxu0
        %v706 = vadd.f32 %v582, %v705
        %v707 = vpop.f32.mrf.mxu0
        %708 = vmatprep.mubr.f32.mxu0 0.0
        %709 = vmatmul.mubr.f32.gmra.mxu0 %v560
        %v710 = vpop.f32.mrf.mxu0
        %v711 = vadd.f32 %v582, %v710
        %v712 = vpop.f32.mrf.mxu0
        %713 = vdwg.mxu0
        %v714 = vmax.f32 %v651, 0.0
        %v715 = vmax.f32 %v656, 0.0
        %v716 = vmax.f32 %v661, 0.0
        %v717 = vmax.f32 %v666, 0.0
        %v718 = vmax.f32 %v671, 0.0
        %v719 = vmax.f32 %v676, 0.0
        %v720 = vmax.f32 %v681, 0.0
        %v721 = vmax.f32 %v686, 0.0
        %v722 = vmax.f32 %v691, 0.0
        %v723 = vmax.f32 %v696, 0.0
        %v724 = vmax.f32 %v701, 0.0
        %v725 = vmax.f32 %v706, 0.0
        %v726 = vmax.f32 %v711, 0.0
        %v727 = vld [vmem:[#allocation7] sm:$0xff]
        %v728 = vld [vmem:[#allocation7 + $0x8] sm:$0xff]
        %v729 = vld [vmem:[#allocation7 + $0x10] sm:$0xff]
        %v730 = vld [vmem:[#allocation7 + $0x18] sm:$0xff]
        %v731 = vld [vmem:[#allocation7 + $0x20] sm:$0xff]
        %v732 = vld [vmem:[#allocation7 + $0x28] sm:$0xff]
        %v733 = vld [vmem:[#allocation7 + $0x30] sm:$0xff]
        %v734 = vld [vmem:[#allocation7 + $0x38] sm:$0xff]
        %v735 = vld [vmem:[#allocation7 + $0x40] sm:$0xff]
        %v736 = vld [vmem:[#allocation7 + $0x48] sm:$0xff]
        %v737 = vld [vmem:[#allocation7 + $0x50] sm:$0xff]
        %v738 = vld [vmem:[#allocation7 + $0x58] sm:$0xff]
        %v739 = vld [vmem:[#allocation7 + $0x60] sm:$0xff]
        %v740 = vld [vmem:[#allocation7 + $0x68] sm:$0xff]
        %v741 = vld [vmem:[#allocation7 + $0x70] sm:$0xff]
        %v742 = vld [vmem:[#allocation7 + $0x78] sm:$0xff]
        %v743 = vld [vmem:[%s4] sm:$0x1]
        %v745 = vlaneseq
        %v746 = vshrl.u32 %v745, 7
        %v747 = vsub.s32 0, %v746
        %v748 = vrot.slane %v743, %v747
        %750 = vmatprep.subr.mxu0 0.0
        %751 = vmatpush1.msra.mxu0 %v742
        %752 = vmatprep.subr.mxu0 0.0
        %753 = vmatpush1.msra.mxu0 %v741
        %754 = vmatprep.subr.mxu0 0.0
        %755 = vmatpush1.msra.mxu0 %v740
        %756 = vmatprep.subr.mxu0 0.0
        %757 = vmatpush1.msra.mxu0 %v739
        %758 = vmatprep.subr.mxu0 0.0
        %759 = vmatpush1.msra.mxu0 %v738
        %760 = vmatprep.subr.mxu0 0.0
        %761 = vmatpush1.msra.mxu0 %v737
        %762 = vmatprep.subr.mxu0 0.0
        %763 = vmatpush1.msra.mxu0 %v736
        %764 = vmatprep.subr.mxu0 0.0
        %765 = vmatpush1.msra.mxu0 %v735
        %766 = vmatprep.subr.mxu0 0.0
        %767 = vmatpush1.msra.mxu0 %v734
        %768 = vmatprep.subr.mxu0 0.0
        %769 = vmatpush1.msra.mxu0 %v733
        %770 = vmatprep.subr.mxu0 0.0
        %771 = vmatpush1.msra.mxu0 %v732
        %772 = vmatprep.subr.mxu0 0.0
        %773 = vmatpush1.msra.mxu0 %v731
        %774 = vmatprep.subr.mxu0 0.0
        %775 = vmatpush1.msra.mxu0 %v730
        %776 = vmatprep.subr.mxu0 0.0
        %777 = vmatpush1.msra.mxu0 %v729
        %778 = vmatprep.subr.mxu0 0.0
        %779 = vmatpush1.msra.mxu0 %v728
        %780 = vmatprep.subr.mxu0 0.0
        %781 = vmatpush1.msra.mxu0 %v727
        %782 = vmatprep.subr.mxu0 0.0
        %783 = vmatpush2.msra.mxu0 0.0
        %784 = vmatprep.subr.mxu0 0.0
        %785 = vmatpush2.msra.mxu0 0.0
        %786 = vmatprep.subr.mxu0 0.0
        %787 = vmatpush2.msra.mxu0 0.0
        %788 = vmatprep.subr.mxu0 0.0
        %789 = vmatpush2.msra.mxu0 0.0
        %790 = vmatprep.subr.mxu0 0.0
        %791 = vmatpush2.msra.mxu0 0.0
        %792 = vmatprep.subr.mxu0 0.0
        %793 = vmatpush2.msra.mxu0 0.0
        %794 = vmatprep.subr.mxu0 0.0
        %795 = vmatpush2.msra.mxu0 0.0
        %796 = vmatprep.subr.mxu0 0.0
        %797 = vmatpush2.msra.mxu0 0.0
        %798 = vmatprep.subr.mxu0 0.0
        %799 = vmatpush2.msra.mxu0 0.0
        %800 = vmatprep.subr.mxu0 0.0
        %801 = vmatpush2.msra.mxu0 0.0
        %802 = vmatprep.subr.mxu0 0.0
        %803 = vmatpush2.msra.mxu0 0.0
        %804 = vmatprep.subr.mxu0 0.0
        %805 = vmatpush2.msra.mxu0 0.0
        %806 = vmatprep.subr.mxu0 0.0
        %807 = vmatpush2.msra.mxu0 0.0
        %808 = vmatprep.subr.mxu0 0.0
        %809 = vmatpush2.msra.mxu0 0.0
        %810 = vmatprep.subr.mxu0 0.0
        %811 = vmatpush2.msra.mxu0 0.0
        %812 = vmatprep.subr.mxu0 0.0
        %813 = vmatpush2.msra.mxu0 0.0
        %814 = vmatprep.mubr.f32.mxu0 0.0
        %815 = vmatmul.mubr.f32.gmra.mxu0 %v714
        %v816 = vpop.f32.mrf.mxu0
        %v817 = vadd.f32 %v748, %v816
        %v818 = vpop.f32.mrf.mxu0
        %819 = vmatprep.mubr.f32.mxu0 0.0
        %820 = vmatmul.mubr.f32.gmra.mxu0 %v715
        %v821 = vpop.f32.mrf.mxu0
        %v822 = vadd.f32 %v748, %v821
        %v823 = vpop.f32.mrf.mxu0
        %824 = vmatprep.mubr.f32.mxu0 0.0
        %825 = vmatmul.mubr.f32.gmra.mxu0 %v716
        %v826 = vpop.f32.mrf.mxu0
        %v827 = vadd.f32 %v748, %v826
        %v828 = vpop.f32.mrf.mxu0
        %829 = vmatprep.mubr.f32.mxu0 0.0
        %830 = vmatmul.mubr.f32.gmra.mxu0 %v717
        %v831 = vpop.f32.mrf.mxu0
        %v832 = vadd.f32 %v748, %v831
        %v833 = vpop.f32.mrf.mxu0
        %834 = vmatprep.mubr.f32.mxu0 0.0
        %835 = vmatmul.mubr.f32.gmra.mxu0 %v718
        %v836 = vpop.f32.mrf.mxu0
        %v837 = vadd.f32 %v748, %v836
        %v838 = vpop.f32.mrf.mxu0
        %839 = vmatprep.mubr.f32.mxu0 0.0
        %840 = vmatmul.mubr.f32.gmra.mxu0 %v719
        %v841 = vpop.f32.mrf.mxu0
        %v842 = vadd.f32 %v748, %v841
        %v843 = vpop.f32.mrf.mxu0
        %844 = vmatprep.mubr.f32.mxu0 0.0
        %845 = vmatmul.mubr.f32.gmra.mxu0 %v720
        %v846 = vpop.f32.mrf.mxu0
        %v847 = vadd.f32 %v748, %v846
        %v848 = vpop.f32.mrf.mxu0
        %849 = vmatprep.mubr.f32.mxu0 0.0
        %850 = vmatmul.mubr.f32.gmra.mxu0 %v721
        %v851 = vpop.f32.mrf.mxu0
        %v852 = vadd.f32 %v748, %v851
        %v853 = vpop.f32.mrf.mxu0
        %854 = vmatprep.mubr.f32.mxu0 0.0
        %855 = vmatmul.mubr.f32.gmra.mxu0 %v722
        %v856 = vpop.f32.mrf.mxu0
        %v857 = vadd.f32 %v748, %v856
        %v858 = vpop.f32.mrf.mxu0
        %859 = vmatprep.mubr.f32.mxu0 0.0
        %860 = vmatmul.mubr.f32.gmra.mxu0 %v723
        %v861 = vpop.f32.mrf.mxu0
        %v862 = vadd.f32 %v748, %v861
        %v863 = vpop.f32.mrf.mxu0
        %864 = vmatprep.mubr.f32.mxu0 0.0
        %865 = vmatmul.mubr.f32.gmra.mxu0 %v724
        %v866 = vpop.f32.mrf.mxu0
        %v867 = vadd.f32 %v748, %v866
        %v868 = vpop.f32.mrf.mxu0
        %869 = vmatprep.mubr.f32.mxu0 0.0
        %870 = vmatmul.mubr.f32.gmra.mxu0 %v725
        %v871 = vpop.f32.mrf.mxu0
        %v872 = vadd.f32 %v748, %v871
        %v873 = vpop.f32.mrf.mxu0
        %874 = vmatprep.mubr.f32.mxu0 0.0
        %875 = vmatmul.mubr.f32.gmra.mxu0 %v726
        %v876 = vpop.f32.mrf.mxu0
        %v877 = vadd.f32 %v748, %v876
        %v878 = vpop.f32.mrf.mxu0
        %879 = vdwg.mxu0
        %v880 = vmax.f32 %v817, 0.0
        %v881 = vmax.f32 %v822, 0.0
        %v882 = vmax.f32 %v827, 0.0
        %v883 = vmax.f32 %v832, 0.0
        %v884 = vmax.f32 %v837, 0.0
        %v885 = vmax.f32 %v842, 0.0
        %v886 = vmax.f32 %v847, 0.0
        %v887 = vmax.f32 %v852, 0.0
        %v888 = vmax.f32 %v857, 0.0
        %v889 = vmax.f32 %v862, 0.0
        %v890 = vmax.f32 %v867, 0.0
        %v891 = vmax.f32 %v872, 0.0
        %v892 = vmax.f32 %v877, 0.0
        %v893 = vld [vmem:[#allocation8] sm:$0xff]
        %v894 = vld [vmem:[#allocation8 + $0x8] sm:$0xff]
        %v895 = vld [vmem:[#allocation8 + $0x10] sm:$0xff]
        %v896 = vld [vmem:[#allocation8 + $0x18] sm:$0xff]
        %v897 = vld [vmem:[#allocation8 + $0x20] sm:$0xff]
        %v898 = vld [vmem:[#allocation8 + $0x28] sm:$0xff]
        %v899 = vld [vmem:[#allocation8 + $0x30] sm:$0xff]
        %v900 = vld [vmem:[#allocation8 + $0x38] sm:$0xff]
        %v901 = vld [vmem:[#allocation8 + $0x40] sm:$0xff]
        %v902 = vld [vmem:[#allocation8 + $0x48] sm:$0xff]
        %v903 = vld [vmem:[#allocation8 + $0x50] sm:$0xff]
        %v904 = vld [vmem:[#allocation8 + $0x58] sm:$0xff]
        %v905 = vld [vmem:[#allocation8 + $0x60] sm:$0xff]
        %v906 = vld [vmem:[#allocation8 + $0x68] sm:$0xff]
        %v907 = vld [vmem:[#allocation8 + $0x70] sm:$0xff]
        %v908 = vld [vmem:[#allocation8 + $0x78] sm:$0xff]
        %v909 = vld [vmem:[%s6] sm:$0x1]
        %v911 = vlaneseq
        %v912 = vshrl.u32 %v911, 7
        %v913 = vsub.s32 0, %v912
        %v914 = vrot.slane %v909, %v913
        %916 = vmatprep.subr.mxu0 0.0
        %917 = vmatpush1.msra.mxu0 %v908
        %918 = vmatprep.subr.mxu0 0.0
        %919 = vmatpush1.msra.mxu0 %v907
        %920 = vmatprep.subr.mxu0 0.0
        %921 = vmatpush1.msra.mxu0 %v906
        %922 = vmatprep.subr.mxu0 0.0
        %923 = vmatpush1.msra.mxu0 %v905
        %924 = vmatprep.subr.mxu0 0.0
        %925 = vmatpush1.msra.mxu0 %v904
        %926 = vmatprep.subr.mxu0 0.0
        %927 = vmatpush1.msra.mxu0 %v903
        %928 = vmatprep.subr.mxu0 0.0
        %929 = vmatpush1.msra.mxu0 %v902
        %930 = vmatprep.subr.mxu0 0.0
        %931 = vmatpush1.msra.mxu0 %v901
        %932 = vmatprep.subr.mxu0 0.0
        %933 = vmatpush1.msra.mxu0 %v900
        %934 = vmatprep.subr.mxu0 0.0
        %935 = vmatpush1.msra.mxu0 %v899
        %936 = vmatprep.subr.mxu0 0.0
        %937 = vmatpush1.msra.mxu0 %v898
        %938 = vmatprep.subr.mxu0 0.0
        %939 = vmatpush1.msra.mxu0 %v897
        %940 = vmatprep.subr.mxu0 0.0
        %941 = vmatpush1.msra.mxu0 %v896
        %942 = vmatprep.subr.mxu0 0.0
        %943 = vmatpush1.msra.mxu0 %v895
        %944 = vmatprep.subr.mxu0 0.0
        %945 = vmatpush1.msra.mxu0 %v894
        %946 = vmatprep.subr.mxu0 0.0
        %947 = vmatpush1.msra.mxu0 %v893
        %948 = vmatprep.subr.mxu0 0.0
        %949 = vmatpush2.msra.mxu0 0.0
        %950 = vmatprep.subr.mxu0 0.0
        %951 = vmatpush2.msra.mxu0 0.0
        %952 = vmatprep.subr.mxu0 0.0
        %953 = vmatpush2.msra.mxu0 0.0
        %954 = vmatprep.subr.mxu0 0.0
        %955 = vmatpush2.msra.mxu0 0.0
        %956 = vmatprep.subr.mxu0 0.0
        %957 = vmatpush2.msra.mxu0 0.0
        %958 = vmatprep.subr.mxu0 0.0
        %959 = vmatpush2.msra.mxu0 0.0
        %960 = vmatprep.subr.mxu0 0.0
        %961 = vmatpush2.msra.mxu0 0.0
        %962 = vmatprep.subr.mxu0 0.0
        %963 = vmatpush2.msra.mxu0 0.0
        %964 = vmatprep.subr.mxu0 0.0
        %965 = vmatpush2.msra.mxu0 0.0
        %966 = vmatprep.subr.mxu0 0.0
        %967 = vmatpush2.msra.mxu0 0.0
        %968 = vmatprep.subr.mxu0 0.0
        %969 = vmatpush2.msra.mxu0 0.0
        %970 = vmatprep.subr.mxu0 0.0
        %971 = vmatpush2.msra.mxu0 0.0
        %972 = vmatprep.subr.mxu0 0.0
        %973 = vmatpush2.msra.mxu0 0.0
        %974 = vmatprep.subr.mxu0 0.0
        %975 = vmatpush2.msra.mxu0 0.0
        %976 = vmatprep.subr.mxu0 0.0
        %977 = vmatpush2.msra.mxu0 0.0
        %978 = vmatprep.subr.mxu0 0.0
        %979 = vmatpush2.msra.mxu0 0.0
        %980 = vmatprep.mubr.f32.mxu0 0.0
        %981 = vmatmul.mubr.f32.gmra.mxu0 %v880
        %v982 = vpop.f32.mrf.mxu0
        %v983 = vadd.f32 %v914, %v982
        %v984 = vpop.f32.mrf.mxu0
        %985 = vmatprep.mubr.f32.mxu0 0.0
        %986 = vmatmul.mubr.f32.gmra.mxu0 %v881
        %v987 = vpop.f32.mrf.mxu0
        %v988 = vadd.f32 %v914, %v987
        %v989 = vpop.f32.mrf.mxu0
        %990 = vmatprep.mubr.f32.mxu0 0.0
        %991 = vmatmul.mubr.f32.gmra.mxu0 %v882
        %v992 = vpop.f32.mrf.mxu0
        %v993 = vadd.f32 %v914, %v992
        %v994 = vpop.f32.mrf.mxu0
        %995 = vmatprep.mubr.f32.mxu0 0.0
        %996 = vmatmul.mubr.f32.gmra.mxu0 %v883
        %v997 = vpop.f32.mrf.mxu0
        %v998 = vadd.f32 %v914, %v997
        %v999 = vpop.f32.mrf.mxu0
        %1000 = vmatprep.mubr.f32.mxu0 0.0
        %1001 = vmatmul.mubr.f32.gmra.mxu0 %v884
        %v1002 = vpop.f32.mrf.mxu0
        %v1003 = vadd.f32 %v914, %v1002
        %v1004 = vpop.f32.mrf.mxu0
        %1005 = vmatprep.mubr.f32.mxu0 0.0
        %1006 = vmatmul.mubr.f32.gmra.mxu0 %v885
        %v1007 = vpop.f32.mrf.mxu0
        %v1008 = vadd.f32 %v914, %v1007
        %v1009 = vpop.f32.mrf.mxu0
        %1010 = vmatprep.mubr.f32.mxu0 0.0
        %1011 = vmatmul.mubr.f32.gmra.mxu0 %v886
        %v1012 = vpop.f32.mrf.mxu0
        %v1013 = vadd.f32 %v914, %v1012
        %v1014 = vpop.f32.mrf.mxu0
        %1015 = vmatprep.mubr.f32.mxu0 0.0
        %1016 = vmatmul.mubr.f32.gmra.mxu0 %v887
        %v1017 = vpop.f32.mrf.mxu0
        %v1018 = vadd.f32 %v914, %v1017
        %v1019 = vpop.f32.mrf.mxu0
        %1020 = vmatprep.mubr.f32.mxu0 0.0
        %1021 = vmatmul.mubr.f32.gmra.mxu0 %v888
        %v1022 = vpop.f32.mrf.mxu0
        %v1023 = vadd.f32 %v914, %v1022
        %v1024 = vpop.f32.mrf.mxu0
        %1025 = vmatprep.mubr.f32.mxu0 0.0
        %1026 = vmatmul.mubr.f32.gmra.mxu0 %v889
        %v1027 = vpop.f32.mrf.mxu0
        %v1028 = vadd.f32 %v914, %v1027
        %v1029 = vpop.f32.mrf.mxu0
        %1030 = vmatprep.mubr.f32.mxu0 0.0
        %1031 = vmatmul.mubr.f32.gmra.mxu0 %v890
        %v1032 = vpop.f32.mrf.mxu0
        %v1033 = vadd.f32 %v914, %v1032
        %v1034 = vpop.f32.mrf.mxu0
        %1035 = vmatprep.mubr.f32.mxu0 0.0
        %1036 = vmatmul.mubr.f32.gmra.mxu0 %v891
        %v1037 = vpop.f32.mrf.mxu0
        %v1038 = vadd.f32 %v914, %v1037
        %v1039 = vpop.f32.mrf.mxu0
        %1040 = vmatprep.mubr.f32.mxu0 0.0
        %1041 = vmatmul.mubr.f32.gmra.mxu0 %v892
        %v1042 = vpop.f32.mrf.mxu0
        %v1043 = vadd.f32 %v914, %v1042
        %v1044 = vpop.f32.mrf.mxu0
        %1045 = vdwg.mxu0
        %v1046 = vmax.f32 %v983, 0.0
        %v1047 = vmax.f32 %v988, 0.0
        %v1048 = vmax.f32 %v993, 0.0
        %v1049 = vmax.f32 %v998, 0.0
        %v1050 = vmax.f32 %v1003, 0.0
        %v1051 = vmax.f32 %v1008, 0.0
        %v1052 = vmax.f32 %v1013, 0.0
        %v1053 = vmax.f32 %v1018, 0.0
        %v1054 = vmax.f32 %v1023, 0.0
        %v1055 = vmax.f32 %v1028, 0.0
        %v1056 = vmax.f32 %v1033, 0.0
        %v1057 = vmax.f32 %v1038, 0.0
        %v1058 = vmax.f32 %v1043, 0.0
        %v1059 = vld [vmem:[#allocation10] sm:$0xff]
        %v1060 = vld [vmem:[#allocation10 + $0x8] sm:$0xff]
        %v1061 = vld [vmem:[#allocation10 + $0x10] sm:$0xff]
        %v1062 = vld [vmem:[#allocation10 + $0x18] sm:$0xff]
        %v1063 = vld [vmem:[#allocation10 + $0x20] sm:$0xff]
        %v1064 = vld [vmem:[#allocation10 + $0x28] sm:$0xff]
        %v1065 = vld [vmem:[#allocation10 + $0x30] sm:$0xff]
        %v1066 = vld [vmem:[#allocation10 + $0x38] sm:$0xff]
        %v1067 = vld [vmem:[#allocation10 + $0x40] sm:$0xff]
        %v1068 = vld [vmem:[#allocation10 + $0x48] sm:$0xff]
        %v1069 = vld [vmem:[#allocation10 + $0x50] sm:$0xff]
        %v1070 = vld [vmem:[#allocation10 + $0x58] sm:$0xff]
        %v1071 = vld [vmem:[#allocation10 + $0x60] sm:$0xff]
        %v1072 = vld [vmem:[#allocation10 + $0x68] sm:$0xff]
        %v1073 = vld [vmem:[#allocation10 + $0x70] sm:$0xff]
        %v1074 = vld [vmem:[#allocation10 + $0x78] sm:$0xff]
        %v1075 = vld [vmem:[%s8] sm:$0x1]
        %v1077 = vlaneseq
        %v1078 = vshrl.u32 %v1077, 7
        %v1079 = vsub.s32 0, %v1078
        %v1080 = vrot.slane %v1075, %v1079
        %1082 = vmatprep.subr.mxu0 0.0
        %1083 = vmatpush1.msra.mxu0 %v1074
        %1084 = vmatprep.subr.mxu0 0.0
        %1085 = vmatpush1.msra.mxu0 %v1073
        %1086 = vmatprep.subr.mxu0 0.0
        %1087 = vmatpush1.msra.mxu0 %v1072
        %1088 = vmatprep.subr.mxu0 0.0
        %1089 = vmatpush1.msra.mxu0 %v1071
        %1090 = vmatprep.subr.mxu0 0.0
        %1091 = vmatpush1.msra.mxu0 %v1070
        %1092 = vmatprep.subr.mxu0 0.0
        %1093 = vmatpush1.msra.mxu0 %v1069
        %1094 = vmatprep.subr.mxu0 0.0
        %1095 = vmatpush1.msra.mxu0 %v1068
        %1096 = vmatprep.subr.mxu0 0.0
        %1097 = vmatpush1.msra.mxu0 %v1067
        %1098 = vmatprep.subr.mxu0 0.0
        %1099 = vmatpush1.msra.mxu0 %v1066
        %1100 = vmatprep.subr.mxu0 0.0
        %1101 = vmatpush1.msra.mxu0 %v1065
        %1102 = vmatprep.subr.mxu0 0.0
        %1103 = vmatpush1.msra.mxu0 %v1064
        %1104 = vmatprep.subr.mxu0 0.0
        %1105 = vmatpush1.msra.mxu0 %v1063
        %1106 = vmatprep.subr.mxu0 0.0
        %1107 = vmatpush1.msra.mxu0 %v1062
        %1108 = vmatprep.subr.mxu0 0.0
        %1109 = vmatpush1.msra.mxu0 %v1061
        %1110 = vmatprep.subr.mxu0 0.0
        %1111 = vmatpush1.msra.mxu0 %v1060
        %1112 = vmatprep.subr.mxu0 0.0
        %1113 = vmatpush1.msra.mxu0 %v1059
        %1114 = vmatprep.subr.mxu0 0.0
        %1115 = vmatpush2.msra.mxu0 0.0
        %1116 = vmatprep.subr.mxu0 0.0
        %1117 = vmatpush2.msra.mxu0 0.0
        %1118 = vmatprep.subr.mxu0 0.0
        %1119 = vmatpush2.msra.mxu0 0.0
        %1120 = vmatprep.subr.mxu0 0.0
        %1121 = vmatpush2.msra.mxu0 0.0
        %1122 = vmatprep.subr.mxu0 0.0
        %1123 = vmatpush2.msra.mxu0 0.0
        %1124 = vmatprep.subr.mxu0 0.0
        %1125 = vmatpush2.msra.mxu0 0.0
        %1126 = vmatprep.subr.mxu0 0.0
        %1127 = vmatpush2.msra.mxu0 0.0
        %1128 = vmatprep.subr.mxu0 0.0
        %1129 = vmatpush2.msra.mxu0 0.0
        %1130 = vmatprep.subr.mxu0 0.0
        %1131 = vmatpush2.msra.mxu0 0.0
        %1132 = vmatprep.subr.mxu0 0.0
        %1133 = vmatpush2.msra.mxu0 0.0
        %1134 = vmatprep.subr.mxu0 0.0
        %1135 = vmatpush2.msra.mxu0 0.0
        %1136 = vmatprep.subr.mxu0 0.0
        %1137 = vmatpush2.msra.mxu0 0.0
        %1138 = vmatprep.subr.mxu0 0.0
        %1139 = vmatpush2.msra.mxu0 0.0
        %1140 = vmatprep.subr.mxu0 0.0
        %1141 = vmatpush2.msra.mxu0 0.0
        %1142 = vmatprep.subr.mxu0 0.0
        %1143 = vmatpush2.msra.mxu0 0.0
        %1144 = vmatprep.subr.mxu0 0.0
        %1145 = vmatpush2.msra.mxu0 0.0
        %1146 = vmatprep.mubr.f32.mxu0 0.0
        %1147 = vmatmul.mubr.f32.gmra.mxu0 %v1046
        %v1148 = vpop.f32.mrf.mxu0
        %v1149 = vadd.f32 %v1080, %v1148
        %v1150 = vpop.f32.mrf.mxu0
        %1151 = vmatprep.mubr.f32.mxu0 0.0
        %1152 = vmatmul.mubr.f32.gmra.mxu0 %v1047
        %v1153 = vpop.f32.mrf.mxu0
        %v1154 = vadd.f32 %v1080, %v1153
        %v1155 = vpop.f32.mrf.mxu0
        %1156 = vmatprep.mubr.f32.mxu0 0.0
        %1157 = vmatmul.mubr.f32.gmra.mxu0 %v1048
        %v1158 = vpop.f32.mrf.mxu0
        %v1159 = vadd.f32 %v1080, %v1158
        %v1160 = vpop.f32.mrf.mxu0
        %1161 = vmatprep.mubr.f32.mxu0 0.0
        %1162 = vmatmul.mubr.f32.gmra.mxu0 %v1049
        %v1163 = vpop.f32.mrf.mxu0
        %v1164 = vadd.f32 %v1080, %v1163
        %v1165 = vpop.f32.mrf.mxu0
        %1166 = vmatprep.mubr.f32.mxu0 0.0
        %1167 = vmatmul.mubr.f32.gmra.mxu0 %v1050
        %v1168 = vpop.f32.mrf.mxu0
        %v1169 = vadd.f32 %v1080, %v1168
        %v1170 = vpop.f32.mrf.mxu0
        %1171 = vmatprep.mubr.f32.mxu0 0.0
        %1172 = vmatmul.mubr.f32.gmra.mxu0 %v1051
        %v1173 = vpop.f32.mrf.mxu0
        %v1174 = vadd.f32 %v1080, %v1173
        %v1175 = vpop.f32.mrf.mxu0
        %1176 = vmatprep.mubr.f32.mxu0 0.0
        %1177 = vmatmul.mubr.f32.gmra.mxu0 %v1052
        %v1178 = vpop.f32.mrf.mxu0
        %v1179 = vadd.f32 %v1080, %v1178
        %v1180 = vpop.f32.mrf.mxu0
        %1181 = vmatprep.mubr.f32.mxu0 0.0
        %1182 = vmatmul.mubr.f32.gmra.mxu0 %v1053
        %v1183 = vpop.f32.mrf.mxu0
        %v1184 = vadd.f32 %v1080, %v1183
        %v1185 = vpop.f32.mrf.mxu0
        %1186 = vmatprep.mubr.f32.mxu0 0.0
        %1187 = vmatmul.mubr.f32.gmra.mxu0 %v1054
        %v1188 = vpop.f32.mrf.mxu0
        %v1189 = vadd.f32 %v1080, %v1188
        %v1190 = vpop.f32.mrf.mxu0
        %1191 = vmatprep.mubr.f32.mxu0 0.0
        %1192 = vmatmul.mubr.f32.gmra.mxu0 %v1055
        %v1193 = vpop.f32.mrf.mxu0
        %v1194 = vadd.f32 %v1080, %v1193
        %v1195 = vpop.f32.mrf.mxu0
        %1196 = vmatprep.mubr.f32.mxu0 0.0
        %1197 = vmatmul.mubr.f32.gmra.mxu0 %v1056
        %v1198 = vpop.f32.mrf.mxu0
        %v1199 = vadd.f32 %v1080, %v1198
        %v1200 = vpop.f32.mrf.mxu0
        %1201 = vmatprep.mubr.f32.mxu0 0.0
        %1202 = vmatmul.mubr.f32.gmra.mxu0 %v1057
        %v1203 = vpop.f32.mrf.mxu0
        %v1204 = vadd.f32 %v1080, %v1203
        %v1205 = vpop.f32.mrf.mxu0
        %1206 = vmatprep.mubr.f32.mxu0 0.0
        %1207 = vmatmul.mubr.f32.gmra.mxu0 %v1058
        %v1208 = vpop.f32.mrf.mxu0
        %v1209 = vadd.f32 %v1080, %v1208
        %v1210 = vpop.f32.mrf.mxu0
        %1211 = vdwg.mxu0
        %v1212 = vmax.f32 %v1149, 0.0
        %v1213 = vmax.f32 %v1154, 0.0
        %v1214 = vmax.f32 %v1159, 0.0
        %v1215 = vmax.f32 %v1164, 0.0
        %v1216 = vmax.f32 %v1169, 0.0
        %v1217 = vmax.f32 %v1174, 0.0
        %v1218 = vmax.f32 %v1179, 0.0
        %v1219 = vmax.f32 %v1184, 0.0
        %v1220 = vmax.f32 %v1189, 0.0
        %v1221 = vmax.f32 %v1194, 0.0
        %v1222 = vmax.f32 %v1199, 0.0
        %v1223 = vmax.f32 %v1204, 0.0
        %v1224 = vmax.f32 %v1209, 0.0
        %v1225 = vld [vmem:[#allocation11] sm:$0xff]
        %v1226 = vld [vmem:[#allocation11 + $0x8] sm:$0xff]
        %v1227 = vld [vmem:[#allocation11 + $0x10] sm:$0xff]
        %v1228 = vld [vmem:[#allocation11 + $0x18] sm:$0xff]
        %v1229 = vld [vmem:[#allocation11 + $0x20] sm:$0xff]
        %v1230 = vld [vmem:[#allocation11 + $0x28] sm:$0xff]
        %v1231 = vld [vmem:[#allocation11 + $0x30] sm:$0xff]
        %v1232 = vld [vmem:[#allocation11 + $0x38] sm:$0xff]
        %v1233 = vld [vmem:[#allocation11 + $0x40] sm:$0xff]
        %v1234 = vld [vmem:[#allocation11 + $0x48] sm:$0xff]
        %v1235 = vld [vmem:[#allocation11 + $0x50] sm:$0xff]
        %v1236 = vld [vmem:[#allocation11 + $0x58] sm:$0xff]
        %v1237 = vld [vmem:[#allocation11 + $0x60] sm:$0xff]
        %v1238 = vld [vmem:[#allocation11 + $0x68] sm:$0xff]
        %v1239 = vld [vmem:[#allocation11 + $0x70] sm:$0xff]
        %v1240 = vld [vmem:[#allocation11 + $0x78] sm:$0xff]
        %v1241 = vld [vmem:[%s10] sm:$0x1]
        %v1243 = vlaneseq
        %v1244 = vshrl.u32 %v1243, 7
        %v1245 = vsub.s32 0, %v1244
        %v1246 = vrot.slane %v1241, %v1245
        %1248 = vmatprep.subr.mxu0 0.0
        %1249 = vmatpush1.msra.mxu0 %v1240
        %1250 = vmatprep.subr.mxu0 0.0
        %1251 = vmatpush1.msra.mxu0 %v1239
        %1252 = vmatprep.subr.mxu0 0.0
        %1253 = vmatpush1.msra.mxu0 %v1238
        %1254 = vmatprep.subr.mxu0 0.0
        %1255 = vmatpush1.msra.mxu0 %v1237
        %1256 = vmatprep.subr.mxu0 0.0
        %1257 = vmatpush1.msra.mxu0 %v1236
        %1258 = vmatprep.subr.mxu0 0.0
        %1259 = vmatpush1.msra.mxu0 %v1235
        %1260 = vmatprep.subr.mxu0 0.0
        %1261 = vmatpush1.msra.mxu0 %v1234
        %1262 = vmatprep.subr.mxu0 0.0
        %1263 = vmatpush1.msra.mxu0 %v1233
        %1264 = vmatprep.subr.mxu0 0.0
        %1265 = vmatpush1.msra.mxu0 %v1232
        %1266 = vmatprep.subr.mxu0 0.0
        %1267 = vmatpush1.msra.mxu0 %v1231
        %1268 = vmatprep.subr.mxu0 0.0
        %1269 = vmatpush1.msra.mxu0 %v1230
        %1270 = vmatprep.subr.mxu0 0.0
        %1271 = vmatpush1.msra.mxu0 %v1229
        %1272 = vmatprep.subr.mxu0 0.0
        %1273 = vmatpush1.msra.mxu0 %v1228
        %1274 = vmatprep.subr.mxu0 0.0
        %1275 = vmatpush1.msra.mxu0 %v1227
        %1276 = vmatprep.subr.mxu0 0.0
        %1277 = vmatpush1.msra.mxu0 %v1226
        %1278 = vmatprep.subr.mxu0 0.0
        %1279 = vmatpush1.msra.mxu0 %v1225
        %1280 = vmatprep.subr.mxu0 0.0
        %1281 = vmatpush2.msra.mxu0 0.0
        %1282 = vmatprep.subr.mxu0 0.0
        %1283 = vmatpush2.msra.mxu0 0.0
        %1284 = vmatprep.subr.mxu0 0.0
        %1285 = vmatpush2.msra.mxu0 0.0
        %1286 = vmatprep.subr.mxu0 0.0
        %1287 = vmatpush2.msra.mxu0 0.0
        %1288 = vmatprep.subr.mxu0 0.0
        %1289 = vmatpush2.msra.mxu0 0.0
        %1290 = vmatprep.subr.mxu0 0.0
        %1291 = vmatpush2.msra.mxu0 0.0
        %1292 = vmatprep.subr.mxu0 0.0
        %1293 = vmatpush2.msra.mxu0 0.0
        %1294 = vmatprep.subr.mxu0 0.0
        %1295 = vmatpush2.msra.mxu0 0.0
        %1296 = vmatprep.subr.mxu0 0.0
        %1297 = vmatpush2.msra.mxu0 0.0
        %1298 = vmatprep.subr.mxu0 0.0
        %1299 = vmatpush2.msra.mxu0 0.0
        %1300 = vmatprep.subr.mxu0 0.0
        %1301 = vmatpush2.msra.mxu0 0.0
        %1302 = vmatprep.subr.mxu0 0.0
        %1303 = vmatpush2.msra.mxu0 0.0
        %1304 = vmatprep.subr.mxu0 0.0
        %1305 = vmatpush2.msra.mxu0 0.0
        %1306 = vmatprep.subr.mxu0 0.0
        %1307 = vmatpush2.msra.mxu0 0.0
        %1308 = vmatprep.subr.mxu0 0.0
        %1309 = vmatpush2.msra.mxu0 0.0
        %1310 = vmatprep.subr.mxu0 0.0
        %1311 = vmatpush2.msra.mxu0 0.0
        %1312 = vmatprep.mubr.f32.mxu0 0.0
        %1313 = vmatmul.mubr.f32.gmra.mxu0 %v1212
        %v1314 = vpop.f32.mrf.mxu0
        %v1315 = vadd.f32 %v1246, %v1314
        %v1316 = vpop.f32.mrf.mxu0
        %1317 = vmatprep.mubr.f32.mxu0 0.0
        %1318 = vmatmul.mubr.f32.gmra.mxu0 %v1213
        %v1319 = vpop.f32.mrf.mxu0
        %v1320 = vadd.f32 %v1246, %v1319
        %v1321 = vpop.f32.mrf.mxu0
        %1322 = vmatprep.mubr.f32.mxu0 0.0
        %1323 = vmatmul.mubr.f32.gmra.mxu0 %v1214
        %v1324 = vpop.f32.mrf.mxu0
        %v1325 = vadd.f32 %v1246, %v1324
        %v1326 = vpop.f32.mrf.mxu0
        %1327 = vmatprep.mubr.f32.mxu0 0.0
        %1328 = vmatmul.mubr.f32.gmra.mxu0 %v1215
        %v1329 = vpop.f32.mrf.mxu0
        %v1330 = vadd.f32 %v1246, %v1329
        %v1331 = vpop.f32.mrf.mxu0
        %1332 = vmatprep.mubr.f32.mxu0 0.0
        %1333 = vmatmul.mubr.f32.gmra.mxu0 %v1216
        %v1334 = vpop.f32.mrf.mxu0
        %v1335 = vadd.f32 %v1246, %v1334
        %v1336 = vpop.f32.mrf.mxu0
        %1337 = vmatprep.mubr.f32.mxu0 0.0
        %1338 = vmatmul.mubr.f32.gmra.mxu0 %v1217
        %v1339 = vpop.f32.mrf.mxu0
        %v1340 = vadd.f32 %v1246, %v1339
        %v1341 = vpop.f32.mrf.mxu0
        %1342 = vmatprep.mubr.f32.mxu0 0.0
        %1343 = vmatmul.mubr.f32.gmra.mxu0 %v1218
        %v1344 = vpop.f32.mrf.mxu0
        %v1345 = vadd.f32 %v1246, %v1344
        %v1346 = vpop.f32.mrf.mxu0
        %1347 = vmatprep.mubr.f32.mxu0 0.0
        %1348 = vmatmul.mubr.f32.gmra.mxu0 %v1219
        %v1349 = vpop.f32.mrf.mxu0
        %v1350 = vadd.f32 %v1246, %v1349
        %v1351 = vpop.f32.mrf.mxu0
        %1352 = vmatprep.mubr.f32.mxu0 0.0
        %1353 = vmatmul.mubr.f32.gmra.mxu0 %v1220
        %v1354 = vpop.f32.mrf.mxu0
        %v1355 = vadd.f32 %v1246, %v1354
        %v1356 = vpop.f32.mrf.mxu0
        %1357 = vmatprep.mubr.f32.mxu0 0.0
        %1358 = vmatmul.mubr.f32.gmra.mxu0 %v1221
        %v1359 = vpop.f32.mrf.mxu0
        %v1360 = vadd.f32 %v1246, %v1359
        %v1361 = vpop.f32.mrf.mxu0
        %1362 = vmatprep.mubr.f32.mxu0 0.0
        %1363 = vmatmul.mubr.f32.gmra.mxu0 %v1222
        %v1364 = vpop.f32.mrf.mxu0
        %v1365 = vadd.f32 %v1246, %v1364
        %v1366 = vpop.f32.mrf.mxu0
        %1367 = vmatprep.mubr.f32.mxu0 0.0
        %1368 = vmatmul.mubr.f32.gmra.mxu0 %v1223
        %v1369 = vpop.f32.mrf.mxu0
        %v1370 = vadd.f32 %v1246, %v1369
        %v1371 = vpop.f32.mrf.mxu0
        %1372 = vmatprep.mubr.f32.mxu0 0.0
        %1373 = vmatmul.mubr.f32.gmra.mxu0 %v1224
        %v1374 = vpop.f32.mrf.mxu0
        %v1375 = vadd.f32 %v1246, %v1374
        %v1376 = vpop.f32.mrf.mxu0
        %1377 = vdwg.mxu0
        %v1378 = vmax.f32 %v1315, 0.0
        %v1379 = vmax.f32 %v1320, 0.0
        %v1380 = vmax.f32 %v1325, 0.0
        %v1381 = vmax.f32 %v1330, 0.0
        %v1382 = vmax.f32 %v1335, 0.0
        %v1383 = vmax.f32 %v1340, 0.0
        %v1384 = vmax.f32 %v1345, 0.0
        %v1385 = vmax.f32 %v1350, 0.0
        %v1386 = vmax.f32 %v1355, 0.0
        %v1387 = vmax.f32 %v1360, 0.0
        %v1388 = vmax.f32 %v1365, 0.0
        %v1389 = vmax.f32 %v1370, 0.0
        %v1390 = vmax.f32 %v1375, 0.0
        %v1391 = vld [vmem:[#allocation13] sm:$0xff]
        %v1392 = vld [vmem:[#allocation13 + $0x8] sm:$0xff]
        %v1393 = vld [vmem:[#allocation13 + $0x10] sm:$0xff]
        %v1394 = vld [vmem:[#allocation13 + $0x18] sm:$0xff]
        %v1395 = vld [vmem:[#allocation13 + $0x20] sm:$0xff]
        %v1396 = vld [vmem:[#allocation13 + $0x28] sm:$0xff]
        %v1397 = vld [vmem:[#allocation13 + $0x30] sm:$0xff]
        %v1398 = vld [vmem:[#allocation13 + $0x38] sm:$0xff]
        %v1399 = vld [vmem:[#allocation13 + $0x40] sm:$0xff]
        %v1400 = vld [vmem:[#allocation13 + $0x48] sm:$0xff]
        %v1401 = vld [vmem:[#allocation13 + $0x50] sm:$0xff]
        %v1402 = vld [vmem:[#allocation13 + $0x58] sm:$0xff]
        %v1403 = vld [vmem:[#allocation13 + $0x60] sm:$0xff]
        %v1404 = vld [vmem:[#allocation13 + $0x68] sm:$0xff]
        %v1405 = vld [vmem:[#allocation13 + $0x70] sm:$0xff]
        %v1406 = vld [vmem:[#allocation13 + $0x78] sm:$0xff]
        %v1407 = vld [vmem:[%s12] sm:$0x1]
        %v1409 = vlaneseq
        %v1410 = vshrl.u32 %v1409, 7
        %v1411 = vsub.s32 0, %v1410
        %v1412 = vrot.slane %v1407, %v1411
        %1414 = vmatprep.subr.mxu0 0.0
        %1415 = vmatpush1.msra.mxu0 %v1406
        %1416 = vmatprep.subr.mxu0 0.0
        %1417 = vmatpush1.msra.mxu0 %v1405
        %1418 = vmatprep.subr.mxu0 0.0
        %1419 = vmatpush1.msra.mxu0 %v1404
        %1420 = vmatprep.subr.mxu0 0.0
        %1421 = vmatpush1.msra.mxu0 %v1403
        %1422 = vmatprep.subr.mxu0 0.0
        %1423 = vmatpush1.msra.mxu0 %v1402
        %1424 = vmatprep.subr.mxu0 0.0
        %1425 = vmatpush1.msra.mxu0 %v1401
        %1426 = vmatprep.subr.mxu0 0.0
        %1427 = vmatpush1.msra.mxu0 %v1400
        %1428 = vmatprep.subr.mxu0 0.0
        %1429 = vmatpush1.msra.mxu0 %v1399
        %1430 = vmatprep.subr.mxu0 0.0
        %1431 = vmatpush1.msra.mxu0 %v1398
        %1432 = vmatprep.subr.mxu0 0.0
        %1433 = vmatpush1.msra.mxu0 %v1397
        %1434 = vmatprep.subr.mxu0 0.0
        %1435 = vmatpush1.msra.mxu0 %v1396
        %1436 = vmatprep.subr.mxu0 0.0
        %1437 = vmatpush1.msra.mxu0 %v1395
        %1438 = vmatprep.subr.mxu0 0.0
        %1439 = vmatpush1.msra.mxu0 %v1394
        %1440 = vmatprep.subr.mxu0 0.0
        %1441 = vmatpush1.msra.mxu0 %v1393
        %1442 = vmatprep.subr.mxu0 0.0
        %1443 = vmatpush1.msra.mxu0 %v1392
        %1444 = vmatprep.subr.mxu0 0.0
        %1445 = vmatpush1.msra.mxu0 %v1391
        %1446 = vmatprep.subr.mxu0 0.0
        %1447 = vmatpush2.msra.mxu0 0.0
        %1448 = vmatprep.subr.mxu0 0.0
        %1449 = vmatpush2.msra.mxu0 0.0
        %1450 = vmatprep.subr.mxu0 0.0
        %1451 = vmatpush2.msra.mxu0 0.0
        %1452 = vmatprep.subr.mxu0 0.0
        %1453 = vmatpush2.msra.mxu0 0.0
        %1454 = vmatprep.subr.mxu0 0.0
        %1455 = vmatpush2.msra.mxu0 0.0
        %1456 = vmatprep.subr.mxu0 0.0
        %1457 = vmatpush2.msra.mxu0 0.0
        %1458 = vmatprep.subr.mxu0 0.0
        %1459 = vmatpush2.msra.mxu0 0.0
        %1460 = vmatprep.subr.mxu0 0.0
        %1461 = vmatpush2.msra.mxu0 0.0
        %1462 = vmatprep.subr.mxu0 0.0
        %1463 = vmatpush2.msra.mxu0 0.0
        %1464 = vmatprep.subr.mxu0 0.0
        %1465 = vmatpush2.msra.mxu0 0.0
        %1466 = vmatprep.subr.mxu0 0.0
        %1467 = vmatpush2.msra.mxu0 0.0
        %1468 = vmatprep.subr.mxu0 0.0
        %1469 = vmatpush2.msra.mxu0 0.0
        %1470 = vmatprep.subr.mxu0 0.0
        %1471 = vmatpush2.msra.mxu0 0.0
        %1472 = vmatprep.subr.mxu0 0.0
        %1473 = vmatpush2.msra.mxu0 0.0
        %1474 = vmatprep.subr.mxu0 0.0
        %1475 = vmatpush2.msra.mxu0 0.0
        %1476 = vmatprep.subr.mxu0 0.0
        %1477 = vmatpush2.msra.mxu0 0.0
        %1478 = vmatprep.mubr.f32.mxu0 0.0
        %1479 = vmatmul.mubr.f32.gmra.mxu0 %v1378
        %v1480 = vpop.f32.mrf.mxu0
        %v1481 = vadd.f32 %v1412, %v1480
        %v1482 = vpop.f32.mrf.mxu0
        %1483 = vmatprep.mubr.f32.mxu0 0.0
        %1484 = vmatmul.mubr.f32.gmra.mxu0 %v1379
        %v1485 = vpop.f32.mrf.mxu0
        %v1486 = vadd.f32 %v1412, %v1485
        %v1487 = vpop.f32.mrf.mxu0
        %1488 = vmatprep.mubr.f32.mxu0 0.0
        %1489 = vmatmul.mubr.f32.gmra.mxu0 %v1380
        %v1490 = vpop.f32.mrf.mxu0
        %v1491 = vadd.f32 %v1412, %v1490
        %v1492 = vpop.f32.mrf.mxu0
        %1493 = vmatprep.mubr.f32.mxu0 0.0
        %1494 = vmatmul.mubr.f32.gmra.mxu0 %v1381
        %v1495 = vpop.f32.mrf.mxu0
        %v1496 = vadd.f32 %v1412, %v1495
        %v1497 = vpop.f32.mrf.mxu0
        %1498 = vmatprep.mubr.f32.mxu0 0.0
        %1499 = vmatmul.mubr.f32.gmra.mxu0 %v1382
        %v1500 = vpop.f32.mrf.mxu0
        %v1501 = vadd.f32 %v1412, %v1500
        %v1502 = vpop.f32.mrf.mxu0
        %1503 = vmatprep.mubr.f32.mxu0 0.0
        %1504 = vmatmul.mubr.f32.gmra.mxu0 %v1383
        %v1505 = vpop.f32.mrf.mxu0
        %v1506 = vadd.f32 %v1412, %v1505
        %v1507 = vpop.f32.mrf.mxu0
        %1508 = vmatprep.mubr.f32.mxu0 0.0
        %1509 = vmatmul.mubr.f32.gmra.mxu0 %v1384
        %v1510 = vpop.f32.mrf.mxu0
        %v1511 = vadd.f32 %v1412, %v1510
        %v1512 = vpop.f32.mrf.mxu0
        %1513 = vmatprep.mubr.f32.mxu0 0.0
        %1514 = vmatmul.mubr.f32.gmra.mxu0 %v1385
        %v1515 = vpop.f32.mrf.mxu0
        %v1516 = vadd.f32 %v1412, %v1515
        %v1517 = vpop.f32.mrf.mxu0
        %1518 = vmatprep.mubr.f32.mxu0 0.0
        %1519 = vmatmul.mubr.f32.gmra.mxu0 %v1386
        %v1520 = vpop.f32.mrf.mxu0
        %v1521 = vadd.f32 %v1412, %v1520
        %v1522 = vpop.f32.mrf.mxu0
        %1523 = vmatprep.mubr.f32.mxu0 0.0
        %1524 = vmatmul.mubr.f32.gmra.mxu0 %v1387
        %v1525 = vpop.f32.mrf.mxu0
        %v1526 = vadd.f32 %v1412, %v1525
        %v1527 = vpop.f32.mrf.mxu0
        %1528 = vmatprep.mubr.f32.mxu0 0.0
        %1529 = vmatmul.mubr.f32.gmra.mxu0 %v1388
        %v1530 = vpop.f32.mrf.mxu0
        %v1531 = vadd.f32 %v1412, %v1530
        %v1532 = vpop.f32.mrf.mxu0
        %1533 = vmatprep.mubr.f32.mxu0 0.0
        %1534 = vmatmul.mubr.f32.gmra.mxu0 %v1389
        %v1535 = vpop.f32.mrf.mxu0
        %v1536 = vadd.f32 %v1412, %v1535
        %v1537 = vpop.f32.mrf.mxu0
        %1538 = vmatprep.mubr.f32.mxu0 0.0
        %1539 = vmatmul.mubr.f32.gmra.mxu0 %v1390
        %v1540 = vpop.f32.mrf.mxu0
        %v1541 = vadd.f32 %v1412, %v1540
        %v1542 = vpop.f32.mrf.mxu0
        %1543 = vdwg.mxu0
        %1544 = vst [vmem:[%s545] sm:$0xff] %v1481
        %1545 = vst [vmem:[%s545 + $0x8] sm:$0xff] %v1486
        %1546 = vst [vmem:[%s545 + $0x10] sm:$0xff] %v1491
        %1547 = vst [vmem:[%s545 + $0x18] sm:$0xff] %v1496
        %1548 = vst [vmem:[%s545 + $0x20] sm:$0xff] %v1501
        %1549 = vst [vmem:[%s545 + $0x28] sm:$0xff] %v1506
        %1550 = vst [vmem:[%s545 + $0x30] sm:$0xff] %v1511
        %1551 = vst [vmem:[%s545 + $0x38] sm:$0xff] %v1516
        %1552 = vst [vmem:[%s545 + $0x40] sm:$0xff] %v1521
        %1553 = vst [vmem:[%s545 + $0x48] sm:$0xff] %v1526
        %1554 = vst [vmem:[%s545 + $0x50] sm:$0xff] %v1531
        %1555 = vst [vmem:[%s545 + $0x58] sm:$0xff] %v1536
        %1556 = vst [vmem:[%s545 + $0x60] sm:$0xff] %v1541
        %s1557 = sand.u32 %s319, 1
        %s1558 = scalar_lea.sflag [#allocation4], %s1557
        %s1559 = sand.u32 %s319, 1
        %s1560 = smul.addr %s1559, 104
        %s1561 = scalar_lea.vmem [#allocation14], %s1560
        // Predicated region
        $region101: #{tpu_custom_call.1} parent=71 // pred_check
          %p1562 = pneg %p329
        $region102: #{tpu_custom_call.1} parent=71 // pred_check_branch
          %1564 = sbr.rel (%p1562) target = $region104
        $region103: #{tpu_custom_call.1} parent=71 // pred_region
          %s1565 = smul.u32 13, %s33
          %s1567 = ssub.s32 1664, 1664
          %1568 = vsyncadd %s1558, %s1567
          %s1569 = smul.addr %s1565, 128
          %s1570 = scalar_lea.hbm %s13, %s1569
          %s1571 = sshll.u32 %s1561, 4
          %s1572 = int_to_ptr.vmem [resolvable:$true] %s1571
          %1577 = dma.vmem_to_hbm [thread:$0]  %s1572, 1664, %s1570, %s1558, 128, 128, 8
        $region104: #{tpu_custom_call.1} parent=71 // pred_fallthru
          _
      $region72: #{tpu_custom_call.1} parent=5 // pred_fallthru
        _
      %p1578 = scmp.le.s32.totalorder 2, %s28
      // Predicated region
      $region105: #{tpu_custom_call.1} parent=5 // pred_check
        %p1579 = pneg %p1578
      $region106: #{tpu_custom_call.1} parent=5 // pred_check_branch
        %1581 = sbr.rel (%p1579) target = $region108
      $region107: #{tpu_custom_call.1} parent=5 // pred_region
        %s1582 = ssub.s32 %s28, 2
        // Predicated region
        $region109: #{tpu_custom_call.1} parent=107 // pred_check
          %p1583 = pneg %p335
        $region110: #{tpu_custom_call.1} parent=107 // pred_check_branch
          %1585 = sbr.rel (%p1583) target = $region112
        $region111: #{tpu_custom_call.1} parent=107 // pred_region
          %s1586 = sand.u32 %s320, 1
          %s1587 = scalar_lea.sflag [#allocation4], %s1586
          %s1588 = sand.u32 %s320, 1
          %s1589 = smul.addr %s1588, 104
          %s1590 = scalar_lea.vmem [#allocation14], %s1589
          %1591 = dma.done %s1587, 1664
        $region112: #{tpu_custom_call.1} parent=107 // pred_fallthru
          _
      $region108: #{tpu_custom_call.1} parent=5 // pred_fallthru
        _
    $region6: #{tpu_custom_call.1} parent=1 // loop_footer
      %s32 = sadd.s32 1, %s28
    $region7: #{tpu_custom_call.1} parent=1 // loop_footer_branch
      %27 = sbr.rel target = $region3
    $region8: #{tpu_custom_call.1} parent=1 // loop_exit
      _
    %1592 = vsyncpa [#allocation3], 1
    %s1593 = scalar_lea.sflag [#allocation3], 1
    %1594 = vsyncpa %s1593, 1
    %1595 = vsyncpa [#allocation6], 1
    %1596 = vsyncpa [#allocation9], 1
    %1597 = vsyncpa [#allocation12], 1
    %1598 = vsyncpa [#allocation4], 1
    %s1599 = scalar_lea.sflag [#allocation4], 1
    %1600 = vsyncpa %s1599, 1

// kernel: tpu_custom_call.1
$region0: #{tpu_custom_call.1}
  #allocation0 [shape = 'u32[]', space=smem, size = 0x4, offset = 0x4, fixed_abs, tag = 'smem constant byte address 0x4 - core index']
  #allocation1 [shape = 'u32[144,128]{1,0:T(1,128)}', space=vmem, size = 0x12000, scoped, tag = 'internal scratch']
  %s0 = inlined_call_operand.hbm [shape: f32[208,128], index: 0, kind: input, shape index: {}]
  %s1 = inlined_call_operand.hbm [shape: f32[128,128], index: 1, kind: input, shape index: {}]
  %s2 = inlined_call_operand.vmem [shape: f32[1,128], index: 2, kind: input, shape index: {}]
  %s3 = inlined_call_operand.hbm [shape: f32[128,128], index: 3, kind: input, shape index: {}]
  %s4 = inlined_call_operand.vmem [shape: f32[1,128], index: 4, kind: input, shape index: {}]
  %s5 = inlined_call_operand.hbm [shape: f32[128,128], index: 5, kind: input, shape index: {}]
  %s6 = inlined_call_operand.vmem [shape: f32[1,128], index: 6, kind: input, shape index: {}]
  %s7 = inlined_call_operand.hbm [shape: f32[128,128], index: 7, kind: input, shape index: {}]
  %s8 = inlined_call_operand.vmem [shape: f32[1,128], index: 8, kind: input, shape index: {}]
  %s9 = inlined_call_operand.hbm [shape: f32[128,128], index: 9, kind: input, shape index: {}]
  %s10 = inlined_call_operand.vmem [shape: f32[1,128], index: 10, kind: input, shape index: {}]
  %s11 = inlined_call_operand.hbm [shape: f32[128,128], index: 11, kind: input, shape index: {}]
  %s12 = inlined_call_operand.vmem [shape: f32[1,128], index: 12, kind: input, shape index: {}]
  %s13 = inlined_call_operand.hbm [shape: f32[208,128], index: 13, kind: output, shape index: {}]
  %s14 = sld [smem:[#allocation0]]
  $region113: #{tpu_custom_call.1} parent=0
    _
  %s16 = ssub.s32 1, %s14
  %s17 = scalar_select 0, %s16, %s14
  $region1: #{tpu_custom_call.1} parent=0
    #allocation2 [shape = 'u8[106496]{0}', space=vmem, size = 0x1a000, scoped, tag = 'input window, operand 0']
    #allocation3 [shape = 's32[2]{0}', space=sflag, size = 0x8, scoped, tag = 'scoped memory for tpu_custom_call.1']
    #allocation4 [shape = 's32[2]{0}', space=sflag, size = 0x8, scoped, tag = 'scoped memory for tpu_custom_call.1']
    #allocation5 [shape = 'u8[65536]{0}', space=vmem, size = 0x10000, scoped, tag = 'input window, operand 1, single buffered']
    #allocation6 [shape = 's32[1]{0}', space=sflag, size = 0x4, scoped, tag = 'scoped memory for tpu_custom_call.1']
    #allocation7 [shape = 'u8[65536]{0}', space=vmem, size = 0x10000, scoped, tag = 'input window, operand 3, single buffered']
    #allocation8 [shape = 'u8[65536]{0}', space=vmem, size = 0x10000, scoped, tag = 'input window, operand 5, single buffered']
    #allocation9 [shape = 's32[1]{0}', space=sflag, size = 0x4, scoped, tag = 'scoped memory for tpu_custom_call.1']
    #allocation10 [shape = 'u8[65536]{0}', space=vmem, size = 0x10000, scoped, tag = 'input window, operand 7, single buffered']
    #allocation11 [shape = 'u8[65536]{0}', space=vmem, size = 0x10000, scoped, tag = 'input window, operand 9, single buffered']
    #allocation12 [shape = 's32[1]{0}', space=sflag, size = 0x4, scoped, tag = 'scoped memory for tpu_custom_call.1']
    #allocation13 [shape = 'u8[65536]{0}', space=vmem, size = 0x10000, scoped, tag = 'input window, operand 11, single buffered']
    #allocation14 [shape = 'u8[106496]{0}', space=vmem, size = 0x1a000, scoped, tag = 'output window, operand 0']
    %18 = vsyncpa [#allocation3], 0
    %s19 = scalar_lea.sflag [#allocation3], 1
    %20 = vsyncpa %s19, 0
    %21 = vsyncpa [#allocation6], 0
    %22 = vsyncpa [#allocation9], 0
    %23 = vsyncpa [#allocation12], 0
    %24 = vsyncpa [#allocation4], 0
    %s25 = scalar_lea.sflag [#allocation4], 1
    %26 = vsyncpa %s25, 0
    loop: start=0, step=1, limit=4
    $region2: #{tpu_custom_call.1} parent=1 // loop_pre_header
      _
    $region3: #{tpu_custom_call.1} parent=1 // loop_header
      %s28 = sphi 0, %s32
      %p29 = scmp.ge.s32.totalorder %s28, 4
      %s38 = sphi 0, %s40
      %s41 = sphi 0, %s38
      %s42 = sphi 0, %s41
      %s58 = sphi 0, %s42
      %s62 = sphi 0, %s62
      %s64 = sphi 0, %s62
      %s65 = sphi 0, %s64
      %s79 = sphi 0, %s65
      %s83 = sphi 0, %s83
      %s85 = sphi 0, %s83
      %s86 = sphi 0, %s85
      %s100 = sphi 0, %s86
      %s104 = sphi 0, %s104
      %s106 = sphi 0, %s104
      %s107 = sphi 0, %s106
      %s121 = sphi 0, %s107
      %s125 = sphi 0, %s125
      %s127 = sphi 0, %s125
      %s128 = sphi 0, %s127
      %s142 = sphi 0, %s128
      %s146 = sphi 0, %s146
      %s148 = sphi 0, %s146
      %s149 = sphi 0, %s148
      %s163 = sphi 0, %s149
      %s167 = sphi 0, %s167
      %s169 = sphi 0, %s167
      %s170 = sphi 0, %s169
      %s184 = sphi 0, %s170
      %s188 = sphi 0, %s188
      %s190 = sphi 0, %s188
      %s191 = sphi 0, %s190
      %s205 = sphi 0, %s191
      %s209 = sphi 0, %s209
      %s211 = sphi 0, %s209
      %s212 = sphi 0, %s211
      %s226 = sphi 0, %s212
      %s230 = sphi 0, %s230
      %s232 = sphi 0, %s230
      %s233 = sphi 0, %s232
      %s247 = sphi 0, %s233
      %s251 = sphi 0, %s251
      %s253 = sphi 0, %s251
      %s254 = sphi 0, %s253
      %s268 = sphi 0, %s254
      %s272 = sphi 0, %s272
      %s274 = sphi 0, %s272
      %s275 = sphi 0, %s274
      %s289 = sphi 0, %s275
      %s293 = sphi 0, %s293
      %s295 = sphi 0, %s293
      %s296 = sphi 0, %s295
      %s310 = sphi 0, %s296
      %s316 = sphi 0, %s318
      %s319 = sphi 0, %s316
      %s320 = sphi 0, %s319
      %s336 = sphi 0, %s320
    $region4: #{tpu_custom_call.1} parent=1 // loop_header_branch
      %31 = sbr.rel (%p29) target = $region8
    $region5: #{tpu_custom_call.1} parent=1 // loop_body
      %s33 = ssub.s32 %s28, 1
      %s34 = ssub.s32 %s28, 2
      %s35 = sadd.s32 %s28, 1
      %s36 = ssub.s32 %s28, %s35
      %p37 = scmp.eq.s32.totalorder %s36, 0
      %s39 = sadd.s32 %s38, 1
      %s40 = scalar_select %p37, %s38, %s39
      %p43 = pneg %p37
      %p44 = scmp.eq.s32.totalorder %s28, 1
      %p45 = por %p43, %p44
      %p46 = scmp.ne.s32.totalorder %s38, %s41
      %p47 = scmp.eq.s32.totalorder %s28, 0
      %p48 = por %p46, %p47
      %p49 = scmp.ne.s32.totalorder %s38, %s41
      %p50 = scmp.eq.s32.totalorder %s33, 1
      %p51 = por %p49, %p50
      %p52 = scmp.ne.s32.totalorder %s41, %s42
      %p53 = scmp.eq.s32.totalorder %s33, 0
      %p54 = por %p52, %p53
      %p55 = scmp.ne.s32.totalorder %s41, %s42
      %p56 = scmp.eq.s32.totalorder %s34, 1
      %p57 = por %p55, %p56
      %p59 = scmp.ne.s32.totalorder %s42, %s58
      %p60 = scmp.eq.s32.totalorder %s34, 0
      %p61 = por %p59, %p60
      %s63 = sadd.s32 %s62, 1
      %p66 = scmp.eq.s32.totalorder %s28, 1
      %p67 = scmp.ne.s32.totalorder %s62, %s64
      %p68 = scmp.eq.s32.totalorder %s28, 0
      %p69 = por %p67, %p68
      %p70 = scmp.ne.s32.totalorder %s62, %s64
      %p71 = scmp.eq.s32.totalorder %s33, 1
      %p72 = por %p70, %p71
      %p73 = scmp.ne.s32.totalorder %s64, %s65
      %p74 = scmp.eq.s32.totalorder %s33, 0
      %p75 = por %p73, %p74
      %p76 = scmp.ne.s32.totalorder %s64, %s65
      %p77 = scmp.eq.s32.totalorder %s34, 1
      %p78 = por %p76, %p77
      %p80 = scmp.ne.s32.totalorder %s65, %s79
      %p81 = scmp.eq.s32.totalorder %s34, 0
      %p82 = por %p80, %p81
      %s84 = sadd.s32 %s83, 1
      %p87 = scmp.eq.s32.totalorder %s28, 1
      %p88 = scmp.ne.s32.totalorder %s83, %s85
      %p89 = scmp.eq.s32.totalorder %s28, 0
      %p90 = por %p88, %p89
      %p91 = scmp.ne.s32.totalorder %s83, %s85
      %p92 = scmp.eq.s32.totalorder %s33, 1
      %p93 = por %p91, %p92
      %p94 = scmp.ne.s32.totalorder %s85, %s86
      %p95 = scmp.eq.s32.totalorder %s33, 0
      %p96 = por %p94, %p95
      %p97 = scmp.ne.s32.totalorder %s85, %s86
      %p98 = scmp.eq.s32.totalorder %s34, 1
      %p99 = por %p97, %p98
      %p101 = scmp.ne.s32.totalorder %s86, %s100
      %p102 = scmp.eq.s32.totalorder %s34, 0
      %p103 = por %p101, %p102
      %s105 = sadd.s32 %s104, 1
      %p108 = scmp.eq.s32.totalorder %s28, 1
      %p109 = scmp.ne.s32.totalorder %s104, %s106
      %p110 = scmp.eq.s32.totalorder %s28, 0
      %p111 = por %p109, %p110
      %p112 = scmp.ne.s32.totalorder %s104, %s106
      %p113 = scmp.eq.s32.totalorder %s33, 1
      %p114 = por %p112, %p113
      %p115 = scmp.ne.s32.totalorder %s106, %s107
      %p116 = scmp.eq.s32.totalorder %s33, 0
      %p117 = por %p115, %p116
      %p118 = scmp.ne.s32.totalorder %s106, %s107
      %p119 = scmp.eq.s32.totalorder %s34, 1
      %p120 = por %p118, %p119
      %p122 = scmp.ne.s32.totalorder %s107, %s121
      %p123 = scmp.eq.s32.totalorder %s34, 0
      %p124 = por %p122, %p123
      %s126 = sadd.s32 %s125, 1
      %p129 = scmp.eq.s32.totalorder %s28, 1
      %p130 = scmp.ne.s32.totalorder %s125, %s127
      %p131 = scmp.eq.s32.totalorder %s28, 0
      %p132 = por %p130, %p131
      %p133 = scmp.ne.s32.totalorder %s125, %s127
      %p134 = scmp.eq.s32.totalorder %s33, 1
      %p135 = por %p133, %p134
      %p136 = scmp.ne.s32.totalorder %s127, %s128
      %p137 = scmp.eq.s32.totalorder %s33, 0
      %p138 = por %p136, %p137
      %p139 = scmp.ne.s32.totalorder %s127, %s128
      %p140 = scmp.eq.s32.totalorder %s34, 1
      %p141 = por %p139, %p140
      %p143 = scmp.ne.s32.totalorder %s128, %s142
      %p144 = scmp.eq.s32.totalorder %s34, 0
      %p145 = por %p143, %p144
      %s147 = sadd.s32 %s146, 1
      %p150 = scmp.eq.s32.totalorder %s28, 1
      %p151 = scmp.ne.s32.totalorder %s146, %s148
      %p152 = scmp.eq.s32.totalorder %s28, 0
      %p153 = por %p151, %p152
      %p154 = scmp.ne.s32.totalorder %s146, %s148
      %p155 = scmp.eq.s32.totalorder %s33, 1
      %p156 = por %p154, %p155
      %p157 = scmp.ne.s32.totalorder %s148, %s149
      %p158 = scmp.eq.s32.totalorder %s33, 0
      %p159 = por %p157, %p158
      %p160 = scmp.ne.s32.totalorder %s148, %s149
      %p161 = scmp.eq.s32.totalorder %s34, 1
      %p162 = por %p160, %p161
      %p164 = scmp.ne.s32.totalorder %s149, %s163
      %p165 = scmp.eq.s32.totalorder %s34, 0
      %p166 = por %p164, %p165
      %s168 = sadd.s32 %s167, 1
      %p171 = scmp.eq.s32.totalorder %s28, 1
      %p172 = scmp.ne.s32.totalorder %s167, %s169
      %p173 = scmp.eq.s32.totalorder %s28, 0
      %p174 = por %p172, %p173
      %p175 = scmp.ne.s32.totalorder %s167, %s169
      %p176 = scmp.eq.s32.totalorder %s33, 1
      %p177 = por %p175, %p176
      %p178 = scmp.ne.s32.totalorder %s169, %s170
      %p179 = scmp.eq.s32.totalorder %s33, 0
      %p180 = por %p178, %p179
      %p181 = scmp.ne.s32.totalorder %s169, %s170
      %p182 = scmp.eq.s32.totalorder %s34, 1
      %p183 = por %p181, %p182
      %p185 = scmp.ne.s32.totalorder %s170, %s184
      %p186 = scmp.eq.s32.totalorder %s34, 0
      %p187 = por %p185, %p186
      %s189 = sadd.s32 %s188, 1
      %p192 = scmp.eq.s32.totalorder %s28, 1
      %p193 = scmp.ne.s32.totalorder %s188, %s190
      %p194 = scmp.eq.s32.totalorder %s28, 0
      %p195 = por %p193, %p194
      %p196 = scmp.ne.s32.totalorder %s188, %s190
      %p197 = scmp.eq.s32.totalorder %s33, 1
      %p198 = por %p196, %p197
      %p199 = scmp.ne.s32.totalorder %s190, %s191
      %p200 = scmp.eq.s32.totalorder %s33, 0
      %p201 = por %p199, %p200
      %p202 = scmp.ne.s32.totalorder %s190, %s191
      %p203 = scmp.eq.s32.totalorder %s34, 1
      %p204 = por %p202, %p203
      %p206 = scmp.ne.s32.totalorder %s191, %s205
      %p207 = scmp.eq.s32.totalorder %s34, 0
      %p208 = por %p206, %p207
      %s210 = sadd.s32 %s209, 1
      %p213 = scmp.eq.s32.totalorder %s28, 1
      %p214 = scmp.ne.s32.totalorder %s209, %s211
      %p215 = scmp.eq.s32.totalorder %s28, 0
      %p216 = por %p214, %p215
      %p217 = scmp.ne.s32.totalorder %s209, %s211
      %p218 = scmp.eq.s32.totalorder %s33, 1
      %p219 = por %p217, %p218
      %p220 = scmp.ne.s32.totalorder %s211, %s212
      %p221 = scmp.eq.s32.totalorder %s33, 0
      %p222 = por %p220, %p221
      %p223 = scmp.ne.s32.totalorder %s211, %s212
      %p224 = scmp.eq.s32.totalorder %s34, 1
      %p225 = por %p223, %p224
      %p227 = scmp.ne.s32.totalorder %s212, %s226
      %p228 = scmp.eq.s32.totalorder %s34, 0
      %p229 = por %p227, %p228
      %s231 = sadd.s32 %s230, 1
      %p234 = scmp.eq.s32.totalorder %s28, 1
      %p235 = scmp.ne.s32.totalorder %s230, %s232
      %p236 = scmp.eq.s32.totalorder %s28, 0
      %p237 = por %p235, %p236
      %p238 = scmp.ne.s32.totalorder %s230, %s232
      %p239 = scmp.eq.s32.totalorder %s33, 1
      %p240 = por %p238, %p239
      %p241 = scmp.ne.s32.totalorder %s232, %s233
      %p242 = scmp.eq.s32.totalorder %s33, 0
      %p243 = por %p241, %p242
      %p244 = scmp.ne.s32.totalorder %s232, %s233
      %p245 = scmp.eq.s32.totalorder %s34, 1
      %p246 = por %p244, %p245
      %p248 = scmp.ne.s32.totalorder %s233, %s247
      %p249 = scmp.eq.s32.totalorder %s34, 0
      %p250 = por %p248, %p249
      %s252 = sadd.s32 %s251, 1
      %p255 = scmp.eq.s32.totalorder %s28, 1
      %p256 = scmp.ne.s32.totalorder %s251, %s253
      %p257 = scmp.eq.s32.totalorder %s28, 0
      %p258 = por %p256, %p257
      %p259 = scmp.ne.s32.totalorder %s251, %s253
      %p260 = scmp.eq.s32.totalorder %s33, 1
      %p261 = por %p259, %p260
      %p262 = scmp.ne.s32.totalorder %s253, %s254
      %p263 = scmp.eq.s32.totalorder %s33, 0
      %p264 = por %p262, %p263
      %p265 = scmp.ne.s32.totalorder %s253, %s254
      %p266 = scmp.eq.s32.totalorder %s34, 1
      %p267 = por %p265, %p266
      %p269 = scmp.ne.s32.totalorder %s254, %s268
      %p270 = scmp.eq.s32.totalorder %s34, 0
      %p271 = por %p269, %p270
      %s273 = sadd.s32 %s272, 1
      %p276 = scmp.eq.s32.totalorder %s28, 1
      %p277 = scmp.ne.s32.totalorder %s272, %s274
      %p278 = scmp.eq.s32.totalorder %s28, 0
      %p279 = por %p277, %p278
      %p280 = scmp.ne.s32.totalorder %s272, %s274
      %p281 = scmp.eq.s32.totalorder %s33, 1
      %p282 = por %p280, %p281
      %p283 = scmp.ne.s32.totalorder %s274, %s275
      %p284 = scmp.eq.s32.totalorder %s33, 0
      %p285 = por %p283, %p284
      %p286 = scmp.ne.s32.totalorder %s274, %s275
      %p287 = scmp.eq.s32.totalorder %s34, 1
      %p288 = por %p286, %p287
      %p290 = scmp.ne.s32.totalorder %s275, %s289
      %p291 = scmp.eq.s32.totalorder %s34, 0
      %p292 = por %p290, %p291
      %s294 = sadd.s32 %s293, 1
      %p297 = scmp.eq.s32.totalorder %s28, 1
      %p298 = scmp.ne.s32.totalorder %s293, %s295
      %p299 = scmp.eq.s32.totalorder %s28, 0
      %p300 = por %p298, %p299
      %p301 = scmp.ne.s32.totalorder %s293, %s295
      %p302 = scmp.eq.s32.totalorder %s33, 1
      %p303 = por %p301, %p302
      %p304 = scmp.ne.s32.totalorder %s295, %s296
      %p305 = scmp.eq.s32.totalorder %s33, 0
      %p306 = por %p304, %p305
      %p307 = scmp.ne.s32.totalorder %s295, %s296
      %p308 = scmp.eq.s32.totalorder %s34, 1
      %p309 = por %p307, %p308
      %p311 = scmp.ne.s32.totalorder %s296, %s310
      %p312 = scmp.eq.s32.totalorder %s34, 0
      %p313 = por %p311, %p312
      %s314 = ssub.s32 %s28, %s35
      %p315 = scmp.eq.s32.totalorder %s314, 0
      %s317 = sadd.s32 %s316, 1
      %s318 = scalar_select %p315, %s316, %s317
      %p321 = pneg %p315
      %p322 = scmp.eq.s32.totalorder %s28, 1
      %p323 = por %p321, %p322
      %p324 = scmp.ne.s32.totalorder %s316, %s319
      %p325 = scmp.eq.s32.totalorder %s28, 0
      %p326 = por %p324, %p325
      %p327 = scmp.ne.s32.totalorder %s316, %s319
      %p328 = scmp.eq.s32.totalorder %s33, 1
      %p329 = por %p327, %p328
      %p330 = scmp.ne.s32.totalorder %s319, %s320
      %p331 = scmp.eq.s32.totalorder %s33, 0
      %p332 = por %p330, %p331
      %p333 = scmp.ne.s32.totalorder %s319, %s320
      %p334 = scmp.eq.s32.totalorder %s34, 1
      %p335 = por %p333, %p334
      %p337 = scmp.ne.s32.totalorder %s320, %s336
      %p338 = scmp.eq.s32.totalorder %s34, 0
      %p339 = por %p337, %p338
      %p340 = scmp.le.s32.totalorder 1, %s28
      %p341 = scmp.lt.s32.totalorder %s28, 3
      %p342 = pnand %p340, %p341
      %p343 = pneg %p342
      // Predicated region
      $region9: #{tpu_custom_call.1} parent=5 // pred_check
        _
      $region10: #{tpu_custom_call.1} parent=5 // pred_check_branch
        %345 = sbr.rel (%p342) target = $region12
      $region11: #{tpu_custom_call.1} parent=5 // pred_region
        %s346 = ssub.s32 %s28, 1
        // Predicated region
        $region13: #{tpu_custom_call.1} parent=11 // pred_check
          %p347 = pneg %p75
        $region14: #{tpu_custom_call.1} parent=11 // pred_check_branch
          %349 = sbr.rel (%p347) target = $region16
        $region15: #{tpu_custom_call.1} parent=11 // pred_region
          %s351 = ssub.s32 2048, 2048
          %352 = vsyncadd [#allocation6], %s351
          %s353 = sshll.u32 [#allocation5], 4
          %s354 = int_to_ptr.vmem [resolvable:$true] %s353
          %359 = dma.hbm_to_vmem [thread:$0]  %s1, 2048, %s354, [#allocation6], 128, 128, 8
        $region16: #{tpu_custom_call.1} parent=11 // pred_fallthru
          _
        // Predicated region
        $region17: #{tpu_custom_call.1} parent=11 // pred_check
          %p360 = pneg %p96
        $region18: #{tpu_custom_call.1} parent=11 // pred_check_branch
          %362 = sbr.rel (%p360) target = $region20
        $region19: #{tpu_custom_call.1} parent=11 // pred_region
          _
        $region20: #{tpu_custom_call.1} parent=11 // pred_fallthru
          _
        // Predicated region
        $region21: #{tpu_custom_call.1} parent=11 // pred_check
          %p363 = pneg %p117
        $region22: #{tpu_custom_call.1} parent=11 // pred_check_branch
          %365 = sbr.rel (%p363) target = $region24
        $region23: #{tpu_custom_call.1} parent=11 // pred_region
          %s367 = ssub.s32 2048, 2048
          %368 = vsyncadd [#allocation6], %s367
          %s369 = sshll.u32 [#allocation7], 4
          %s370 = int_to_ptr.vmem [resolvable:$true] %s369
          %375 = dma.hbm_to_vmem [thread:$0]  %s3, 2048, %s370, [#allocation6], 128, 128, 8
        $region24: #{tpu_custom_call.1} parent=11 // pred_fallthru
          _
        // Predicated region
        $region25: #{tpu_custom_call.1} parent=11 // pred_check
          %p376 = pneg %p138
        $region26: #{tpu_custom_call.1} parent=11 // pred_check_branch
          %378 = sbr.rel (%p376) target = $region28
        $region27: #{tpu_custom_call.1} parent=11 // pred_region
          _
        $region28: #{tpu_custom_call.1} parent=11 // pred_fallthru
          _
        // Predicated region
        $region29: #{tpu_custom_call.1} parent=11 // pred_check
          %p379 = pneg %p159
        $region30: #{tpu_custom_call.1} parent=11 // pred_check_branch
          %381 = sbr.rel (%p379) target = $region32
        $region31: #{tpu_custom_call.1} parent=11 // pred_region
          %s383 = ssub.s32 2048, 2048
          %384 = vsyncadd [#allocation9], %s383
          %s385 = sshll.u32 [#allocation8], 4
          %s386 = int_to_ptr.vmem [resolvable:$true] %s385
          %391 = dma.hbm_to_vmem [thread:$0]  %s5, 2048, %s386, [#allocation9], 128, 128, 8
        $region32: #{tpu_custom_call.1} parent=11 // pred_fallthru
          _
        // Predicated region
        $region33: #{tpu_custom_call.1} parent=11 // pred_check
          %p392 = pneg %p180
        $region34: #{tpu_custom_call.1} parent=11 // pred_check_branch
          %394 = sbr.rel (%p392) target = $region36
        $region35: #{tpu_custom_call.1} parent=11 // pred_region
          _
        $region36: #{tpu_custom_call.1} parent=11 // pred_fallthru
          _
        // Predicated region
        $region37: #{tpu_custom_call.1} parent=11 // pred_check
          %p395 = pneg %p201
        $region38: #{tpu_custom_call.1} parent=11 // pred_check_branch
          %397 = sbr.rel (%p395) target = $region40
        $region39: #{tpu_custom_call.1} parent=11 // pred_region
          %s399 = ssub.s32 2048, 2048
          %400 = vsyncadd [#allocation9], %s399
          %s401 = sshll.u32 [#allocation10], 4
          %s402 = int_to_ptr.vmem [resolvable:$true] %s401
          %407 = dma.hbm_to_vmem [thread:$0]  %s7, 2048, %s402, [#allocation9], 128, 128, 8
        $region40: #{tpu_custom_call.1} parent=11 // pred_fallthru
          _
        // Predicated region
        $region41: #{tpu_custom_call.1} parent=11 // pred_check
          %p408 = pneg %p222
        $region42: #{tpu_custom_call.1} parent=11 // pred_check_branch
          %410 = sbr.rel (%p408) target = $region44
        $region43: #{tpu_custom_call.1} parent=11 // pred_region
          _
        $region44: #{tpu_custom_call.1} parent=11 // pred_fallthru
          _
        // Predicated region
        $region45: #{tpu_custom_call.1} parent=11 // pred_check
          %p411 = pneg %p243
        $region46: #{tpu_custom_call.1} parent=11 // pred_check_branch
          %413 = sbr.rel (%p411) target = $region48
        $region47: #{tpu_custom_call.1} parent=11 // pred_region
          %s415 = ssub.s32 2048, 2048
          %416 = vsyncadd [#allocation12], %s415
          %s417 = sshll.u32 [#allocation11], 4
          %s418 = int_to_ptr.vmem [resolvable:$true] %s417
          %423 = dma.hbm_to_vmem [thread:$0]  %s9, 2048, %s418, [#allocation12], 128, 128, 8
        $region48: #{tpu_custom_call.1} parent=11 // pred_fallthru
          _
        // Predicated region
        $region49: #{tpu_custom_call.1} parent=11 // pred_check
          %p424 = pneg %p264
        $region50: #{tpu_custom_call.1} parent=11 // pred_check_branch
          %426 = sbr.rel (%p424) target = $region52
        $region51: #{tpu_custom_call.1} parent=11 // pred_region
          _
        $region52: #{tpu_custom_call.1} parent=11 // pred_fallthru
          _
        // Predicated region
        $region53: #{tpu_custom_call.1} parent=11 // pred_check
          %p427 = pneg %p285
        $region54: #{tpu_custom_call.1} parent=11 // pred_check_branch
          %429 = sbr.rel (%p427) target = $region56
        $region55: #{tpu_custom_call.1} parent=11 // pred_region
          %s431 = ssub.s32 2048, 2048
          %432 = vsyncadd [#allocation12], %s431
          %s433 = sshll.u32 [#allocation13], 4
          %s434 = int_to_ptr.vmem [resolvable:$true] %s433
          %439 = dma.hbm_to_vmem [thread:$0]  %s11, 2048, %s434, [#allocation12], 128, 128, 8
        $region56: #{tpu_custom_call.1} parent=11 // pred_fallthru
          _
        // Predicated region
        $region57: #{tpu_custom_call.1} parent=11 // pred_check
          %p440 = pneg %p306
        $region58: #{tpu_custom_call.1} parent=11 // pred_check_branch
          %442 = sbr.rel (%p440) target = $region60
        $region59: #{tpu_custom_call.1} parent=11 // pred_region
          _
        $region60: #{tpu_custom_call.1} parent=11 // pred_fallthru
          _
      $region12: #{tpu_custom_call.1} parent=5 // pred_fallthru
        _
      %p443 = scmp.lt.s32.totalorder %s28, 2
      // Predicated region
      $region61: #{tpu_custom_call.1} parent=5 // pred_check
        %p444 = pneg %p443
      $region62: #{tpu_custom_call.1} parent=5 // pred_check_branch
        %446 = sbr.rel (%p444) target = $region64
      $region63: #{tpu_custom_call.1} parent=5 // pred_region
        // Predicated region
        $region65: #{tpu_custom_call.1} parent=63 // pred_check
          %p447 = pneg %p48
        $region66: #{tpu_custom_call.1} parent=63 // pred_check_branch
          %449 = sbr.rel (%p447) target = $region68
        $region67: #{tpu_custom_call.1} parent=63 // pred_region
          %s450 = sand.u32 %s38, 1
          %s451 = scalar_lea.sflag [#allocation3], %s450
          %s452 = sand.u32 %s38, 1
          %s453 = smul.addr %s452, 104
          %s454 = scalar_lea.vmem [#allocation2], %s453
          %s455 = smul.u32 13, %s28
          %s457 = ssub.s32 1664, 1664
          %458 = vsyncadd %s451, %s457
          %s459 = smul.addr %s455, 128
          %s460 = scalar_lea.hbm %s0, %s459
          %s461 = sshll.u32 %s454, 4
          %s462 = int_to_ptr.vmem [resolvable:$true] %s461
          %467 = dma.hbm_to_vmem [thread:$0]  %s460, 1664, %s462, %s451, 128, 128, 8
        $region68: #{tpu_custom_call.1} parent=63 // pred_fallthru
          _
      $region64: #{tpu_custom_call.1} parent=5 // pred_fallthru
        _
      %p468 = scmp.le.s32.totalorder 1, %s28
      %p469 = scmp.lt.s32.totalorder %s28, 3
      %p470 = pnand %p468, %p469
      %p471 = pneg %p470
      // Predicated region
      $region69: #{tpu_custom_call.1} parent=5 // pred_check
        _
      $region70: #{tpu_custom_call.1} parent=5 // pred_check_branch
        %473 = sbr.rel (%p470) target = $region72
      $region71: #{tpu_custom_call.1} parent=5 // pred_region
        %s474 = ssub.s32 %s28, 1
        %s475 = sand.u32 %s41, 1
        %s476 = scalar_lea.sflag [#allocation3], %s475
        %s477 = sand.u32 %s41, 1
        %s478 = smul.addr %s477, 104
        %s479 = scalar_lea.vmem [#allocation2], %s478
        // Predicated region
        $region73: #{tpu_custom_call.1} parent=71 // pred_check
          %p480 = pneg %p54
        $region74: #{tpu_custom_call.1} parent=71 // pred_check_branch
          %482 = sbr.rel (%p480) target = $region76
        $region75: #{tpu_custom_call.1} parent=71 // pred_region
          %483 = dma.done %s476, 1664
        $region76: #{tpu_custom_call.1} parent=71 // pred_fallthru
          _
        // Predicated region
        $region77: #{tpu_custom_call.1} parent=71 // pred_check
          %p484 = pneg %p75
        $region78: #{tpu_custom_call.1} parent=71 // pred_check_branch
          %486 = sbr.rel (%p484) target = $region80
        $region79: #{tpu_custom_call.1} parent=71 // pred_region
          %487 = dma.done [#allocation6], 2048
        $region80: #{tpu_custom_call.1} parent=71 // pred_fallthru
          _
        // Predicated region
        $region81: #{tpu_custom_call.1} parent=71 // pred_check
          %p488 = pneg %p117
        $region82: #{tpu_custom_call.1} parent=71 // pred_check_branch
          %490 = sbr.rel (%p488) target = $region84
        $region83: #{tpu_custom_call.1} parent=71 // pred_region
          %491 = dma.done [#allocation6], 2048
        $region84: #{tpu_custom_call.1} parent=71 // pred_fallthru
          _
        // Predicated region
        $region85: #{tpu_custom_call.1} parent=71 // pred_check
          %p492 = pneg %p159
        $region86: #{tpu_custom_call.1} parent=71 // pred_check_branch
          %494 = sbr.rel (%p492) target = $region88
        $region87: #{tpu_custom_call.1} parent=71 // pred_region
          %495 = dma.done [#allocation9], 2048
        $region88: #{tpu_custom_call.1} parent=71 // pred_fallthru
          _
        // Predicated region
        $region89: #{tpu_custom_call.1} parent=71 // pred_check
          %p496 = pneg %p201
        $region90: #{tpu_custom_call.1} parent=71 // pred_check_branch
          %498 = sbr.rel (%p496) target = $region92
        $region91: #{tpu_custom_call.1} parent=71 // pred_region
          %499 = dma.done [#allocation9], 2048
        $region92: #{tpu_custom_call.1} parent=71 // pred_fallthru
          _
        // Predicated region
        $region93: #{tpu_custom_call.1} parent=71 // pred_check
          %p500 = pneg %p243
        $region94: #{tpu_custom_call.1} parent=71 // pred_check_branch
          %502 = sbr.rel (%p500) target = $region96
        $region95: #{tpu_custom_call.1} parent=71 // pred_region
          %503 = dma.done [#allocation12], 2048
        $region96: #{tpu_custom_call.1} parent=71 // pred_fallthru
          _
        // Predicated region
        $region97: #{tpu_custom_call.1} parent=71 // pred_check
          %p504 = pneg %p285
        $region98: #{tpu_custom_call.1} parent=71 // pred_check_branch
          %506 = sbr.rel (%p504) target = $region100
        $region99: #{tpu_custom_call.1} parent=71 // pred_region
          %507 = dma.done [#allocation12], 2048
        $region100: #{tpu_custom_call.1} parent=71 // pred_fallthru
          _
        %s508 = sand.u32 %s41, 1
        %s509 = scalar_lea.sflag [#allocation3], %s508
        %s510 = sand.u32 %s41, 1
        %s511 = smul.addr %s510, 104
        %s512 = scalar_lea.vmem [#allocation2], %s511
        %p513 = pneg %p54
        %p514 = pneg %p51
        %p515 = pneg %p75
        %p516 = pneg %p72
        %p517 = pneg %p96
        %p518 = pneg %p93
        %p519 = pneg %p117
        %p520 = pneg %p114
        %p521 = pneg %p138
        %p522 = pneg %p135
        %p523 = pneg %p159
        %p524 = pneg %p156
        %p525 = pneg %p180
        %p526 = pneg %p177
        %p527 = pneg %p201
        %p528 = pneg %p198
        %p529 = pneg %p222
        %p530 = pneg %p219
        %p531 = pneg %p243
        %p532 = pneg %p240
        %p533 = pneg %p264
        %p534 = pneg %p261
        %p535 = pneg %p285
        %p536 = pneg %p282
        %p537 = pneg %p306
        %p538 = pneg %p303
        %p539 = pneg %p332
        %p540 = pneg %p329
        %s541 = sand.u32 %s319, 1
        %s542 = scalar_lea.sflag [#allocation4], %s541
        %s543 = sand.u32 %s319, 1
        %s544 = smul.addr %s543, 104
        %s545 = scalar_lea.vmem [#allocation14], %s544
        %s546 = smul.u32 13, %s33
        %s547 = smul.u32 13, %s33
        %v548 = vld [vmem:[%s479] sm:$0xff]
        %v549 = vld [vmem:[%s479 + $0x8] sm:$0xff]
        %v550 = vld [vmem:[%s479 + $0x10] sm:$0xff]
        %v551 = vld [vmem:[%s479 + $0x18] sm:$0xff]
        %v552 = vld [vmem:[%s479 + $0x20] sm:$0xff]
        %v553 = vld [vmem:[%s479 + $0x28] sm:$0xff]
        %v554 = vld [vmem:[%s479 + $0x30] sm:$0xff]
        %v555 = vld [vmem:[%s479 + $0x38] sm:$0xff]
        %v556 = vld [vmem:[%s479 + $0x40] sm:$0xff]
        %v557 = vld [vmem:[%s479 + $0x48] sm:$0xff]
        %v558 = vld [vmem:[%s479 + $0x50] sm:$0xff]
        %v559 = vld [vmem:[%s479 + $0x58] sm:$0xff]
        %v560 = vld [vmem:[%s479 + $0x60] sm:$0xff]
        %v561 = vld [vmem:[#allocation5] sm:$0xff]
        %v562 = vld [vmem:[#allocation5 + $0x8] sm:$0xff]
        %v563 = vld [vmem:[#allocation5 + $0x10] sm:$0xff]
        %v564 = vld [vmem:[#allocation5 + $0x18] sm:$0xff]
        %v565 = vld [vmem:[#allocation5 + $0x20] sm:$0xff]
        %v566 = vld [vmem:[#allocation5 + $0x28] sm:$0xff]
        %v567 = vld [vmem:[#allocation5 + $0x30] sm:$0xff]
        %v568 = vld [vmem:[#allocation5 + $0x38] sm:$0xff]
        %v569 = vld [vmem:[#allocation5 + $0x40] sm:$0xff]
        %v570 = vld [vmem:[#allocation5 + $0x48] sm:$0xff]
        %v571 = vld [vmem:[#allocation5 + $0x50] sm:$0xff]
        %v572 = vld [vmem:[#allocation5 + $0x58] sm:$0xff]
        %v573 = vld [vmem:[#allocation5 + $0x60] sm:$0xff]
        %v574 = vld [vmem:[#allocation5 + $0x68] sm:$0xff]
        %v575 = vld [vmem:[#allocation5 + $0x70] sm:$0xff]
        %v576 = vld [vmem:[#allocation5 + $0x78] sm:$0xff]
        %v577 = vld [vmem:[%s2] sm:$0x1]
        %v579 = vlaneseq
        %v580 = vshrl.u32 %v579, 7
        %v581 = vsub.s32 0, %v580
        %v582 = vrot.slane %v577, %v581
        %584 = vmatprep.subr.mxu0 0.0
        %585 = vmatpush1.msra.mxu0 %v576
        %586 = vmatprep.subr.mxu0 0.0
        %587 = vmatpush1.msra.mxu0 %v575
        %588 = vmatprep.subr.mxu0 0.0
        %589 = vmatpush1.msra.mxu0 %v574
        %590 = vmatprep.subr.mxu0 0.0
        %591 = vmatpush1.msra.mxu0 %v573
        %592 = vmatprep.subr.mxu0 0.0
        %593 = vmatpush1.msra.mxu0 %v572
        %594 = vmatprep.subr.mxu0 0.0
        %595 = vmatpush1.msra.mxu0 %v571
        %596 = vmatprep.subr.mxu0 0.0
        %597 = vmatpush1.msra.mxu0 %v570
        %598 = vmatprep.subr.mxu0 0.0
        %599 = vmatpush1.msra.mxu0 %v569
        %600 = vmatprep.subr.mxu0 0.0
        %601 = vmatpush1.msra.mxu0 %v568
        %602 = vmatprep.subr.mxu0 0.0
        %603 = vmatpush1.msra.mxu0 %v567
        %604 = vmatprep.subr.mxu0 0.0
        %605 = vmatpush1.msra.mxu0 %v566
        %606 = vmatprep.subr.mxu0 0.0
        %607 = vmatpush1.msra.mxu0 %v565
        %608 = vmatprep.subr.mxu0 0.0
        %609 = vmatpush1.msra.mxu0 %v564
        %610 = vmatprep.subr.mxu0 0.0
        %611 = vmatpush1.msra.mxu0 %v563
        %612 = vmatprep.subr.mxu0 0.0
        %613 = vmatpush1.msra.mxu0 %v562
        %614 = vmatprep.subr.mxu0 0.0
        %615 = vmatpush1.msra.mxu0 %v561
        %616 = vmatprep.subr.mxu0 0.0
        %617 = vmatpush2.msra.mxu0 0.0
        %618 = vmatprep.subr.mxu0 0.0
        %619 = vmatpush2.msra.mxu0 0.0
        %620 = vmatprep.subr.mxu0 0.0
        %621 = vmatpush2.msra.mxu0 0.0
        %622 = vmatprep.subr.mxu0 0.0
        %623 = vmatpush2.msra.mxu0 0.0
        %624 = vmatprep.subr.mxu0 0.0
        %625 = vmatpush2.msra.mxu0 0.0
        %626 = vmatprep.subr.mxu0 0.0
        %627 = vmatpush2.msra.mxu0 0.0
        %628 = vmatprep.subr.mxu0 0.0
        %629 = vmatpush2.msra.mxu0 0.0
        %630 = vmatprep.subr.mxu0 0.0
        %631 = vmatpush2.msra.mxu0 0.0
        %632 = vmatprep.subr.mxu0 0.0
        %633 = vmatpush2.msra.mxu0 0.0
        %634 = vmatprep.subr.mxu0 0.0
        %635 = vmatpush2.msra.mxu0 0.0
        %636 = vmatprep.subr.mxu0 0.0
        %637 = vmatpush2.msra.mxu0 0.0
        %638 = vmatprep.subr.mxu0 0.0
        %639 = vmatpush2.msra.mxu0 0.0
        %640 = vmatprep.subr.mxu0 0.0
        %641 = vmatpush2.msra.mxu0 0.0
        %642 = vmatprep.subr.mxu0 0.0
        %643 = vmatpush2.msra.mxu0 0.0
        %644 = vmatprep.subr.mxu0 0.0
        %645 = vmatpush2.msra.mxu0 0.0
        %646 = vmatprep.subr.mxu0 0.0
        %647 = vmatpush2.msra.mxu0 0.0
        %648 = vmatprep.mubr.f32.mxu0 0.0
        %649 = vmatmul.mubr.f32.gmra.mxu0 %v548
        %v650 = vpop.f32.mrf.mxu0
        %v651 = vadd.f32 %v582, %v650
        %v652 = vpop.f32.mrf.mxu0
        %653 = vmatprep.mubr.f32.mxu0 0.0
        %654 = vmatmul.mubr.f32.gmra.mxu0 %v549
        %v655 = vpop.f32.mrf.mxu0
        %v656 = vadd.f32 %v582, %v655
        %v657 = vpop.f32.mrf.mxu0
        %658 = vmatprep.mubr.f32.mxu0 0.0
        %659 = vmatmul.mubr.f32.gmra.mxu0 %v550
        %v660 = vpop.f32.mrf.mxu0
        %v661 = vadd.f32 %v582, %v660
        %v662 = vpop.f32.mrf.mxu0
        %663 = vmatprep.mubr.f32.mxu0 0.0
        %664 = vmatmul.mubr.f32.gmra.mxu0 %v551
        %v665 = vpop.f32.mrf.mxu0
        %v666 = vadd.f32 %v582, %v665
        %v667 = vpop.f32.mrf.mxu0
        %668 = vmatprep.mubr.f32.mxu0 0.0
        %669 = vmatmul.mubr.f32.gmra.mxu0 %v552
        %v670 = vpop.f32.mrf.mxu0
        %v671 = vadd.f32 %v582, %v670
        %v672 = vpop.f32.mrf.mxu0
        %673 = vmatprep.mubr.f32.mxu0 0.0
        %674 = vmatmul.mubr.f32.gmra.mxu0 %v553
        %v675 = vpop.f32.mrf.mxu0
        %v676 = vadd.f32 %v582, %v675
        %v677 = vpop.f32.mrf.mxu0
        %678 = vmatprep.mubr.f32.mxu0 0.0
        %679 = vmatmul.mubr.f32.gmra.mxu0 %v554
        %v680 = vpop.f32.mrf.mxu0
        %v681 = vadd.f32 %v582, %v680
        %v682 = vpop.f32.mrf.mxu0
        %683 = vmatprep.mubr.f32.mxu0 0.0
        %684 = vmatmul.mubr.f32.gmra.mxu0 %v555
        %v685 = vpop.f32.mrf.mxu0
        %v686 = vadd.f32 %v582, %v685
        %v687 = vpop.f32.mrf.mxu0
        %688 = vmatprep.mubr.f32.mxu0 0.0
        %689 = vmatmul.mubr.f32.gmra.mxu0 %v556
        %v690 = vpop.f32.mrf.mxu0
        %v691 = vadd.f32 %v582, %v690
        %v692 = vpop.f32.mrf.mxu0
        %693 = vmatprep.mubr.f32.mxu0 0.0
        %694 = vmatmul.mubr.f32.gmra.mxu0 %v557
        %v695 = vpop.f32.mrf.mxu0
        %v696 = vadd.f32 %v582, %v695
        %v697 = vpop.f32.mrf.mxu0
        %698 = vmatprep.mubr.f32.mxu0 0.0
        %699 = vmatmul.mubr.f32.gmra.mxu0 %v558
        %v700 = vpop.f32.mrf.mxu0
        %v701 = vadd.f32 %v582, %v700
        %v702 = vpop.f32.mrf.mxu0
        %703 = vmatprep.mubr.f32.mxu0 0.0
        %704 = vmatmul.mubr.f32.gmra.mxu0 %v559
        %v705 = vpop.f32.mrf.mxu0
        %v706 = vadd.f32 %v582, %v705
        %v707 = vpop.f32.mrf.mxu0
        %708 = vmatprep.mubr.f32.mxu0 0.0
        %709 = vmatmul.mubr.f32.gmra.mxu0 %v560
        %v710 = vpop.f32.mrf.mxu0
        %v711 = vadd.f32 %v582, %v710
        %v712 = vpop.f32.mrf.mxu0
        %713 = vdwg.mxu0
        %v714 = vmax.f32 %v651, 0.0
        %v715 = vmax.f32 %v656, 0.0
        %v716 = vmax.f32 %v661, 0.0
        %v717 = vmax.f32 %v666, 0.0
        %v718 = vmax.f32 %v671, 0.0
        %v719 = vmax.f32 %v676, 0.0
        %v720 = vmax.f32 %v681, 0.0
        %v721 = vmax.f32 %v686, 0.0
        %v722 = vmax.f32 %v691, 0.0
        %v723 = vmax.f32 %v696, 0.0
        %v724 = vmax.f32 %v701, 0.0
        %v725 = vmax.f32 %v706, 0.0
        %v726 = vmax.f32 %v711, 0.0
        %v727 = vld [vmem:[#allocation7] sm:$0xff]
        %v728 = vld [vmem:[#allocation7 + $0x8] sm:$0xff]
        %v729 = vld [vmem:[#allocation7 + $0x10] sm:$0xff]
        %v730 = vld [vmem:[#allocation7 + $0x18] sm:$0xff]
        %v731 = vld [vmem:[#allocation7 + $0x20] sm:$0xff]
        %v732 = vld [vmem:[#allocation7 + $0x28] sm:$0xff]
        %v733 = vld [vmem:[#allocation7 + $0x30] sm:$0xff]
        %v734 = vld [vmem:[#allocation7 + $0x38] sm:$0xff]
        %v735 = vld [vmem:[#allocation7 + $0x40] sm:$0xff]
        %v736 = vld [vmem:[#allocation7 + $0x48] sm:$0xff]
        %v737 = vld [vmem:[#allocation7 + $0x50] sm:$0xff]
        %v738 = vld [vmem:[#allocation7 + $0x58] sm:$0xff]
        %v739 = vld [vmem:[#allocation7 + $0x60] sm:$0xff]
        %v740 = vld [vmem:[#allocation7 + $0x68] sm:$0xff]
        %v741 = vld [vmem:[#allocation7 + $0x70] sm:$0xff]
        %v742 = vld [vmem:[#allocation7 + $0x78] sm:$0xff]
        %v743 = vld [vmem:[%s4] sm:$0x1]
        %v745 = vlaneseq
        %v746 = vshrl.u32 %v745, 7
        %v747 = vsub.s32 0, %v746
        %v748 = vrot.slane %v743, %v747
        %750 = vmatprep.subr.mxu0 0.0
        %751 = vmatpush1.msra.mxu0 %v742
        %752 = vmatprep.subr.mxu0 0.0
        %753 = vmatpush1.msra.mxu0 %v741
        %754 = vmatprep.subr.mxu0 0.0
        %755 = vmatpush1.msra.mxu0 %v740
        %756 = vmatprep.subr.mxu0 0.0
        %757 = vmatpush1.msra.mxu0 %v739
        %758 = vmatprep.subr.mxu0 0.0
        %759 = vmatpush1.msra.mxu0 %v738
        %760 = vmatprep.subr.mxu0 0.0
        %761 = vmatpush1.msra.mxu0 %v737
        %762 = vmatprep.subr.mxu0 0.0
        %763 = vmatpush1.msra.mxu0 %v736
        %764 = vmatprep.subr.mxu0 0.0
        %765 = vmatpush1.msra.mxu0 %v735
        %766 = vmatprep.subr.mxu0 0.0
        %767 = vmatpush1.msra.mxu0 %v734
        %768 = vmatprep.subr.mxu0 0.0
        %769 = vmatpush1.msra.mxu0 %v733
        %770 = vmatprep.subr.mxu0 0.0
        %771 = vmatpush1.msra.mxu0 %v732
        %772 = vmatprep.subr.mxu0 0.0
        %773 = vmatpush1.msra.mxu0 %v731
        %774 = vmatprep.subr.mxu0 0.0
        %775 = vmatpush1.msra.mxu0 %v730
        %776 = vmatprep.subr.mxu0 0.0
        %777 = vmatpush1.msra.mxu0 %v729
        %778 = vmatprep.subr.mxu0 0.0
        %779 = vmatpush1.msra.mxu0 %v728
        %780 = vmatprep.subr.mxu0 0.0
        %781 = vmatpush1.msra.mxu0 %v727
        %782 = vmatprep.subr.mxu0 0.0
        %783 = vmatpush2.msra.mxu0 0.0
        %784 = vmatprep.subr.mxu0 0.0
        %785 = vmatpush2.msra.mxu0 0.0
        %786 = vmatprep.subr.mxu0 0.0
        %787 = vmatpush2.msra.mxu0 0.0
        %788 = vmatprep.subr.mxu0 0.0
        %789 = vmatpush2.msra.mxu0 0.0
        %790 = vmatprep.subr.mxu0 0.0
        %791 = vmatpush2.msra.mxu0 0.0
        %792 = vmatprep.subr.mxu0 0.0
        %793 = vmatpush2.msra.mxu0 0.0
        %794 = vmatprep.subr.mxu0 0.0
        %795 = vmatpush2.msra.mxu0 0.0
        %796 = vmatprep.subr.mxu0 0.0
        %797 = vmatpush2.msra.mxu0 0.0
        %798 = vmatprep.subr.mxu0 0.0
        %799 = vmatpush2.msra.mxu0 0.0
        %800 = vmatprep.subr.mxu0 0.0
        %801 = vmatpush2.msra.mxu0 0.0
        %802 = vmatprep.subr.mxu0 0.0
        %803 = vmatpush2.msra.mxu0 0.0
        %804 = vmatprep.subr.mxu0 0.0
        %805 = vmatpush2.msra.mxu0 0.0
        %806 = vmatprep.subr.mxu0 0.0
        %807 = vmatpush2.msra.mxu0 0.0
        %808 = vmatprep.subr.mxu0 0.0
        %809 = vmatpush2.msra.mxu0 0.0
        %810 = vmatprep.subr.mxu0 0.0
        %811 = vmatpush2.msra.mxu0 0.0
        %812 = vmatprep.subr.mxu0 0.0
        %813 = vmatpush2.msra.mxu0 0.0
        %814 = vmatprep.mubr.f32.mxu0 0.0
        %815 = vmatmul.mubr.f32.gmra.mxu0 %v714
        %v816 = vpop.f32.mrf.mxu0
        %v817 = vadd.f32 %v748, %v816
        %v818 = vpop.f32.mrf.mxu0
        %819 = vmatprep.mubr.f32.mxu0 0.0
        %820 = vmatmul.mubr.f32.gmra.mxu0 %v715
        %v821 = vpop.f32.mrf.mxu0
        %v822 = vadd.f32 %v748, %v821
        %v823 = vpop.f32.mrf.mxu0
        %824 = vmatprep.mubr.f32.mxu0 0.0
        %825 = vmatmul.mubr.f32.gmra.mxu0 %v716
        %v826 = vpop.f32.mrf.mxu0
        %v827 = vadd.f32 %v748, %v826
        %v828 = vpop.f32.mrf.mxu0
        %829 = vmatprep.mubr.f32.mxu0 0.0
        %830 = vmatmul.mubr.f32.gmra.mxu0 %v717
        %v831 = vpop.f32.mrf.mxu0
        %v832 = vadd.f32 %v748, %v831
        %v833 = vpop.f32.mrf.mxu0
        %834 = vmatprep.mubr.f32.mxu0 0.0
        %835 = vmatmul.mubr.f32.gmra.mxu0 %v718
        %v836 = vpop.f32.mrf.mxu0
        %v837 = vadd.f32 %v748, %v836
        %v838 = vpop.f32.mrf.mxu0
        %839 = vmatprep.mubr.f32.mxu0 0.0
        %840 = vmatmul.mubr.f32.gmra.mxu0 %v719
        %v841 = vpop.f32.mrf.mxu0
        %v842 = vadd.f32 %v748, %v841
        %v843 = vpop.f32.mrf.mxu0
        %844 = vmatprep.mubr.f32.mxu0 0.0
        %845 = vmatmul.mubr.f32.gmra.mxu0 %v720
        %v846 = vpop.f32.mrf.mxu0
        %v847 = vadd.f32 %v748, %v846
        %v848 = vpop.f32.mrf.mxu0
        %849 = vmatprep.mubr.f32.mxu0 0.0
        %850 = vmatmul.mubr.f32.gmra.mxu0 %v721
        %v851 = vpop.f32.mrf.mxu0
        %v852 = vadd.f32 %v748, %v851
        %v853 = vpop.f32.mrf.mxu0
        %854 = vmatprep.mubr.f32.mxu0 0.0
        %855 = vmatmul.mubr.f32.gmra.mxu0 %v722
        %v856 = vpop.f32.mrf.mxu0
        %v857 = vadd.f32 %v748, %v856
        %v858 = vpop.f32.mrf.mxu0
        %859 = vmatprep.mubr.f32.mxu0 0.0
        %860 = vmatmul.mubr.f32.gmra.mxu0 %v723
        %v861 = vpop.f32.mrf.mxu0
        %v862 = vadd.f32 %v748, %v861
        %v863 = vpop.f32.mrf.mxu0
        %864 = vmatprep.mubr.f32.mxu0 0.0
        %865 = vmatmul.mubr.f32.gmra.mxu0 %v724
        %v866 = vpop.f32.mrf.mxu0
        %v867 = vadd.f32 %v748, %v866
        %v868 = vpop.f32.mrf.mxu0
        %869 = vmatprep.mubr.f32.mxu0 0.0
        %870 = vmatmul.mubr.f32.gmra.mxu0 %v725
        %v871 = vpop.f32.mrf.mxu0
        %v872 = vadd.f32 %v748, %v871
        %v873 = vpop.f32.mrf.mxu0
        %874 = vmatprep.mubr.f32.mxu0 0.0
        %875 = vmatmul.mubr.f32.gmra.mxu0 %v726
        %v876 = vpop.f32.mrf.mxu0
        %v877 = vadd.f32 %v748, %v876
        %v878 = vpop.f32.mrf.mxu0
        %879 = vdwg.mxu0
        %v880 = vmax.f32 %v817, 0.0
        %v881 = vmax.f32 %v822, 0.0
        %v882 = vmax.f32 %v827, 0.0
        %v883 = vmax.f32 %v832, 0.0
        %v884 = vmax.f32 %v837, 0.0
        %v885 = vmax.f32 %v842, 0.0
        %v886 = vmax.f32 %v847, 0.0
        %v887 = vmax.f32 %v852, 0.0
        %v888 = vmax.f32 %v857, 0.0
        %v889 = vmax.f32 %v862, 0.0
        %v890 = vmax.f32 %v867, 0.0
        %v891 = vmax.f32 %v872, 0.0
        %v892 = vmax.f32 %v877, 0.0
        %v893 = vld [vmem:[#allocation8] sm:$0xff]
        %v894 = vld [vmem:[#allocation8 + $0x8] sm:$0xff]
        %v895 = vld [vmem:[#allocation8 + $0x10] sm:$0xff]
        %v896 = vld [vmem:[#allocation8 + $0x18] sm:$0xff]
        %v897 = vld [vmem:[#allocation8 + $0x20] sm:$0xff]
        %v898 = vld [vmem:[#allocation8 + $0x28] sm:$0xff]
        %v899 = vld [vmem:[#allocation8 + $0x30] sm:$0xff]
        %v900 = vld [vmem:[#allocation8 + $0x38] sm:$0xff]
        %v901 = vld [vmem:[#allocation8 + $0x40] sm:$0xff]
        %v902 = vld [vmem:[#allocation8 + $0x48] sm:$0xff]
        %v903 = vld [vmem:[#allocation8 + $0x50] sm:$0xff]
        %v904 = vld [vmem:[#allocation8 + $0x58] sm:$0xff]
        %v905 = vld [vmem:[#allocation8 + $0x60] sm:$0xff]
        %v906 = vld [vmem:[#allocation8 + $0x68] sm:$0xff]
        %v907 = vld [vmem:[#allocation8 + $0x70] sm:$0xff]
        %v908 = vld [vmem:[#allocation8 + $0x78] sm:$0xff]
        %v909 = vld [vmem:[%s6] sm:$0x1]
        %v911 = vlaneseq
        %v912 = vshrl.u32 %v911, 7
        %v913 = vsub.s32 0, %v912
        %v914 = vrot.slane %v909, %v913
        %916 = vmatprep.subr.mxu0 0.0
        %917 = vmatpush1.msra.mxu0 %v908
        %918 = vmatprep.subr.mxu0 0.0
        %919 = vmatpush1.msra.mxu0 %v907
        %920 = vmatprep.subr.mxu0 0.0
        %921 = vmatpush1.msra.mxu0 %v906
        %922 = vmatprep.subr.mxu0 0.0
        %923 = vmatpush1.msra.mxu0 %v905
        %924 = vmatprep.subr.mxu0 0.0
        %925 = vmatpush1.msra.mxu0 %v904
        %926 = vmatprep.subr.mxu0 0.0
        %927 = vmatpush1.msra.mxu0 %v903
        %928 = vmatprep.subr.mxu0 0.0
        %929 = vmatpush1.msra.mxu0 %v902
        %930 = vmatprep.subr.mxu0 0.0
        %931 = vmatpush1.msra.mxu0 %v901
        %932 = vmatprep.subr.mxu0 0.0
        %933 = vmatpush1.msra.mxu0 %v900
        %934 = vmatprep.subr.mxu0 0.0
        %935 = vmatpush1.msra.mxu0 %v899
        %936 = vmatprep.subr.mxu0 0.0
        %937 = vmatpush1.msra.mxu0 %v898
        %938 = vmatprep.subr.mxu0 0.0
        %939 = vmatpush1.msra.mxu0 %v897
        %940 = vmatprep.subr.mxu0 0.0
        %941 = vmatpush1.msra.mxu0 %v896
        %942 = vmatprep.subr.mxu0 0.0
        %943 = vmatpush1.msra.mxu0 %v895
        %944 = vmatprep.subr.mxu0 0.0
        %945 = vmatpush1.msra.mxu0 %v894
        %946 = vmatprep.subr.mxu0 0.0
        %947 = vmatpush1.msra.mxu0 %v893
        %948 = vmatprep.subr.mxu0 0.0
        %949 = vmatpush2.msra.mxu0 0.0
        %950 = vmatprep.subr.mxu0 0.0
        %951 = vmatpush2.msra.mxu0 0.0
        %952 = vmatprep.subr.mxu0 0.0
        %953 = vmatpush2.msra.mxu0 0.0
        %954 = vmatprep.subr.mxu0 0.0
        %955 = vmatpush2.msra.mxu0 0.0
        %956 = vmatprep.subr.mxu0 0.0
        %957 = vmatpush2.msra.mxu0 0.0
        %958 = vmatprep.subr.mxu0 0.0
        %959 = vmatpush2.msra.mxu0 0.0
        %960 = vmatprep.subr.mxu0 0.0
        %961 = vmatpush2.msra.mxu0 0.0
        %962 = vmatprep.subr.mxu0 0.0
        %963 = vmatpush2.msra.mxu0 0.0
        %964 = vmatprep.subr.mxu0 0.0
        %965 = vmatpush2.msra.mxu0 0.0
        %966 = vmatprep.subr.mxu0 0.0
        %967 = vmatpush2.msra.mxu0 0.0
        %968 = vmatprep.subr.mxu0 0.0
        %969 = vmatpush2.msra.mxu0 0.0
        %970 = vmatprep.subr.mxu0 0.0
        %971 = vmatpush2.msra.mxu0 0.0
        %972 = vmatprep.subr.mxu0 0.0
        %973 = vmatpush2.msra.mxu0 0.0
        %974 = vmatprep.subr.mxu0 0.0
        %975 = vmatpush2.msra.mxu0 0.0
        %976 = vmatprep.subr.mxu0 0.0
        %977 = vmatpush2.msra.mxu0 0.0
        %978 = vmatprep.subr.mxu0 0.0
        %979 = vmatpush2.msra.mxu0 0.0
        %980 = vmatprep.mubr.f32.mxu0 0.0
        %981 = vmatmul.mubr.f32.gmra.mxu0 %v880
        %v982 = vpop.f32.mrf.mxu0
        %v983 = vadd.f32 %v914, %v982
        %v984 = vpop.f32.mrf.mxu0
        %985 = vmatprep.mubr.f32.mxu0 0.0
        %986 = vmatmul.mubr.f32.gmra.mxu0 %v881
        %v987 = vpop.f32.mrf.mxu0
        %v988 = vadd.f32 %v914, %v987
        %v989 = vpop.f32.mrf.mxu0
        %990 = vmatprep.mubr.f32.mxu0 0.0
        %991 = vmatmul.mubr.f32.gmra.mxu0 %v882
        %v992 = vpop.f32.mrf.mxu0
        %v993 = vadd.f32 %v914, %v992
        %v994 = vpop.f32.mrf.mxu0
        %995 = vmatprep.mubr.f32.mxu0 0.0
        %996 = vmatmul.mubr.f32.gmra.mxu0 %v883
        %v997 = vpop.f32.mrf.mxu0
        %v998 = vadd.f32 %v914, %v997
        %v999 = vpop.f32.mrf.mxu0
        %1000 = vmatprep.mubr.f32.mxu0 0.0
        %1001 = vmatmul.mubr.f32.gmra.mxu0 %v884
        %v1002 = vpop.f32.mrf.mxu0
        %v1003 = vadd.f32 %v914, %v1002
        %v1004 = vpop.f32.mrf.mxu0
        %1005 = vmatprep.mubr.f32.mxu0 0.0
        %1006 = vmatmul.mubr.f32.gmra.mxu0 %v885
        %v1007 = vpop.f32.mrf.mxu0
        %v1008 = vadd.f32 %v914, %v1007
        %v1009 = vpop.f32.mrf.mxu0
        %1010 = vmatprep.mubr.f32.mxu0 0.0
        %1011 = vmatmul.mubr.f32.gmra.mxu0 %v886
        %v1012 = vpop.f32.mrf.mxu0
        %v1013 = vadd.f32 %v914, %v1012
        %v1014 = vpop.f32.mrf.mxu0
        %1015 = vmatprep.mubr.f32.mxu0 0.0
        %1016 = vmatmul.mubr.f32.gmra.mxu0 %v887
        %v1017 = vpop.f32.mrf.mxu0
        %v1018 = vadd.f32 %v914, %v1017
        %v1019 = vpop.f32.mrf.mxu0
        %1020 = vmatprep.mubr.f32.mxu0 0.0
        %1021 = vmatmul.mubr.f32.gmra.mxu0 %v888
        %v1022 = vpop.f32.mrf.mxu0
        %v1023 = vadd.f32 %v914, %v1022
        %v1024 = vpop.f32.mrf.mxu0
        %1025 = vmatprep.mubr.f32.mxu0 0.0
        %1026 = vmatmul.mubr.f32.gmra.mxu0 %v889
        %v1027 = vpop.f32.mrf.mxu0
        %v1028 = vadd.f32 %v914, %v1027
        %v1029 = vpop.f32.mrf.mxu0
        %1030 = vmatprep.mubr.f32.mxu0 0.0
        %1031 = vmatmul.mubr.f32.gmra.mxu0 %v890
        %v1032 = vpop.f32.mrf.mxu0
        %v1033 = vadd.f32 %v914, %v1032
        %v1034 = vpop.f32.mrf.mxu0
        %1035 = vmatprep.mubr.f32.mxu0 0.0
        %1036 = vmatmul.mubr.f32.gmra.mxu0 %v891
        %v1037 = vpop.f32.mrf.mxu0
        %v1038 = vadd.f32 %v914, %v1037
        %v1039 = vpop.f32.mrf.mxu0
        %1040 = vmatprep.mubr.f32.mxu0 0.0
        %1041 = vmatmul.mubr.f32.gmra.mxu0 %v892
        %v1042 = vpop.f32.mrf.mxu0
        %v1043 = vadd.f32 %v914, %v1042
        %v1044 = vpop.f32.mrf.mxu0
        %1045 = vdwg.mxu0
        %v1046 = vmax.f32 %v983, 0.0
        %v1047 = vmax.f32 %v988, 0.0
        %v1048 = vmax.f32 %v993, 0.0
        %v1049 = vmax.f32 %v998, 0.0
        %v1050 = vmax.f32 %v1003, 0.0
        %v1051 = vmax.f32 %v1008, 0.0
        %v1052 = vmax.f32 %v1013, 0.0
        %v1053 = vmax.f32 %v1018, 0.0
        %v1054 = vmax.f32 %v1023, 0.0
        %v1055 = vmax.f32 %v1028, 0.0
        %v1056 = vmax.f32 %v1033, 0.0
        %v1057 = vmax.f32 %v1038, 0.0
        %v1058 = vmax.f32 %v1043, 0.0
        %v1059 = vld [vmem:[#allocation10] sm:$0xff]
        %v1060 = vld [vmem:[#allocation10 + $0x8] sm:$0xff]
        %v1061 = vld [vmem:[#allocation10 + $0x10] sm:$0xff]
        %v1062 = vld [vmem:[#allocation10 + $0x18] sm:$0xff]
        %v1063 = vld [vmem:[#allocation10 + $0x20] sm:$0xff]
        %v1064 = vld [vmem:[#allocation10 + $0x28] sm:$0xff]
        %v1065 = vld [vmem:[#allocation10 + $0x30] sm:$0xff]
        %v1066 = vld [vmem:[#allocation10 + $0x38] sm:$0xff]
        %v1067 = vld [vmem:[#allocation10 + $0x40] sm:$0xff]
        %v1068 = vld [vmem:[#allocation10 + $0x48] sm:$0xff]
        %v1069 = vld [vmem:[#allocation10 + $0x50] sm:$0xff]
        %v1070 = vld [vmem:[#allocation10 + $0x58] sm:$0xff]
        %v1071 = vld [vmem:[#allocation10 + $0x60] sm:$0xff]
        %v1072 = vld [vmem:[#allocation10 + $0x68] sm:$0xff]
        %v1073 = vld [vmem:[#allocation10 + $0x70] sm:$0xff]
        %v1074 = vld [vmem:[#allocation10 + $0x78] sm:$0xff]
        %v1075 = vld [vmem:[%s8] sm:$0x1]
        %v1077 = vlaneseq
        %v1078 = vshrl.u32 %v1077, 7
        %v1079 = vsub.s32 0, %v1078
        %v1080 = vrot.slane %v1075, %v1079
        %1082 = vmatprep.subr.mxu0 0.0
        %1083 = vmatpush1.msra.mxu0 %v1074
        %1084 = vmatprep.subr.mxu0 0.0
        %1085 = vmatpush1.msra.mxu0 %v1073
        %1086 = vmatprep.subr.mxu0 0.0
        %1087 = vmatpush1.msra.mxu0 %v1072
        %1088 = vmatprep.subr.mxu0 0.0
        %1089 = vmatpush1.msra.mxu0 %v1071
        %1090 = vmatprep.subr.mxu0 0.0
        %1091 = vmatpush1.msra.mxu0 %v1070
        %1092 = vmatprep.subr.mxu0 0.0
        %1093 = vmatpush1.msra.mxu0 %v1069
        %1094 = vmatprep.subr.mxu0 0.0
        %1095 = vmatpush1.msra.mxu0 %v1068
        %1096 = vmatprep.subr.mxu0 0.0
        %1097 = vmatpush1.msra.mxu0 %v1067
        %1098 = vmatprep.subr.mxu0 0.0
        %1099 = vmatpush1.msra.mxu0 %v1066
        %1100 = vmatprep.subr.mxu0 0.0
        %1101 = vmatpush1.msra.mxu0 %v1065
        %1102 = vmatprep.subr.mxu0 0.0
        %1103 = vmatpush1.msra.mxu0 %v1064
        %1104 = vmatprep.subr.mxu0 0.0
        %1105 = vmatpush1.msra.mxu0 %v1063
        %1106 = vmatprep.subr.mxu0 0.0
        %1107 = vmatpush1.msra.mxu0 %v1062
        %1108 = vmatprep.subr.mxu0 0.0
        %1109 = vmatpush1.msra.mxu0 %v1061
        %1110 = vmatprep.subr.mxu0 0.0
        %1111 = vmatpush1.msra.mxu0 %v1060
        %1112 = vmatprep.subr.mxu0 0.0
        %1113 = vmatpush1.msra.mxu0 %v1059
        %1114 = vmatprep.subr.mxu0 0.0
        %1115 = vmatpush2.msra.mxu0 0.0
        %1116 = vmatprep.subr.mxu0 0.0
        %1117 = vmatpush2.msra.mxu0 0.0
        %1118 = vmatprep.subr.mxu0 0.0
        %1119 = vmatpush2.msra.mxu0 0.0
        %1120 = vmatprep.subr.mxu0 0.0
        %1121 = vmatpush2.msra.mxu0 0.0
        %1122 = vmatprep.subr.mxu0 0.0
        %1123 = vmatpush2.msra.mxu0 0.0
        %1124 = vmatprep.subr.mxu0 0.0
        %1125 = vmatpush2.msra.mxu0 0.0
        %1126 = vmatprep.subr.mxu0 0.0
        %1127 = vmatpush2.msra.mxu0 0.0
        %1128 = vmatprep.subr.mxu0 0.0
        %1129 = vmatpush2.msra.mxu0 0.0
        %1130 = vmatprep.subr.mxu0 0.0
        %1131 = vmatpush2.msra.mxu0 0.0
        %1132 = vmatprep.subr.mxu0 0.0
        %1133 = vmatpush2.msra.mxu0 0.0
        %1134 = vmatprep.subr.mxu0 0.0
        %1135 = vmatpush2.msra.mxu0 0.0
        %1136 = vmatprep.subr.mxu0 0.0
        %1137 = vmatpush2.msra.mxu0 0.0
        %1138 = vmatprep.subr.mxu0 0.0
        %1139 = vmatpush2.msra.mxu0 0.0
        %1140 = vmatprep.subr.mxu0 0.0
        %1141 = vmatpush2.msra.mxu0 0.0
        %1142 = vmatprep.subr.mxu0 0.0
        %1143 = vmatpush2.msra.mxu0 0.0
        %1144 = vmatprep.subr.mxu0 0.0
        %1145 = vmatpush2.msra.mxu0 0.0
        %1146 = vmatprep.mubr.f32.mxu0 0.0
        %1147 = vmatmul.mubr.f32.gmra.mxu0 %v1046
        %v1148 = vpop.f32.mrf.mxu0
        %v1149 = vadd.f32 %v1080, %v1148
        %v1150 = vpop.f32.mrf.mxu0
        %1151 = vmatprep.mubr.f32.mxu0 0.0
        %1152 = vmatmul.mubr.f32.gmra.mxu0 %v1047
        %v1153 = vpop.f32.mrf.mxu0
        %v1154 = vadd.f32 %v1080, %v1153
        %v1155 = vpop.f32.mrf.mxu0
        %1156 = vmatprep.mubr.f32.mxu0 0.0
        %1157 = vmatmul.mubr.f32.gmra.mxu0 %v1048
        %v1158 = vpop.f32.mrf.mxu0
        %v1159 = vadd.f32 %v1080, %v1158
        %v1160 = vpop.f32.mrf.mxu0
        %1161 = vmatprep.mubr.f32.mxu0 0.0
        %1162 = vmatmul.mubr.f32.gmra.mxu0 %v1049
        %v1163 = vpop.f32.mrf.mxu0
        %v1164 = vadd.f32 %v1080, %v1163
        %v1165 = vpop.f32.mrf.mxu0
        %1166 = vmatprep.mubr.f32.mxu0 0.0
        %1167 = vmatmul.mubr.f32.gmra.mxu0 %v1050
        %v1168 = vpop.f32.mrf.mxu0
        %v1169 = vadd.f32 %v1080, %v1168
        %v1170 = vpop.f32.mrf.mxu0
        %1171 = vmatprep.mubr.f32.mxu0 0.0
        %1172 = vmatmul.mubr.f32.gmra.mxu0 %v1051
        %v1173 = vpop.f32.mrf.mxu0
        %v1174 = vadd.f32 %v1080, %v1173
        %v1175 = vpop.f32.mrf.mxu0
        %1176 = vmatprep.mubr.f32.mxu0 0.0
        %1177 = vmatmul.mubr.f32.gmra.mxu0 %v1052
        %v1178 = vpop.f32.mrf.mxu0
        %v1179 = vadd.f32 %v1080, %v1178
        %v1180 = vpop.f32.mrf.mxu0
        %1181 = vmatprep.mubr.f32.mxu0 0.0
        %1182 = vmatmul.mubr.f32.gmra.mxu0 %v1053
        %v1183 = vpop.f32.mrf.mxu0
        %v1184 = vadd.f32 %v1080, %v1183
        %v1185 = vpop.f32.mrf.mxu0
        %1186 = vmatprep.mubr.f32.mxu0 0.0
        %1187 = vmatmul.mubr.f32.gmra.mxu0 %v1054
        %v1188 = vpop.f32.mrf.mxu0
        %v1189 = vadd.f32 %v1080, %v1188
        %v1190 = vpop.f32.mrf.mxu0
        %1191 = vmatprep.mubr.f32.mxu0 0.0
        %1192 = vmatmul.mubr.f32.gmra.mxu0 %v1055
        %v1193 = vpop.f32.mrf.mxu0
        %v1194 = vadd.f32 %v1080, %v1193
        %v1195 = vpop.f32.mrf.mxu0
        %1196 = vmatprep.mubr.f32.mxu0 0.0
        %1197 = vmatmul.mubr.f32.gmra.mxu0 %v1056
        %v1198 = vpop.f32.mrf.mxu0
        %v1199 = vadd.f32 %v1080, %v1198
        %v1200 = vpop.f32.mrf.mxu0
        %1201 = vmatprep.mubr.f32.mxu0 0.0
        %1202 = vmatmul.mubr.f32.gmra.mxu0 %v1057
        %v1203 = vpop.f32.mrf.mxu0
        %v1204 = vadd.f32 %v1080, %v1203
        %v1205 = vpop.f32.mrf.mxu0
        %1206 = vmatprep.mubr.f32.mxu0 0.0
        %1207 = vmatmul.mubr.f32.gmra.mxu0 %v1058
        %v1208 = vpop.f32.mrf.mxu0
        %v1209 = vadd.f32 %v1080, %v1208
        %v1210 = vpop.f32.mrf.mxu0
        %1211 = vdwg.mxu0
        %v1212 = vmax.f32 %v1149, 0.0
        %v1213 = vmax.f32 %v1154, 0.0
        %v1214 = vmax.f32 %v1159, 0.0
        %v1215 = vmax.f32 %v1164, 0.0
        %v1216 = vmax.f32 %v1169, 0.0
        %v1217 = vmax.f32 %v1174, 0.0
        %v1218 = vmax.f32 %v1179, 0.0
        %v1219 = vmax.f32 %v1184, 0.0
        %v1220 = vmax.f32 %v1189, 0.0
        %v1221 = vmax.f32 %v1194, 0.0
        %v1222 = vmax.f32 %v1199, 0.0
        %v1223 = vmax.f32 %v1204, 0.0
        %v1224 = vmax.f32 %v1209, 0.0
        %v1225 = vld [vmem:[#allocation11] sm:$0xff]
        %v1226 = vld [vmem:[#allocation11 + $0x8] sm:$0xff]
        %v1227 = vld [vmem:[#allocation11 + $0x10] sm:$0xff]
        %v1228 = vld [vmem:[#allocation11 + $0x18] sm:$0xff]
        %v1229 = vld [vmem:[#allocation11 + $0x20] sm:$0xff]
        %v1230 = vld [vmem:[#allocation11 + $0x28] sm:$0xff]
        %v1231 = vld [vmem:[#allocation11 + $0x30] sm:$0xff]
        %v1232 = vld [vmem:[#allocation11 + $0x38] sm:$0xff]
        %v1233 = vld [vmem:[#allocation11 + $0x40] sm:$0xff]
        %v1234 = vld [vmem:[#allocation11 + $0x48] sm:$0xff]
        %v1235 = vld [vmem:[#allocation11 + $0x50] sm:$0xff]
        %v1236 = vld [vmem:[#allocation11 + $0x58] sm:$0xff]
        %v1237 = vld [vmem:[#allocation11 + $0x60] sm:$0xff]
        %v1238 = vld [vmem:[#allocation11 + $0x68] sm:$0xff]
        %v1239 = vld [vmem:[#allocation11 + $0x70] sm:$0xff]
        %v1240 = vld [vmem:[#allocation11 + $0x78] sm:$0xff]
        %v1241 = vld [vmem:[%s10] sm:$0x1]
        %v1243 = vlaneseq
        %v1244 = vshrl.u32 %v1243, 7
        %v1245 = vsub.s32 0, %v1244
        %v1246 = vrot.slane %v1241, %v1245
        %1248 = vmatprep.subr.mxu0 0.0
        %1249 = vmatpush1.msra.mxu0 %v1240
        %1250 = vmatprep.subr.mxu0 0.0
        %1251 = vmatpush1.msra.mxu0 %v1239
        %1252 = vmatprep.subr.mxu0 0.0
        %1253 = vmatpush1.msra.mxu0 %v1238
        %1254 = vmatprep.subr.mxu0 0.0
        %1255 = vmatpush1.msra.mxu0 %v1237
        %1256 = vmatprep.subr.mxu0 0.0
        %1257 = vmatpush1.msra.mxu0 %v1236
        %1258 = vmatprep.subr.mxu0 0.0
        %1259 = vmatpush1.msra.mxu0 %v1235
        %1260 = vmatprep.subr.mxu0 0.0
        %1261 = vmatpush1.msra.mxu0 %v1234
        %1262 = vmatprep.subr.mxu0 0.0
        %1263 = vmatpush1.msra.mxu0 %v1233
        %1264 = vmatprep.subr.mxu0 0.0
        %1265 = vmatpush1.msra.mxu0 %v1232
        %1266 = vmatprep.subr.mxu0 0.0
        %1267 = vmatpush1.msra.mxu0 %v1231
        %1268 = vmatprep.subr.mxu0 0.0
        %1269 = vmatpush1.msra.mxu0 %v1230
        %1270 = vmatprep.subr.mxu0 0.0
        %1271 = vmatpush1.msra.mxu0 %v1229
        %1272 = vmatprep.subr.mxu0 0.0
        %1273 = vmatpush1.msra.mxu0 %v1228
        %1274 = vmatprep.subr.mxu0 0.0
        %1275 = vmatpush1.msra.mxu0 %v1227
        %1276 = vmatprep.subr.mxu0 0.0
        %1277 = vmatpush1.msra.mxu0 %v1226
        %1278 = vmatprep.subr.mxu0 0.0
        %1279 = vmatpush1.msra.mxu0 %v1225
        %1280 = vmatprep.subr.mxu0 0.0
        %1281 = vmatpush2.msra.mxu0 0.0
        %1282 = vmatprep.subr.mxu0 0.0
        %1283 = vmatpush2.msra.mxu0 0.0
        %1284 = vmatprep.subr.mxu0 0.0
        %1285 = vmatpush2.msra.mxu0 0.0
        %1286 = vmatprep.subr.mxu0 0.0
        %1287 = vmatpush2.msra.mxu0 0.0
        %1288 = vmatprep.subr.mxu0 0.0
        %1289 = vmatpush2.msra.mxu0 0.0
        %1290 = vmatprep.subr.mxu0 0.0
        %1291 = vmatpush2.msra.mxu0 0.0
        %1292 = vmatprep.subr.mxu0 0.0
        %1293 = vmatpush2.msra.mxu0 0.0
        %1294 = vmatprep.subr.mxu0 0.0
        %1295 = vmatpush2.msra.mxu0 0.0
        %1296 = vmatprep.subr.mxu0 0.0
        %1297 = vmatpush2.msra.mxu0 0.0
        %1298 = vmatprep.subr.mxu0 0.0
        %1299 = vmatpush2.msra.mxu0 0.0
        %1300 = vmatprep.subr.mxu0 0.0
        %1301 = vmatpush2.msra.mxu0 0.0
        %1302 = vmatprep.subr.mxu0 0.0
        %1303 = vmatpush2.msra.mxu0 0.0
        %1304 = vmatprep.subr.mxu0 0.0
        %1305 = vmatpush2.msra.mxu0 0.0
        %1306 = vmatprep.subr.mxu0 0.0
        %1307 = vmatpush2.msra.mxu0 0.0
        %1308 = vmatprep.subr.mxu0 0.0
        %1309 = vmatpush2.msra.mxu0 0.0
        %1310 = vmatprep.subr.mxu0 0.0
        %1311 = vmatpush2.msra.mxu0 0.0
        %1312 = vmatprep.mubr.f32.mxu0 0.0
        %1313 = vmatmul.mubr.f32.gmra.mxu0 %v1212
        %v1314 = vpop.f32.mrf.mxu0
        %v1315 = vadd.f32 %v1246, %v1314
        %v1316 = vpop.f32.mrf.mxu0
        %1317 = vmatprep.mubr.f32.mxu0 0.0
        %1318 = vmatmul.mubr.f32.gmra.mxu0 %v1213
        %v1319 = vpop.f32.mrf.mxu0
        %v1320 = vadd.f32 %v1246, %v1319
        %v1321 = vpop.f32.mrf.mxu0
        %1322 = vmatprep.mubr.f32.mxu0 0.0
        %1323 = vmatmul.mubr.f32.gmra.mxu0 %v1214
        %v1324 = vpop.f32.mrf.mxu0
        %v1325 = vadd.f32 %v1246, %v1324
        %v1326 = vpop.f32.mrf.mxu0
        %1327 = vmatprep.mubr.f32.mxu0 0.0
        %1328 = vmatmul.mubr.f32.gmra.mxu0 %v1215
        %v1329 = vpop.f32.mrf.mxu0
        %v1330 = vadd.f32 %v1246, %v1329
        %v1331 = vpop.f32.mrf.mxu0
        %1332 = vmatprep.mubr.f32.mxu0 0.0
        %1333 = vmatmul.mubr.f32.gmra.mxu0 %v1216
        %v1334 = vpop.f32.mrf.mxu0
        %v1335 = vadd.f32 %v1246, %v1334
        %v1336 = vpop.f32.mrf.mxu0
        %1337 = vmatprep.mubr.f32.mxu0 0.0
        %1338 = vmatmul.mubr.f32.gmra.mxu0 %v1217
        %v1339 = vpop.f32.mrf.mxu0
        %v1340 = vadd.f32 %v1246, %v1339
        %v1341 = vpop.f32.mrf.mxu0
        %1342 = vmatprep.mubr.f32.mxu0 0.0
        %1343 = vmatmul.mubr.f32.gmra.mxu0 %v1218
        %v1344 = vpop.f32.mrf.mxu0
        %v1345 = vadd.f32 %v1246, %v1344
        %v1346 = vpop.f32.mrf.mxu0
        %1347 = vmatprep.mubr.f32.mxu0 0.0
        %1348 = vmatmul.mubr.f32.gmra.mxu0 %v1219
        %v1349 = vpop.f32.mrf.mxu0
        %v1350 = vadd.f32 %v1246, %v1349
        %v1351 = vpop.f32.mrf.mxu0
        %1352 = vmatprep.mubr.f32.mxu0 0.0
        %1353 = vmatmul.mubr.f32.gmra.mxu0 %v1220
        %v1354 = vpop.f32.mrf.mxu0
        %v1355 = vadd.f32 %v1246, %v1354
        %v1356 = vpop.f32.mrf.mxu0
        %1357 = vmatprep.mubr.f32.mxu0 0.0
        %1358 = vmatmul.mubr.f32.gmra.mxu0 %v1221
        %v1359 = vpop.f32.mrf.mxu0
        %v1360 = vadd.f32 %v1246, %v1359
        %v1361 = vpop.f32.mrf.mxu0
        %1362 = vmatprep.mubr.f32.mxu0 0.0
        %1363 = vmatmul.mubr.f32.gmra.mxu0 %v1222
        %v1364 = vpop.f32.mrf.mxu0
        %v1365 = vadd.f32 %v1246, %v1364
        %v1366 = vpop.f32.mrf.mxu0
        %1367 = vmatprep.mubr.f32.mxu0 0.0
        %1368 = vmatmul.mubr.f32.gmra.mxu0 %v1223
        %v1369 = vpop.f32.mrf.mxu0
        %v1370 = vadd.f32 %v1246, %v1369
        %v1371 = vpop.f32.mrf.mxu0
        %1372 = vmatprep.mubr.f32.mxu0 0.0
        %1373 = vmatmul.mubr.f32.gmra.mxu0 %v1224
        %v1374 = vpop.f32.mrf.mxu0
        %v1375 = vadd.f32 %v1246, %v1374
        %v1376 = vpop.f32.mrf.mxu0
        %1377 = vdwg.mxu0
        %v1378 = vmax.f32 %v1315, 0.0
        %v1379 = vmax.f32 %v1320, 0.0
        %v1380 = vmax.f32 %v1325, 0.0
        %v1381 = vmax.f32 %v1330, 0.0
        %v1382 = vmax.f32 %v1335, 0.0
        %v1383 = vmax.f32 %v1340, 0.0
        %v1384 = vmax.f32 %v1345, 0.0
        %v1385 = vmax.f32 %v1350, 0.0
        %v1386 = vmax.f32 %v1355, 0.0
        %v1387 = vmax.f32 %v1360, 0.0
        %v1388 = vmax.f32 %v1365, 0.0
        %v1389 = vmax.f32 %v1370, 0.0
        %v1390 = vmax.f32 %v1375, 0.0
        %v1391 = vld [vmem:[#allocation13] sm:$0xff]
        %v1392 = vld [vmem:[#allocation13 + $0x8] sm:$0xff]
        %v1393 = vld [vmem:[#allocation13 + $0x10] sm:$0xff]
        %v1394 = vld [vmem:[#allocation13 + $0x18] sm:$0xff]
        %v1395 = vld [vmem:[#allocation13 + $0x20] sm:$0xff]
        %v1396 = vld [vmem:[#allocation13 + $0x28] sm:$0xff]
        %v1397 = vld [vmem:[#allocation13 + $0x30] sm:$0xff]
        %v1398 = vld [vmem:[#allocation13 + $0x38] sm:$0xff]
        %v1399 = vld [vmem:[#allocation13 + $0x40] sm:$0xff]
        %v1400 = vld [vmem:[#allocation13 + $0x48] sm:$0xff]
        %v1401 = vld [vmem:[#allocation13 + $0x50] sm:$0xff]
        %v1402 = vld [vmem:[#allocation13 + $0x58] sm:$0xff]
        %v1403 = vld [vmem:[#allocation13 + $0x60] sm:$0xff]
        %v1404 = vld [vmem:[#allocation13 + $0x68] sm:$0xff]
        %v1405 = vld [vmem:[#allocation13 + $0x70] sm:$0xff]
        %v1406 = vld [vmem:[#allocation13 + $0x78] sm:$0xff]
        %v1407 = vld [vmem:[%s12] sm:$0x1]
        %v1409 = vlaneseq
        %v1410 = vshrl.u32 %v1409, 7
        %v1411 = vsub.s32 0, %v1410
        %v1412 = vrot.slane %v1407, %v1411
        %1414 = vmatprep.subr.mxu0 0.0
        %1415 = vmatpush1.msra.mxu0 %v1406
        %1416 = vmatprep.subr.mxu0 0.0
        %1417 = vmatpush1.msra.mxu0 %v1405
        %1418 = vmatprep.subr.mxu0 0.0
        %1419 = vmatpush1.msra.mxu0 %v1404
        %1420 = vmatprep.subr.mxu0 0.0
        %1421 = vmatpush1.msra.mxu0 %v1403
        %1422 = vmatprep.subr.mxu0 0.0
        %1423 = vmatpush1.msra.mxu0 %v1402
        %1424 = vmatprep.subr.mxu0 0.0
        %1425 = vmatpush1.msra.mxu0 %v1401
        %1426 = vmatprep.subr.mxu0 0.0
        %1427 = vmatpush1.msra.mxu0 %v1400
        %1428 = vmatprep.subr.mxu0 0.0
        %1429 = vmatpush1.msra.mxu0 %v1399
        %1430 = vmatprep.subr.mxu0 0.0
        %1431 = vmatpush1.msra.mxu0 %v1398
        %1432 = vmatprep.subr.mxu0 0.0
        %1433 = vmatpush1.msra.mxu0 %v1397
        %1434 = vmatprep.subr.mxu0 0.0
        %1435 = vmatpush1.msra.mxu0 %v1396
        %1436 = vmatprep.subr.mxu0 0.0
        %1437 = vmatpush1.msra.mxu0 %v1395
        %1438 = vmatprep.subr.mxu0 0.0
        %1439 = vmatpush1.msra.mxu0 %v1394
        %1440 = vmatprep.subr.mxu0 0.0
        %1441 = vmatpush1.msra.mxu0 %v1393
        %1442 = vmatprep.subr.mxu0 0.0
        %1443 = vmatpush1.msra.mxu0 %v1392
        %1444 = vmatprep.subr.mxu0 0.0
        %1445 = vmatpush1.msra.mxu0 %v1391
        %1446 = vmatprep.subr.mxu0 0.0
        %1447 = vmatpush2.msra.mxu0 0.0
        %1448 = vmatprep.subr.mxu0 0.0
        %1449 = vmatpush2.msra.mxu0 0.0
        %1450 = vmatprep.subr.mxu0 0.0
        %1451 = vmatpush2.msra.mxu0 0.0
        %1452 = vmatprep.subr.mxu0 0.0
        %1453 = vmatpush2.msra.mxu0 0.0
        %1454 = vmatprep.subr.mxu0 0.0
        %1455 = vmatpush2.msra.mxu0 0.0
        %1456 = vmatprep.subr.mxu0 0.0
        %1457 = vmatpush2.msra.mxu0 0.0
        %1458 = vmatprep.subr.mxu0 0.0
        %1459 = vmatpush2.msra.mxu0 0.0
        %1460 = vmatprep.subr.mxu0 0.0
        %1461 = vmatpush2.msra.mxu0 0.0
        %1462 = vmatprep.subr.mxu0 0.0
        %1463 = vmatpush2.msra.mxu0 0.0
        %1464 = vmatprep.subr.mxu0 0.0
        %1465 = vmatpush2.msra.mxu0 0.0
        %1466 = vmatprep.subr.mxu0 0.0
        %1467 = vmatpush2.msra.mxu0 0.0
        %1468 = vmatprep.subr.mxu0 0.0
        %1469 = vmatpush2.msra.mxu0 0.0
        %1470 = vmatprep.subr.mxu0 0.0
        %1471 = vmatpush2.msra.mxu0 0.0
        %1472 = vmatprep.subr.mxu0 0.0
        %1473 = vmatpush2.msra.mxu0 0.0
        %1474 = vmatprep.subr.mxu0 0.0
        %1475 = vmatpush2.msra.mxu0 0.0
        %1476 = vmatprep.subr.mxu0 0.0
        %1477 = vmatpush2.msra.mxu0 0.0
        %1478 = vmatprep.mubr.f32.mxu0 0.0
        %1479 = vmatmul.mubr.f32.gmra.mxu0 %v1378
        %v1480 = vpop.f32.mrf.mxu0
        %v1481 = vadd.f32 %v1412, %v1480
        %v1482 = vpop.f32.mrf.mxu0
        %1483 = vmatprep.mubr.f32.mxu0 0.0
        %1484 = vmatmul.mubr.f32.gmra.mxu0 %v1379
        %v1485 = vpop.f32.mrf.mxu0
        %v1486 = vadd.f32 %v1412, %v1485
        %v1487 = vpop.f32.mrf.mxu0
        %1488 = vmatprep.mubr.f32.mxu0 0.0
        %1489 = vmatmul.mubr.f32.gmra.mxu0 %v1380
        %v1490 = vpop.f32.mrf.mxu0
        %v1491 = vadd.f32 %v1412, %v1490
        %v1492 = vpop.f32.mrf.mxu0
        %1493 = vmatprep.mubr.f32.mxu0 0.0
        %1494 = vmatmul.mubr.f32.gmra.mxu0 %v1381
        %v1495 = vpop.f32.mrf.mxu0
        %v1496 = vadd.f32 %v1412, %v1495
        %v1497 = vpop.f32.mrf.mxu0
        %1498 = vmatprep.mubr.f32.mxu0 0.0
        %1499 = vmatmul.mubr.f32.gmra.mxu0 %v1382
        %v1500 = vpop.f32.mrf.mxu0
        %v1501 = vadd.f32 %v1412, %v1500
        %v1502 = vpop.f32.mrf.mxu0
        %1503 = vmatprep.mubr.f32.mxu0 0.0
        %1504 = vmatmul.mubr.f32.gmra.mxu0 %v1383
        %v1505 = vpop.f32.mrf.mxu0
        %v1506 = vadd.f32 %v1412, %v1505
        %v1507 = vpop.f32.mrf.mxu0
        %1508 = vmatprep.mubr.f32.mxu0 0.0
        %1509 = vmatmul.mubr.f32.gmra.mxu0 %v1384
        %v1510 = vpop.f32.mrf.mxu0
        %v1511 = vadd.f32 %v1412, %v1510
        %v1512 = vpop.f32.mrf.mxu0
        %1513 = vmatprep.mubr.f32.mxu0 0.0
        %1514 = vmatmul.mubr.f32.gmra.mxu0 %v1385
        %v1515 = vpop.f32.mrf.mxu0
        %v1516 = vadd.f32 %v1412, %v1515
        %v1517 = vpop.f32.mrf.mxu0
        %1518 = vmatprep.mubr.f32.mxu0 0.0
        %1519 = vmatmul.mubr.f32.gmra.mxu0 %v1386
        %v1520 = vpop.f32.mrf.mxu0
        %v1521 = vadd.f32 %v1412, %v1520
        %v1522 = vpop.f32.mrf.mxu0
        %1523 = vmatprep.mubr.f32.mxu0 0.0
        %1524 = vmatmul.mubr.f32.gmra.mxu0 %v1387
        %v1525 = vpop.f32.mrf.mxu0
        %v1526 = vadd.f32 %v1412, %v1525
        %v1527 = vpop.f32.mrf.mxu0
        %1528 = vmatprep.mubr.f32.mxu0 0.0
        %1529 = vmatmul.mubr.f32.gmra.mxu0 %v1388
        %v1530 = vpop.f32.mrf.mxu0
        %v1531 = vadd.f32 %v1412, %v1530
        %v1532 = vpop.f32.mrf.mxu0
        %1533 = vmatprep.mubr.f32.mxu0 0.0
        %1534 = vmatmul.mubr.f32.gmra.mxu0 %v1389
        %v1535 = vpop.f32.mrf.mxu0
        %v1536 = vadd.f32 %v1412, %v1535
        %v1537 = vpop.f32.mrf.mxu0
        %1538 = vmatprep.mubr.f32.mxu0 0.0
        %1539 = vmatmul.mubr.f32.gmra.mxu0 %v1390
        %v1540 = vpop.f32.mrf.mxu0
        %v1541 = vadd.f32 %v1412, %v1540
        %v1542 = vpop.f32.mrf.mxu0
        %1543 = vdwg.mxu0
        %1544 = vst [vmem:[%s545] sm:$0xff] %v1481
        %1545 = vst [vmem:[%s545 + $0x8] sm:$0xff] %v1486
        %1546 = vst [vmem:[%s545 + $0x10] sm:$0xff] %v1491
        %1547 = vst [vmem:[%s545 + $0x18] sm:$0xff] %v1496
        %1548 = vst [vmem:[%s545 + $0x20] sm:$0xff] %v1501
        %1549 = vst [vmem:[%s545 + $0x28] sm:$0xff] %v1506
        %1550 = vst [vmem:[%s545 + $0x30] sm:$0xff] %v1511
        %1551 = vst [vmem:[%s545 + $0x38] sm:$0xff] %v1516
        %1552 = vst [vmem:[%s545 + $0x40] sm:$0xff] %v1521
        %1553 = vst [vmem:[%s545 + $0x48] sm:$0xff] %v1526
        %1554 = vst [vmem:[%s545 + $0x50] sm:$0xff] %v1531
        %1555 = vst [vmem:[%s545 + $0x58] sm:$0xff] %v1536
        %1556 = vst [vmem:[%s545 + $0x60] sm:$0xff] %v1541
        %s1557 = sand.u32 %s319, 1
        %s1558 = scalar_lea.sflag [#allocation4], %s1557
        %s1559 = sand.u32 %s319, 1
        %s1560 = smul.addr %s1559, 104
        %s1561 = scalar_lea.vmem [#allocation14], %s1560
        // Predicated region
        $region101: #{tpu_custom_call.1} parent=71 // pred_check
          %p1562 = pneg %p329
        $region102: #{tpu_custom_call.1} parent=71 // pred_check_branch
          %1564 = sbr.rel (%p1562) target = $region104
        $region103: #{tpu_custom_call.1} parent=71 // pred_region
          %s1565 = smul.u32 13, %s33
          %s1567 = ssub.s32 1664, 1664
          %1568 = vsyncadd %s1558, %s1567
          %s1569 = smul.addr %s1565, 128
          %s1570 = scalar_lea.hbm %s13, %s1569
          %s1571 = sshll.u32 %s1561, 4
          %s1572 = int_to_ptr.vmem [resolvable:$true] %s1571
          %1577 = dma.vmem_to_hbm [thread:$0]  %s1572, 1664, %s1570, %s1558, 128, 128, 8
        $region104: #{tpu_custom_call.1} parent=71 // pred_fallthru
          _
      $region72: #{tpu_custom_call.1} parent=5 // pred_fallthru
        _
      %p1578 = scmp.le.s32.totalorder 2, %s28
      // Predicated region
      $region105: #{tpu_custom_call.1} parent=5 // pred_check
        %p1579 = pneg %p1578
      $region106: #{tpu_custom_call.1} parent=5 // pred_check_branch
        %1581 = sbr.rel (%p1579) target = $region108
      $region107: #{tpu_custom_call.1} parent=5 // pred_region
        %s1582 = ssub.s32 %s28, 2
        // Predicated region
        $region109: #{tpu_custom_call.1} parent=107 // pred_check
          %p1583 = pneg %p335
        $region110: #{tpu_custom_call.1} parent=107 // pred_check_branch
          %1585 = sbr.rel (%p1583) target = $region112
        $region111: #{tpu_custom_call.1} parent=107 // pred_region
          %s1586 = sand.u32 %s320, 1
          %s1587 = scalar_lea.sflag [#allocation4], %s1586
          %s1588 = sand.u32 %s320, 1
          %s1589 = smul.addr %s1588, 104
          %s1590 = scalar_lea.vmem [#allocation14], %s1589
          %1591 = dma.done %s1587, 1664
        $region112: #{tpu_custom_call.1} parent=107 // pred_fallthru
          _
      $region108: #{tpu_custom_call.1} parent=5 // pred_fallthru
        _
    $region6: #{tpu_custom_call.1} parent=1 // loop_footer
      %s32 = sadd.s32 1, %s28
    $region7: #{tpu_custom_call.1} parent=1 // loop_footer_branch
      %27 = sbr.rel target = $region3
    $region8: #{tpu_custom_call.1} parent=1 // loop_exit
      _
    %1592 = vsyncpa [#allocation3], 1
    %s1593 = scalar_lea.sflag [#allocation3], 1
    %1594 = vsyncpa %s1593, 1
    %1595 = vsyncpa [#allocation6], 1
    %1596 = vsyncpa [#allocation9], 1
    %1597 = vsyncpa [#allocation12], 1
    %1598 = vsyncpa [#allocation4], 1
    %s1599 = scalar_lea.sflag [#allocation4], 1
    %1600 = vsyncpa %s1599, 1

</llo_original>
